<compile_context>
chip_gen: v6e
topology: v6e:2x2x1
jax: 0.10.0
libtpu: 0.0.40
codegen_flags: <defaults>
</compile_context>

<pallas_src>
import functools

import jax
import jax.numpy as jnp
from jax.experimental import pallas as pl
from jax.experimental.pallas import tpu as pltpu


# --------------------------------------------------------------------------- #
# helpers
# --------------------------------------------------------------------------- #

def conv_output_dim(dim, kernel_size, stride):
    """No-padding, dilation-1 conv output size (matches the PyTorch helper)."""
    return tuple((d - k) // s + 1 for d, k, s in zip(dim, kernel_size, stride))


def _im2col(x, kh, kw, sh, sw):
    """x: (N, H, W, C) NHWC -> ((N, OH*OW, KH*KW*C), OH, OW).

    Patch columns are ordered (kh, kw, c); rows are (oh, ow) row-major.
    Pure data movement; fused by XLA under jit.
    """
    n, h, w, c = x.shape
    oh = (h - kh) // sh + 1
    ow = (w - kw) // sw + 1
    cols = []
    for i in range(kh):
        for j in range(kw):
            cols.append(x[:, i:i + sh * (oh - 1) + 1:sh,
                          j:j + sw * (ow - 1) + 1:sw, :])
    patches = jnp.concatenate(cols, axis=-1)          # (N, OH, OW, KH*KW*C)
    return patches.reshape(n, oh * ow, kh * kw * c), oh, ow


def kaiming_normal(key, shape, fan_in):
    # nn.init.kaiming_normal_ with relu gain, mode='fan_in'
    std = (2.0 / fan_in) ** 0.5
    return std * jax.random.normal(key, shape, dtype=jnp.float32)


# --------------------------------------------------------------------------- #
# fused Pallas kernel: conv1 -> conv2 -> conv3 -> FC for ONE image
# --------------------------------------------------------------------------- #

def _fused_cnn_kernel(p1_ref, w1_ref, b1_ref, w2_ref, b2_ref, w3_ref,
                      wfc_ref, bfc_ref, out_ref,
                      x1_ref, x2_ref, x3_ref,
                      *, vw, k2, s2, k3, s3, fc_rows):
    """Whole CNN forward for one image; everything stays in VMEM.

    Activations are stored flattened as (oh*ow, channels); `vw` (= conv1's
    output width) is the row pitch.  A conv layer with kernel (kh, kw) and
    stride s is computed, per kernel offset (ki, kj), as
        acc[m, :] += x[ki*vw + kj + s*m, :] @ w[ki, kj]
    (one strided sublane read + one MXU dot, f32 accumulate).  Accumulator row
    m is a real output exactly when m = oh_out*vw + ow_out; the other rows are
    harmless garbage that is never read downstream.
    """
    f32 = jnp.float32
    bf16 = jnp.bfloat16
    L2, c2 = x2_ref.shape
    L3, c3 = x3_ref.shape

    # ---- conv1: one matmul over the host-built im2col patches + bias + ReLU
    a1 = jnp.dot(p1_ref[0], w1_ref[...], preferred_element_type=f32)
    x1_ref[...] = jnp.maximum(a1 + b1_ref[...], 0.0)

    # ---- conv2: accumulate over kernel offsets with stride-s2 row reads
    kh2, kw2 = k2
    acc2 = jnp.zeros((L2, c2), f32)
    for ki in range(kh2):
        for kj in range(kw2):
            sl = x1_ref[pl.ds(ki * vw + kj, L2, stride=s2), :].astype(bf16)
            acc2 = acc2 + jnp.dot(sl, w2_ref[ki * kw2 + kj],
                                  preferred_element_type=f32)
    x2_ref[...] = jnp.maximum(acc2 + b2_ref[...], 0.0)

    # ---- conv3: same trick.  No ReLU; its bias is folded into the FC bias.
    kh3, kw3 = k3
    acc3 = jnp.zeros((L3, c3), f32)
    for ki in range(kh3):
        for kj in range(kw3):
            sl = x2_ref[pl.ds(ki * vw + kj, L3, stride=s3), :].astype(bf16)
            acc3 = acc3 + jnp.dot(sl, w3_ref[ki * kw3 + kj],
                                  preferred_element_type=f32)
    x3_ref[...] = acc3

    # ---- FC over the valid conv3 rows + bias + final ReLU
    acc = bfc_ref[...]                                    # (1, out) f32
    for p, r in enumerate(fc_rows):
        row = x3_ref[pl.ds(r, 1), :].astype(bf16)         # (1, c3)
        acc = acc + jnp.dot(row, wfc_ref[p], preferred_element_type=f32)
    out_ref[0] = jnp.maximum(acc, 0.0)


def _fused_forward(p1, w1, b1, w2, b2, w3, wfc, bfc, *,
                   vw, k2, s2, k3, s3, L2, L3, fc_rows):
    bt, n1, kdim1 = p1.shape
    c1 = w1.shape[1]
    c2 = w2.shape[2]
    c3 = w3.shape[2]
    out_dim = wfc.shape[2]

    kernel = functools.partial(_fused_cnn_kernel, vw=vw, k2=k2, s2=s2,
                               k3=k3, s3=s3, fc_rows=fc_rows)

    out = pl.pallas_call(
        kernel,
        out_shape=jax.ShapeDtypeStruct((bt, 1, out_dim), jnp.float32),
        grid_spec=pltpu.PrefetchScalarGridSpec(
            num_scalar_prefetch=0,
            grid=(bt,),
            in_specs=[
                pl.BlockSpec((1, n1, kdim1), lambda n: (n, 0, 0)),   # patches
                pl.BlockSpec((kdim1, c1), lambda n: (0, 0)),         # w1
                pl.BlockSpec((1, c1), lambda n: (0, 0)),             # b1
                pl.BlockSpec(w2.shape, lambda n: (0, 0, 0)),         # w2 (off, ci, co)
                pl.BlockSpec((1, c2), lambda n: (0, 0)),             # b2
                pl.BlockSpec(w3.shape, lambda n: (0, 0, 0)),         # w3 (off, ci, co)
                pl.BlockSpec(wfc.shape, lambda n: (0, 0, 0)),        # wfc (pos, c, o)
                pl.BlockSpec((1, out_dim), lambda n: (0, 0)),        # bfc
            ],
            out_specs=pl.BlockSpec((1, 1, out_dim), lambda n: (n, 0, 0)),
            scratch_shapes=[
                pltpu.VMEM((n1, c1), jnp.float32),    # conv1 output
                pltpu.VMEM((L2, c2), jnp.float32),    # conv2 output (+garbage rows)
                pltpu.VMEM((L3, c3), jnp.float32),    # conv3 output (+garbage rows)
            ]),
        compiler_params=pltpu.CompilerParams(
            dimension_semantics=("parallel",)),
    )(p1, w1, b1, w2, b2, w3, wfc, bfc)
    return out.reshape(bt, out_dim)


def _make_forward(kernel_sizes, strides, dims):
    (oh1, ow1), (oh2, ow2), (oh3, ow3) = dims
    (kh1, kw1), k2, k3 = [tuple(k) for k in kernel_sizes]
    (sh1, sw1), s2t, s3t = [tuple(s) for s in strides]
    assert s2t[0] == s2t[1] and s3t[0] == s3t[1]
    s2, s3 = s2t[0], s3t[0]
    L2 = (oh2 - 1) * ow1 + ow2        # conv2 accumulator rows (incl. garbage)
    L3 = (oh3 - 1) * ow1 + ow3        # conv3 accumulator rows (incl. garbage)
    fc_rows = tuple(hh * ow1 + ww for hh in range(oh3) for ww in range(ow3))

    @jax.jit
    def forward(params, observations):
        b, t, h, w, c = observations.shape
        x = observations.reshape(b * t, h, w, c).astype(jnp.float32)
        # conv1 im2col on the host side of the same jit (tiny; /255 is folded
        # into w1, so raw [0,255] pixels go straight into the bf16 patches).
        p1, _, _ = _im2col(x, kh1, kw1, sh1, sw1)
        p1 = p1.astype(jnp.bfloat16)
        out = _fused_forward(
            p1, params["w1"], params["b1"], params["w2"], params["b2"],
            params["w3"], params["wfc"], params["bfc"],
            vw=ow1, k2=k2, s2=s2, k3=k3, s3=s3,
            L2=L2, L3=L3, fc_rows=fc_rows)
        return out.reshape(b, t, -1)

    return forward


# --------------------------------------------------------------------------- #
# model
# --------------------------------------------------------------------------- #

class VisualCNN:
    """JAX/Pallas port of the PyTorch VisualCNN (rgb-only, not blind)."""

    _kernel_sizes = [(8, 8), (4, 4), (3, 3)]
    _strides = [(4, 4), (2, 2), (2, 2)]

    def __init__(self, sensor_space, output_size, key):
        assert "rgb" in sensor_space, "this port assumes an rgb sensor"
        h, w, c_in = sensor_space["rgb"]
        self._n_input_rgb = c_in
        self.output_size = output_size

        dims, d = [], (h, w)
        for ks, st in zip(self._kernel_sizes, self._strides):
            d = conv_output_dim(d, ks, st)
            dims.append(d)
        (oh1, ow1), (oh2, ow2), (oh3, ow3) = dims
        assert min(oh3, ow3) >= 1, "sensor too small for this CNN"
        self.cnn_dims = dims[-1]

        keys = jax.random.split(key, 4)

        # f32 "master" weights, laid out the way the matmuls consume them.
        w1 = kaiming_normal(keys[0], (8, 8, c_in, 32), 8 * 8 * c_in)
        w1 = w1.reshape(8 * 8 * c_in, 32)                          # rows (kh,kw,c)
        b1 = jnp.zeros((32,), jnp.float32)
        w2 = kaiming_normal(keys[1], (4, 4, 32, 64), 4 * 4 * 32)
        b2 = jnp.zeros((64,), jnp.float32)
        w3 = kaiming_normal(keys[2], (3, 3, 64, 64), 3 * 3 * 64)
        b3 = jnp.zeros((64,), jnp.float32)
        fc_in = 64 * oh3 * ow3
        fc_w = kaiming_normal(keys[3], (fc_in, output_size), fc_in)  # rows NCHW (c,h,w)
        fc_b = jnp.zeros((output_size,), jnp.float32)

        # plain-JAX f32 reference copy (used only by the check in __main__).
        self.ref_params = {
            "w1": w1, "b1": b1,
            "w2": w2.reshape(4 * 4 * 32, 64), "b2": b2,
            "w3": w3.reshape(3 * 3 * 64, 64), "b3": b3,
            "fc_w": fc_w, "fc_b": fc_b,
        }

        # Kernel params: bf16 MXU operands; /255 folded into w1; conv3 bias
        # folded through the linear FC; FC weights regrouped per conv3 spatial
        # position p = h*ow3 + w so the kernel never transposes anything.
        wfc = fc_w.reshape(64, oh3 * ow3, output_size).transpose(1, 0, 2)  # (P, 64, out)
        bfc = fc_b + jnp.einsum("c,pco->o", b3, wfc)
        self.params = {
            "w1": (w1 * (1.0 / 255.0)).astype(jnp.bfloat16),
            "b1": b1.reshape(1, 32),
            "w2": w2.reshape(16, 32, 64).astype(jnp.bfloat16),
            "b2": b2.reshape(1, 64),
            "w3": w3.reshape(9, 64, 64).astype(jnp.bfloat16),
            "wfc": wfc.astype(jnp.bfloat16),
            "bfc": bfc.reshape(1, output_size),
        }

        self._forward = _make_forward(self._kernel_sizes, self._strides, dims)

    def forward(self, observations):
        # observations: (B, T, H, W, C) float32 in [0, 255], NHWC (the PyTorch
        # forward permutes to NCHW; we keep NHWC and permute the FC weights).
        return self._forward(self.params, observations)


# --------------------------------------------------------------------------- #
# plain-JAX reference (f32, mirrors the PyTorch forward literally)
# --------------------------------------------------------------------------- #

@jax.jit
def _reference_forward(rp, observations):
    b, t, h, w, c = observations.shape
    x = observations.astype(jnp.float32).reshape(b * t, h, w, c) / 255.0
    q, oh, ow = _im2col(x, 8, 8, 4, 4)
    x = jnp.maximum(q @ rp["w1"] + rp["b1"], 0.0).reshape(b * t, oh, ow, 32)
    q, oh, ow = _im2col(x, 4, 4, 2, 2)
    x = jnp.maximum(q @ rp["w2"] + rp["b2"], 0.0).reshape(b * t, oh, ow, 64)
    q, oh, ow = _im2col(x, 3, 3, 2, 2)
    x = (q @ rp["w3"] + rp["b3"]).reshape(b * t, oh, ow, 64)
    x = jnp.transpose(x, (0, 3, 1, 2)).reshape(b * t, -1)     # NCHW flatten
    out = jnp.maximum(x @ rp["fc_w"] + rp["fc_b"], 0.0)
    return out.reshape(b, t, -1)


# --------------------------------------------------------------------------- #
# main
# --------------------------------------------------------------------------- #

if __name__ == "__main__":
    H, W, C = 64, 64, 3          # rgb sensor: (H, W, C)
    B, T = 2, 2                  # batch, sequence
    OUTPUT_SIZE = 32

    sensor_space = {"rgb": (H, W, C)}
    model = VisualCNN(sensor_space, OUTPUT_SIZE, jax.random.PRNGKey(0))

    obs = jax.random.uniform(
        jax.random.PRNGKey(0), (B, T, H, W, C),
        minval=0.0, maxval=255.0, dtype=jnp.float32)

    out = jax.block_until_ready(model.forward(obs))
    assert out.shape == (B, T, OUTPUT_SIZE), out.shape
    assert bool(jnp.all(out >= 0.0))            # final ReLU
    assert bool(jnp.all(jnp.isfinite(out)))

    # Cross-check the fused bf16 Pallas path against the plain-JAX f32 model.
    ref = jax.block_until_ready(_reference_forward(model.ref_params, obs))
    err = float(jnp.max(jnp.abs(out - ref)))
    tol = 0.08 * float(jnp.max(jnp.abs(ref))) + 1e-2
    assert err <= tol, (err, tol)

    print("KERNEL_OK")
</pallas_src>

<mosaic_0001>
module attributes {stable_mosaic.version = 11 : i64} {
  func.func @_fused_cnn_kernel(%arg0: i32, %arg1: memref<1x225x192xbf16, #tpu.memory_space<vmem>>, %arg2: memref<192x32xbf16, #tpu.memory_space<vmem>>, %arg3: memref<1x32xf32, #tpu.memory_space<vmem>>, %arg4: memref<16x32x64xbf16, #tpu.memory_space<vmem>>, %arg5: memref<1x64xf32, #tpu.memory_space<vmem>>, %arg6: memref<9x64x64xbf16, #tpu.memory_space<vmem>>, %arg7: memref<4x64x32xbf16, #tpu.memory_space<vmem>>, %arg8: memref<1x32xf32, #tpu.memory_space<vmem>>, %arg9: memref<1x1x32xf32, #tpu.memory_space<vmem>>, %arg10: memref<225x32xf32, #tpu.memory_space<vmem>>, %arg11: memref<81x64xf32, #tpu.memory_space<vmem>>, %arg12: memref<17x64xf32, #tpu.memory_space<vmem>>) attributes {dimension_semantics = [#tpu.dimension_semantics<parallel>], iteration_bounds = array<i64: 4>, scalar_prefetch = 0 : i64, scratch_operands = 3 : i64, tpu.core_type = #tpu.core_type<tc>, window_params = [{transform_indices = @transform_0, window_bounds = array<i64: 1, 225, 192>}, {pipeline_mode = #tpu.pipeline_mode<synchronous>, transform_indices = @transform_1, window_bounds = array<i64: 192, 32>}, {pipeline_mode = #tpu.pipeline_mode<synchronous>, transform_indices = @transform_2, window_bounds = array<i64: 1, 32>}, {pipeline_mode = #tpu.pipeline_mode<synchronous>, transform_indices = @transform_3, window_bounds = array<i64: 16, 32, 64>}, {pipeline_mode = #tpu.pipeline_mode<synchronous>, transform_indices = @transform_4, window_bounds = array<i64: 1, 64>}, {pipeline_mode = #tpu.pipeline_mode<synchronous>, transform_indices = @transform_5, window_bounds = array<i64: 9, 64, 64>}, {pipeline_mode = #tpu.pipeline_mode<synchronous>, transform_indices = @transform_6, window_bounds = array<i64: 4, 64, 32>}, {pipeline_mode = #tpu.pipeline_mode<synchronous>, transform_indices = @transform_7, window_bounds = array<i64: 1, 32>}, {transform_indices = @transform_8, window_bounds = array<i64: 1, 1, 32>}]} {
    %c0 = arith.constant 0 : index
    %c0_0 = arith.constant 0 : index
    %c0_1 = arith.constant 0 : index
    %0 = vector.load %arg1[%c0, %c0_0, %c0_1] : memref<1x225x192xbf16, #tpu.memory_space<vmem>>, vector<1x225x192xbf16>
    %1 = vector.shape_cast %0 : vector<1x225x192xbf16> to vector<225x192xbf16>
    %c0_2 = arith.constant 0 : index
    %c0_3 = arith.constant 0 : index
    %2 = vector.load %arg2[%c0_2, %c0_3] : memref<192x32xbf16, #tpu.memory_space<vmem>>, vector<192x32xbf16>
    %cst = arith.constant dense<0.000000e+00> : vector<225x32xf32>
    %3 = tpu.matmul %1, %2, %cst {dimension_numbers = #tpu.dot_dimension_numbers<[1], [0], [0], [1], [0, 0, 1, 1], [], []>} : vector<225x192xbf16>, vector<192x32xbf16>, vector<225x32xf32> -> vector<225x32xf32>
    %c0_4 = arith.constant 0 : index
    %c0_5 = arith.constant 0 : index
    %4 = vector.load %arg3[%c0_4, %c0_5] : memref<1x32xf32, #tpu.memory_space<vmem>>, vector<1x32xf32>
    %5 = vector.broadcast %4 : vector<1x32xf32> to vector<225x32xf32>
    %6 = arith.addf %3, %5 : vector<225x32xf32>
    %cst_6 = arith.constant 0.000000e+00 : f32
    %7 = vector.broadcast %cst_6 : f32 to vector<225x32xf32>
    %8 = arith.maximumf %6, %7 : vector<225x32xf32>
    %c0_7 = arith.constant 0 : index
    %c0_8 = arith.constant 0 : index
    %9 = vector.load %arg10[%c0_7, %c0_8] : memref<225x32xf32, #tpu.memory_space<vmem>>, vector<225x32xf32>
    tpu.vector_store %arg10[%c0_7, %c0_8], %8 {strides = array<i32>} : memref<225x32xf32, #tpu.memory_space<vmem>>, vector<225x32xf32>,
    %cst_9 = arith.constant 0.000000e+00 : f32
    %10 = vector.broadcast %cst_9 : f32 to vector<81x64xf32>
    %c0_10 = arith.constant 0 : index
    %c0_11 = arith.constant 0 : index
    %11 = tpu.strided_load %arg10[%c0_10, %c0_11] {strides = array<i32: 2, 1>} : memref<225x32xf32, #tpu.memory_space<vmem>>, vector<81x32xf32>
    %12 = arith.truncf %11 : vector<81x32xf32> to vector<81x32xbf16>
    %c0_12 = arith.constant 0 : index
    %c0_13 = arith.constant 0 : index
    %c0_14 = arith.constant 0 : index
    %13 = vector.load %arg4[%c0_12, %c0_13, %c0_14] : memref<16x32x64xbf16, #tpu.memory_space<vmem>>, vector<1x32x64xbf16>
    %14 = vector.shape_cast %13 : vector<1x32x64xbf16> to vector<32x64xbf16>
    %cst_15 = arith.constant dense<0.000000e+00> : vector<81x64xf32>
    %15 = tpu.matmul %12, %14, %cst_15 {dimension_numbers = #tpu.dot_dimension_numbers<[1], [0], [0], [1], [0, 0, 1, 1], [], []>} : vector<81x32xbf16>, vector<32x64xbf16>, vector<81x64xf32> -> vector<81x64xf32>
    %16 = arith.addf %10, %15 : vector<81x64xf32>
    %c1 = arith.constant 1 : index
    %c0_16 = arith.constant 0 : index
    %17 = tpu.strided_load %arg10[%c1, %c0_16] {strides = array<i32: 2, 1>} : memref<225x32xf32, #tpu.memory_space<vmem>>, vector<81x32xf32>
    %18 = arith.truncf %17 : vector<81x32xf32> to vector<81x32xbf16>
    %c1_17 = arith.constant 1 : index
    %c0_18 = arith.constant 0 : index
    %c0_19 = arith.constant 0 : index
    %19 = vector.load %arg4[%c1_17, %c0_18, %c0_19] : memref<16x32x64xbf16, #tpu.memory_space<vmem>>, vector<1x32x64xbf16>
    %20 = vector.shape_cast %19 : vector<1x32x64xbf16> to vector<32x64xbf16>
    %cst_20 = arith.constant dense<0.000000e+00> : vector<81x64xf32>
    %21 = tpu.matmul %18, %20, %cst_20 {dimension_numbers = #tpu.dot_dimension_numbers<[1], [0], [0], [1], [0, 0, 1, 1], [], []>} : vector<81x32xbf16>, vector<32x64xbf16>, vector<81x64xf32> -> vector<81x64xf32>
    %22 = arith.addf %16, %21 : vector<81x64xf32>
    %c2 = arith.constant 2 : index
    %c0_21 = arith.constant 0 : index
    %23 = tpu.strided_load %arg10[%c2, %c0_21] {strides = array<i32: 2, 1>} : memref<225x32xf32, #tpu.memory_space<vmem>>, vector<81x32xf32>
    %24 = arith.truncf %23 : vector<81x32xf32> to vector<81x32xbf16>
    %c2_22 = arith.constant 2 : index
    %c0_23 = arith.constant 0 : index
    %c0_24 = arith.constant 0 : index
    %25 = vector.load %arg4[%c2_22, %c0_23, %c0_24] : memref<16x32x64xbf16, #tpu.memory_space<vmem>>, vector<1x32x64xbf16>
    %26 = vector.shape_cast %25 : vector<1x32x64xbf16> to vector<32x64xbf16>
    %cst_25 = arith.constant dense<0.000000e+00> : vector<81x64xf32>
    %27 = tpu.matmul %24, %26, %cst_25 {dimension_numbers = #tpu.dot_dimension_numbers<[1], [0], [0], [1], [0, 0, 1, 1], [], []>} : vector<81x32xbf16>, vector<32x64xbf16>, vector<81x64xf32> -> vector<81x64xf32>
    %28 = arith.addf %22, %27 : vector<81x64xf32>
    %c3 = arith.constant 3 : index
    %c0_26 = arith.constant 0 : index
    %29 = tpu.strided_load %arg10[%c3, %c0_26] {strides = array<i32: 2, 1>} : memref<225x32xf32, #tpu.memory_space<vmem>>, vector<81x32xf32>
    %30 = arith.truncf %29 : vector<81x32xf32> to vector<81x32xbf16>
    %c3_27 = arith.constant 3 : index
    %c0_28 = arith.constant 0 : index
    %c0_29 = arith.constant 0 : index
    %31 = vector.load %arg4[%c3_27, %c0_28, %c0_29] : memref<16x32x64xbf16, #tpu.memory_space<vmem>>, vector<1x32x64xbf16>
    %32 = vector.shape_cast %31 : vector<1x32x64xbf16> to vector<32x64xbf16>
    %cst_30 = arith.constant dense<0.000000e+00> : vector<81x64xf32>
    %33 = tpu.matmul %30, %32, %cst_30 {dimension_numbers = #tpu.dot_dimension_numbers<[1], [0], [0], [1], [0, 0, 1, 1], [], []>} : vector<81x32xbf16>, vector<32x64xbf16>, vector<81x64xf32> -> vector<81x64xf32>
    %34 = arith.addf %28, %33 : vector<81x64xf32>
    %c15 = arith.constant 15 : index
    %c0_31 = arith.constant 0 : index
    %35 = tpu.strided_load %arg10[%c15, %c0_31] {strides = array<i32: 2, 1>} : memref<225x32xf32, #tpu.memory_space<vmem>>, vector<81x32xf32>
    %36 = arith.truncf %35 : vector<81x32xf32> to vector<81x32xbf16>
    %c4 = arith.constant 4 : index
    %c0_32 = arith.constant 0 : index
    %c0_33 = arith.constant 0 : index
    %37 = vector.load %arg4[%c4, %c0_32, %c0_33] : memref<16x32x64xbf16, #tpu.memory_space<vmem>>, vector<1x32x64xbf16>
    %38 = vector.shape_cast %37 : vector<1x32x64xbf16> to vector<32x64xbf16>
    %cst_34 = arith.constant dense<0.000000e+00> : vector<81x64xf32>
    %39 = tpu.matmul %36, %38, %cst_34 {dimension_numbers = #tpu.dot_dimension_numbers<[1], [0], [0], [1], [0, 0, 1, 1], [], []>} : vector<81x32xbf16>, vector<32x64xbf16>, vector<81x64xf32> -> vector<81x64xf32>
    %40 = arith.addf %34, %39 : vector<81x64xf32>
    %c16 = arith.constant 16 : index
    %c0_35 = arith.constant 0 : index
    %41 = tpu.strided_load %arg10[%c16, %c0_35] {strides = array<i32: 2, 1>} : memref<225x32xf32, #tpu.memory_space<vmem>>, vector<81x32xf32>
    %42 = arith.truncf %41 : vector<81x32xf32> to vector<81x32xbf16>
    %c5 = arith.constant 5 : index
    %c0_36 = arith.constant 0 : index
    %c0_37 = arith.constant 0 : index
    %43 = vector.load %arg4[%c5, %c0_36, %c0_37] : memref<16x32x64xbf16, #tpu.memory_space<vmem>>, vector<1x32x64xbf16>
    %44 = vector.shape_cast %43 : vector<1x32x64xbf16> to vector<32x64xbf16>
    %cst_38 = arith.constant dense<0.000000e+00> : vector<81x64xf32>
    %45 = tpu.matmul %42, %44, %cst_38 {dimension_numbers = #tpu.dot_dimension_numbers<[1], [0], [0], [1], [0, 0, 1, 1], [], []>} : vector<81x32xbf16>, vector<32x64xbf16>, vector<81x64xf32> -> vector<81x64xf32>
    %46 = arith.addf %40, %45 : vector<81x64xf32>
    %c17 = arith.constant 17 : index
    %c0_39 = arith.constant 0 : index
    %47 = tpu.strided_load %arg10[%c17, %c0_39] {strides = array<i32: 2, 1>} : memref<225x32xf32, #tpu.memory_space<vmem>>, vector<81x32xf32>
    %48 = arith.truncf %47 : vector<81x32xf32> to vector<81x32xbf16>
    %c6 = arith.constant 6 : index
    %c0_40 = arith.constant 0 : index
    %c0_41 = arith.constant 0 : index
    %49 = vector.load %arg4[%c6, %c0_40, %c0_41] : memref<16x32x64xbf16, #tpu.memory_space<vmem>>, vector<1x32x64xbf16>
    %50 = vector.shape_cast %49 : vector<1x32x64xbf16> to vector<32x64xbf16>
    %cst_42 = arith.constant dense<0.000000e+00> : vector<81x64xf32>
    %51 = tpu.matmul %48, %50, %cst_42 {dimension_numbers = #tpu.dot_dimension_numbers<[1], [0], [0], [1], [0, 0, 1, 1], [], []>} : vector<81x32xbf16>, vector<32x64xbf16>, vector<81x64xf32> -> vector<81x64xf32>
    %52 = arith.addf %46, %51 : vector<81x64xf32>
    %c18 = arith.constant 18 : index
    %c0_43 = arith.constant 0 : index
    %53 = tpu.strided_load %arg10[%c18, %c0_43] {strides = array<i32: 2, 1>} : memref<225x32xf32, #tpu.memory_space<vmem>>, vector<81x32xf32>
    %54 = arith.truncf %53 : vector<81x32xf32> to vector<81x32xbf16>
    %c7 = arith.constant 7 : index
    %c0_44 = arith.constant 0 : index
    %c0_45 = arith.constant 0 : index
    %55 = vector.load %arg4[%c7, %c0_44, %c0_45] : memref<16x32x64xbf16, #tpu.memory_space<vmem>>, vector<1x32x64xbf16>
    %56 = vector.shape_cast %55 : vector<1x32x64xbf16> to vector<32x64xbf16>
    %cst_46 = arith.constant dense<0.000000e+00> : vector<81x64xf32>
    %57 = tpu.matmul %54, %56, %cst_46 {dimension_numbers = #tpu.dot_dimension_numbers<[1], [0], [0], [1], [0, 0, 1, 1], [], []>} : vector<81x32xbf16>, vector<32x64xbf16>, vector<81x64xf32> -> vector<81x64xf32>
    %58 = arith.addf %52, %57 : vector<81x64xf32>
    %c30 = arith.constant 30 : index
    %c0_47 = arith.constant 0 : index
    %59 = tpu.strided_load %arg10[%c30, %c0_47] {strides = array<i32: 2, 1>} : memref<225x32xf32, #tpu.memory_space<vmem>>, vector<81x32xf32>
    %60 = arith.truncf %59 : vector<81x32xf32> to vector<81x32xbf16>
    %c8 = arith.constant 8 : index
    %c0_48 = arith.constant 0 : index
    %c0_49 = arith.constant 0 : index
    %61 = vector.load %arg4[%c8, %c0_48, %c0_49] : memref<16x32x64xbf16, #tpu.memory_space<vmem>>, vector<1x32x64xbf16>
    %62 = vector.shape_cast %61 : vector<1x32x64xbf16> to vector<32x64xbf16>
    %cst_50 = arith.constant dense<0.000000e+00> : vector<81x64xf32>
    %63 = tpu.matmul %60, %62, %cst_50 {dimension_numbers = #tpu.dot_dimension_numbers<[1], [0], [0], [1], [0, 0, 1, 1], [], []>} : vector<81x32xbf16>, vector<32x64xbf16>, vector<81x64xf32> -> vector<81x64xf32>
    %64 = arith.addf %58, %63 : vector<81x64xf32>
    %c31 = arith.constant 31 : index
    %c0_51 = arith.constant 0 : index
    %65 = tpu.strided_load %arg10[%c31, %c0_51] {strides = array<i32: 2, 1>} : memref<225x32xf32, #tpu.memory_space<vmem>>, vector<81x32xf32>
    %66 = arith.truncf %65 : vector<81x32xf32> to vector<81x32xbf16>
    %c9 = arith.constant 9 : index
    %c0_52 = arith.constant 0 : index
    %c0_53 = arith.constant 0 : index
    %67 = vector.load %arg4[%c9, %c0_52, %c0_53] : memref<16x32x64xbf16, #tpu.memory_space<vmem>>, vector<1x32x64xbf16>
    %68 = vector.shape_cast %67 : vector<1x32x64xbf16> to vector<32x64xbf16>
    %cst_54 = arith.constant dense<0.000000e+00> : vector<81x64xf32>
    %69 = tpu.matmul %66, %68, %cst_54 {dimension_numbers = #tpu.dot_dimension_numbers<[1], [0], [0], [1], [0, 0, 1, 1], [], []>} : vector<81x32xbf16>, vector<32x64xbf16>, vector<81x64xf32> -> vector<81x64xf32>
    %70 = arith.addf %64, %69 : vector<81x64xf32>
    %c32 = arith.constant 32 : index
    %c0_55 = arith.constant 0 : index
    %71 = tpu.strided_load %arg10[%c32, %c0_55] {strides = array<i32: 2, 1>} : memref<225x32xf32, #tpu.memory_space<vmem>>, vector<81x32xf32>
    %72 = arith.truncf %71 : vector<81x32xf32> to vector<81x32xbf16>
    %c10 = arith.constant 10 : index
    %c0_56 = arith.constant 0 : index
    %c0_57 = arith.constant 0 : index
    %73 = vector.load %arg4[%c10, %c0_56, %c0_57] : memref<16x32x64xbf16, #tpu.memory_space<vmem>>, vector<1x32x64xbf16>
    %74 = vector.shape_cast %73 : vector<1x32x64xbf16> to vector<32x64xbf16>
    %cst_58 = arith.constant dense<0.000000e+00> : vector<81x64xf32>
    %75 = tpu.matmul %72, %74, %cst_58 {dimension_numbers = #tpu.dot_dimension_numbers<[1], [0], [0], [1], [0, 0, 1, 1], [], []>} : vector<81x32xbf16>, vector<32x64xbf16>, vector<81x64xf32> -> vector<81x64xf32>
    %76 = arith.addf %70, %75 : vector<81x64xf32>
    %c33 = arith.constant 33 : index
    %c0_59 = arith.constant 0 : index
    %77 = tpu.strided_load %arg10[%c33, %c0_59] {strides = array<i32: 2, 1>} : memref<225x32xf32, #tpu.memory_space<vmem>>, vector<81x32xf32>
    %78 = arith.truncf %77 : vector<81x32xf32> to vector<81x32xbf16>
    %c11 = arith.constant 11 : index
    %c0_60 = arith.constant 0 : index
    %c0_61 = arith.constant 0 : index
    %79 = vector.load %arg4[%c11, %c0_60, %c0_61] : memref<16x32x64xbf16, #tpu.memory_space<vmem>>, vector<1x32x64xbf16>
    %80 = vector.shape_cast %79 : vector<1x32x64xbf16> to vector<32x64xbf16>
    %cst_62 = arith.constant dense<0.000000e+00> : vector<81x64xf32>
    %81 = tpu.matmul %78, %80, %cst_62 {dimension_numbers = #tpu.dot_dimension_numbers<[1], [0], [0], [1], [0, 0, 1, 1], [], []>} : vector<81x32xbf16>, vector<32x64xbf16>, vector<81x64xf32> -> vector<81x64xf32>
    %82 = arith.addf %76, %81 : vector<81x64xf32>
    %c45 = arith.constant 45 : index
    %c0_63 = arith.constant 0 : index
    %83 = tpu.strided_load %arg10[%c45, %c0_63] {strides = array<i32: 2, 1>} : memref<225x32xf32, #tpu.memory_space<vmem>>, vector<81x32xf32>
    %84 = arith.truncf %83 : vector<81x32xf32> to vector<81x32xbf16>
    %c12 = arith.constant 12 : index
    %c0_64 = arith.constant 0 : index
    %c0_65 = arith.constant 0 : index
    %85 = vector.load %arg4[%c12, %c0_64, %c0_65] : memref<16x32x64xbf16, #tpu.memory_space<vmem>>, vector<1x32x64xbf16>
    %86 = vector.shape_cast %85 : vector<1x32x64xbf16> to vector<32x64xbf16>
    %cst_66 = arith.constant dense<0.000000e+00> : vector<81x64xf32>
    %87 = tpu.matmul %84, %86, %cst_66 {dimension_numbers = #tpu.dot_dimension_numbers<[1], [0], [0], [1], [0, 0, 1, 1], [], []>} : vector<81x32xbf16>, vector<32x64xbf16>, vector<81x64xf32> -> vector<81x64xf32>
    %88 = arith.addf %82, %87 : vector<81x64xf32>
    %c46 = arith.constant 46 : index
    %c0_67 = arith.constant 0 : index
    %89 = tpu.strided_load %arg10[%c46, %c0_67] {strides = array<i32: 2, 1>} : memref<225x32xf32, #tpu.memory_space<vmem>>, vector<81x32xf32>
    %90 = arith.truncf %89 : vector<81x32xf32> to vector<81x32xbf16>
    %c13 = arith.constant 13 : index
    %c0_68 = arith.constant 0 : index
    %c0_69 = arith.constant 0 : index
    %91 = vector.load %arg4[%c13, %c0_68, %c0_69] : memref<16x32x64xbf16, #tpu.memory_space<vmem>>, vector<1x32x64xbf16>
    %92 = vector.shape_cast %91 : vector<1x32x64xbf16> to vector<32x64xbf16>
    %cst_70 = arith.constant dense<0.000000e+00> : vector<81x64xf32>
    %93 = tpu.matmul %90, %92, %cst_70 {dimension_numbers = #tpu.dot_dimension_numbers<[1], [0], [0], [1], [0, 0, 1, 1], [], []>} : vector<81x32xbf16>, vector<32x64xbf16>, vector<81x64xf32> -> vector<81x64xf32>
    %94 = arith.addf %88, %93 : vector<81x64xf32>
    %c47 = arith.constant 47 : index
    %c0_71 = arith.constant 0 : index
    %95 = tpu.strided_load %arg10[%c47, %c0_71] {strides = array<i32: 2, 1>} : memref<225x32xf32, #tpu.memory_space<vmem>>, vector<81x32xf32>
    %96 = arith.truncf %95 : vector<81x32xf32> to vector<81x32xbf16>
    %c14 = arith.constant 14 : index
    %c0_72 = arith.constant 0 : index
    %c0_73 = arith.constant 0 : index
    %97 = vector.load %arg4[%c14, %c0_72, %c0_73] : memref<16x32x64xbf16, #tpu.memory_space<vmem>>, vector<1x32x64xbf16>
    %98 = vector.shape_cast %97 : vector<1x32x64xbf16> to vector<32x64xbf16>
    %cst_74 = arith.constant dense<0.000000e+00> : vector<81x64xf32>
    %99 = tpu.matmul %96, %98, %cst_74 {dimension_numbers = #tpu.dot_dimension_numbers<[1], [0], [0], [1], [0, 0, 1, 1], [], []>} : vector<81x32xbf16>, vector<32x64xbf16>, vector<81x64xf32> -> vector<81x64xf32>
    %100 = arith.addf %94, %99 : vector<81x64xf32>
    %c48 = arith.constant 48 : index
    %c0_75 = arith.constant 0 : index
    %101 = tpu.strided_load %arg10[%c48, %c0_75] {strides = array<i32: 2, 1>} : memref<225x32xf32, #tpu.memory_space<vmem>>, vector<81x32xf32>
    %102 = arith.truncf %101 : vector<81x32xf32> to vector<81x32xbf16>
    %c15_76 = arith.constant 15 : index
    %c0_77 = arith.constant 0 : index
    %c0_78 = arith.constant 0 : index
    %103 = vector.load %arg4[%c15_76, %c0_77, %c0_78] : memref<16x32x64xbf16, #tpu.memory_space<vmem>>, vector<1x32x64xbf16>
    %104 = vector.shape_cast %103 : vector<1x32x64xbf16> to vector<32x64xbf16>
    %cst_79 = arith.constant dense<0.000000e+00> : vector<81x64xf32>
    %105 = tpu.matmul %102, %104, %cst_79 {dimension_numbers = #tpu.dot_dimension_numbers<[1], [0], [0], [1], [0, 0, 1, 1], [], []>} : vector<81x32xbf16>, vector<32x64xbf16>, vector<81x64xf32> -> vector<81x64xf32>
    %106 = arith.addf %100, %105 : vector<81x64xf32>
    %c0_80 = arith.constant 0 : index
    %c0_81 = arith.constant 0 : index
    %107 = vector.load %arg5[%c0_80, %c0_81] : memref<1x64xf32, #tpu.memory_space<vmem>>, vector<1x64xf32>
    %108 = vector.broadcast %107 : vector<1x64xf32> to vector<81x64xf32>
    %109 = arith.addf %106, %108 : vector<81x64xf32>
    %cst_82 = arith.constant 0.000000e+00 : f32
    %110 = vector.broadcast %cst_82 : f32 to vector<81x64xf32>
    %111 = arith.maximumf %109, %110 : vector<81x64xf32>
    %c0_83 = arith.constant 0 : index
    %c0_84 = arith.constant 0 : index
    %112 = vector.load %arg11[%c0_83, %c0_84] : memref<81x64xf32, #tpu.memory_space<vmem>>, vector<81x64xf32>
    tpu.vector_store %arg11[%c0_83, %c0_84], %111 {strides = array<i32>} : memref<81x64xf32, #tpu.memory_space<vmem>>, vector<81x64xf32>,
    %cst_85 = arith.constant 0.000000e+00 : f32
    %113 = vector.broadcast %cst_85 : f32 to vector<17x64xf32>
    %c0_86 = arith.constant 0 : index
    %c0_87 = arith.constant 0 : index
    %114 = tpu.strided_load %arg11[%c0_86, %c0_87] {strides = array<i32: 2, 1>} : memref<81x64xf32, #tpu.memory_space<vmem>>, vector<17x64xf32>
    %115 = arith.truncf %114 : vector<17x64xf32> to vector<17x64xbf16>
    %c0_88 = arith.constant 0 : index
    %c0_89 = arith.constant 0 : index
    %c0_90 = arith.constant 0 : index
    %116 = vector.load %arg6[%c0_88, %c0_89, %c0_90] : memref<9x64x64xbf16, #tpu.memory_space<vmem>>, vector<1x64x64xbf16>
    %117 = vector.shape_cast %116 : vector<1x64x64xbf16> to vector<64x64xbf16>
    %cst_91 = arith.constant dense<0.000000e+00> : vector<17x64xf32>
    %118 = tpu.matmul %115, %117, %cst_91 {dimension_numbers = #tpu.dot_dimension_numbers<[1], [0], [0], [1], [0, 0, 1, 1], [], []>} : vector<17x64xbf16>, vector<64x64xbf16>, vector<17x64xf32> -> vector<17x64xf32>
    %119 = arith.addf %113, %118 : vector<17x64xf32>
    %c1_92 = arith.constant 1 : index
    %c0_93 = arith.constant 0 : index
    %120 = tpu.strided_load %arg11[%c1_92, %c0_93] {strides = array<i32: 2, 1>} : memref<81x64xf32, #tpu.memory_space<vmem>>, vector<17x64xf32>
    %121 = arith.truncf %120 : vector<17x64xf32> to vector<17x64xbf16>
    %c1_94 = arith.constant 1 : index
    %c0_95 = arith.constant 0 : index
    %c0_96 = arith.constant 0 : index
    %122 = vector.load %arg6[%c1_94, %c0_95, %c0_96] : memref<9x64x64xbf16, #tpu.memory_space<vmem>>, vector<1x64x64xbf16>
    %123 = vector.shape_cast %122 : vector<1x64x64xbf16> to vector<64x64xbf16>
    %cst_97 = arith.constant dense<0.000000e+00> : vector<17x64xf32>
    %124 = tpu.matmul %121, %123, %cst_97 {dimension_numbers = #tpu.dot_dimension_numbers<[1], [0], [0], [1], [0, 0, 1, 1], [], []>} : vector<17x64xbf16>, vector<64x64xbf16>, vector<17x64xf32> -> vector<17x64xf32>
    %125 = arith.addf %119, %124 : vector<17x64xf32>
    %c2_98 = arith.constant 2 : index
    %c0_99 = arith.constant 0 : index
    %126 = tpu.strided_load %arg11[%c2_98, %c0_99] {strides = array<i32: 2, 1>} : memref<81x64xf32, #tpu.memory_space<vmem>>, vector<17x64xf32>
    %127 = arith.truncf %126 : vector<17x64xf32> to vector<17x64xbf16>
    %c2_100 = arith.constant 2 : index
    %c0_101 = arith.constant 0 : index
    %c0_102 = arith.constant 0 : index
    %128 = vector.load %arg6[%c2_100, %c0_101, %c0_102] : memref<9x64x64xbf16, #tpu.memory_space<vmem>>, vector<1x64x64xbf16>
    %129 = vector.shape_cast %128 : vector<1x64x64xbf16> to vector<64x64xbf16>
    %cst_103 = arith.constant dense<0.000000e+00> : vector<17x64xf32>
    %130 = tpu.matmul %127, %129, %cst_103 {dimension_numbers = #tpu.dot_dimension_numbers<[1], [0], [0], [1], [0, 0, 1, 1], [], []>} : vector<17x64xbf16>, vector<64x64xbf16>, vector<17x64xf32> -> vector<17x64xf32>
    %131 = arith.addf %125, %130 : vector<17x64xf32>
    %c15_104 = arith.constant 15 : index
    %c0_105 = arith.constant 0 : index
    %132 = tpu.strided_load %arg11[%c15_104, %c0_105] {strides = array<i32: 2, 1>} : memref<81x64xf32, #tpu.memory_space<vmem>>, vector<17x64xf32>
    %133 = arith.truncf %132 : vector<17x64xf32> to vector<17x64xbf16>
    %c3_106 = arith.constant 3 : index
    %c0_107 = arith.constant 0 : index
    %c0_108 = arith.constant 0 : index
    %134 = vector.load %arg6[%c3_106, %c0_107, %c0_108] : memref<9x64x64xbf16, #tpu.memory_space<vmem>>, vector<1x64x64xbf16>
    %135 = vector.shape_cast %134 : vector<1x64x64xbf16> to vector<64x64xbf16>
    %cst_109 = arith.constant dense<0.000000e+00> : vector<17x64xf32>
    %136 = tpu.matmul %133, %135, %cst_109 {dimension_numbers = #tpu.dot_dimension_numbers<[1], [0], [0], [1], [0, 0, 1, 1], [], []>} : vector<17x64xbf16>, vector<64x64xbf16>, vector<17x64xf32> -> vector<17x64xf32>
    %137 = arith.addf %131, %136 : vector<17x64xf32>
    %c16_110 = arith.constant 16 : index
    %c0_111 = arith.constant 0 : index
    %138 = tpu.strided_load %arg11[%c16_110, %c0_111] {strides = array<i32: 2, 1>} : memref<81x64xf32, #tpu.memory_space<vmem>>, vector<17x64xf32>
    %139 = arith.truncf %138 : vector<17x64xf32> to vector<17x64xbf16>
    %c4_112 = arith.constant 4 : index
    %c0_113 = arith.constant 0 : index
    %c0_114 = arith.constant 0 : index
    %140 = vector.load %arg6[%c4_112, %c0_113, %c0_114] : memref<9x64x64xbf16, #tpu.memory_space<vmem>>, vector<1x64x64xbf16>
    %141 = vector.shape_cast %140 : vector<1x64x64xbf16> to vector<64x64xbf16>
    %cst_115 = arith.constant dense<0.000000e+00> : vector<17x64xf32>
    %142 = tpu.matmul %139, %141, %cst_115 {dimension_numbers = #tpu.dot_dimension_numbers<[1], [0], [0], [1], [0, 0, 1, 1], [], []>} : vector<17x64xbf16>, vector<64x64xbf16>, vector<17x64xf32> -> vector<17x64xf32>
    %143 = arith.addf %137, %142 : vector<17x64xf32>
    %c17_116 = arith.constant 17 : index
    %c0_117 = arith.constant 0 : index
    %144 = tpu.strided_load %arg11[%c17_116, %c0_117] {strides = array<i32: 2, 1>} : memref<81x64xf32, #tpu.memory_space<vmem>>, vector<17x64xf32>
    %145 = arith.truncf %144 : vector<17x64xf32> to vector<17x64xbf16>
    %c5_118 = arith.constant 5 : index
    %c0_119 = arith.constant 0 : index
    %c0_120 = arith.constant 0 : index
    %146 = vector.load %arg6[%c5_118, %c0_119, %c0_120] : memref<9x64x64xbf16, #tpu.memory_space<vmem>>, vector<1x64x64xbf16>
    %147 = vector.shape_cast %146 : vector<1x64x64xbf16> to vector<64x64xbf16>
    %cst_121 = arith.constant dense<0.000000e+00> : vector<17x64xf32>
    %148 = tpu.matmul %145, %147, %cst_121 {dimension_numbers = #tpu.dot_dimension_numbers<[1], [0], [0], [1], [0, 0, 1, 1], [], []>} : vector<17x64xbf16>, vector<64x64xbf16>, vector<17x64xf32> -> vector<17x64xf32>
    %149 = arith.addf %143, %148 : vector<17x64xf32>
    %c30_122 = arith.constant 30 : index
    %c0_123 = arith.constant 0 : index
    %150 = tpu.strided_load %arg11[%c30_122, %c0_123] {strides = array<i32: 2, 1>} : memref<81x64xf32, #tpu.memory_space<vmem>>, vector<17x64xf32>
    %151 = arith.truncf %150 : vector<17x64xf32> to vector<17x64xbf16>
    %c6_124 = arith.constant 6 : index
    %c0_125 = arith.constant 0 : index
    %c0_126 = arith.constant 0 : index
    %152 = vector.load %arg6[%c6_124, %c0_125, %c0_126] : memref<9x64x64xbf16, #tpu.memory_space<vmem>>, vector<1x64x64xbf16>
    %153 = vector.shape_cast %152 : vector<1x64x64xbf16> to vector<64x64xbf16>
    %cst_127 = arith.constant dense<0.000000e+00> : vector<17x64xf32>
    %154 = tpu.matmul %151, %153, %cst_127 {dimension_numbers = #tpu.dot_dimension_numbers<[1], [0], [0], [1], [0, 0, 1, 1], [], []>} : vector<17x64xbf16>, vector<64x64xbf16>, vector<17x64xf32> -> vector<17x64xf32>
    %155 = arith.addf %149, %154 : vector<17x64xf32>
    %c31_128 = arith.constant 31 : index
    %c0_129 = arith.constant 0 : index
    %156 = tpu.strided_load %arg11[%c31_128, %c0_129] {strides = array<i32: 2, 1>} : memref<81x64xf32, #tpu.memory_space<vmem>>, vector<17x64xf32>
    %157 = arith.truncf %156 : vector<17x64xf32> to vector<17x64xbf16>
    %c7_130 = arith.constant 7 : index
    %c0_131 = arith.constant 0 : index
    %c0_132 = arith.constant 0 : index
    %158 = vector.load %arg6[%c7_130, %c0_131, %c0_132] : memref<9x64x64xbf16, #tpu.memory_space<vmem>>, vector<1x64x64xbf16>
    %159 = vector.shape_cast %158 : vector<1x64x64xbf16> to vector<64x64xbf16>
    %cst_133 = arith.constant dense<0.000000e+00> : vector<17x64xf32>
    %160 = tpu.matmul %157, %159, %cst_133 {dimension_numbers = #tpu.dot_dimension_numbers<[1], [0], [0], [1], [0, 0, 1, 1], [], []>} : vector<17x64xbf16>, vector<64x64xbf16>, vector<17x64xf32> -> vector<17x64xf32>
    %161 = arith.addf %155, %160 : vector<17x64xf32>
    %c32_134 = arith.constant 32 : index
    %c0_135 = arith.constant 0 : index
    %162 = tpu.strided_load %arg11[%c32_134, %c0_135] {strides = array<i32: 2, 1>} : memref<81x64xf32, #tpu.memory_space<vmem>>, vector<17x64xf32>
    %163 = arith.truncf %162 : vector<17x64xf32> to vector<17x64xbf16>
    %c8_136 = arith.constant 8 : index
    %c0_137 = arith.constant 0 : index
    %c0_138 = arith.constant 0 : index
    %164 = vector.load %arg6[%c8_136, %c0_137, %c0_138] : memref<9x64x64xbf16, #tpu.memory_space<vmem>>, vector<1x64x64xbf16>
    %165 = vector.shape_cast %164 : vector<1x64x64xbf16> to vector<64x64xbf16>
    %cst_139 = arith.constant dense<0.000000e+00> : vector<17x64xf32>
    %166 = tpu.matmul %163, %165, %cst_139 {dimension_numbers = #tpu.dot_dimension_numbers<[1], [0], [0], [1], [0, 0, 1, 1], [], []>} : vector<17x64xbf16>, vector<64x64xbf16>, vector<17x64xf32> -> vector<17x64xf32>
    %167 = arith.addf %161, %166 : vector<17x64xf32>
    %c0_140 = arith.constant 0 : index
    %c0_141 = arith.constant 0 : index
    %168 = vector.load %arg12[%c0_140, %c0_141] : memref<17x64xf32, #tpu.memory_space<vmem>>, vector<17x64xf32>
    tpu.vector_store %arg12[%c0_140, %c0_141], %167 {strides = array<i32>} : memref<17x64xf32, #tpu.memory_space<vmem>>, vector<17x64xf32>,
    %c0_142 = arith.constant 0 : index
    %c0_143 = arith.constant 0 : index
    %169 = vector.load %arg8[%c0_142, %c0_143] : memref<1x32xf32, #tpu.memory_space<vmem>>, vector<1x32xf32>
    %c0_144 = arith.constant 0 : index
    %c0_145 = arith.constant 0 : index
    %170 = vector.load %arg12[%c0_144, %c0_145] : memref<17x64xf32, #tpu.memory_space<vmem>>, vector<1x64xf32>
    %171 = arith.truncf %170 : vector<1x64xf32> to vector<1x64xbf16>
    %c0_146 = arith.constant 0 : index
    %c0_147 = arith.constant 0 : index
    %c0_148 = arith.constant 0 : index
    %172 = vector.load %arg7[%c0_146, %c0_147, %c0_148] : memref<4x64x32xbf16, #tpu.memory_space<vmem>>, vector<1x64x32xbf16>
    %173 = vector.shape_cast %172 : vector<1x64x32xbf16> to vector<64x32xbf16>
    %cst_149 = arith.constant dense<0.000000e+00> : vector<1x32xf32>
    %174 = tpu.matmul %171, %173, %cst_149 {dimension_numbers = #tpu.dot_dimension_numbers<[1], [0], [0], [1], [0, 0, 1, 1], [], []>} : vector<1x64xbf16>, vector<64x32xbf16>, vector<1x32xf32> -> vector<1x32xf32>
    %175 = arith.addf %169, %174 : vector<1x32xf32>
    %c1_150 = arith.constant 1 : index
    %c0_151 = arith.constant 0 : index
    %176 = vector.load %arg12[%c1_150, %c0_151] : memref<17x64xf32, #tpu.memory_space<vmem>>, vector<1x64xf32>
    %177 = arith.truncf %176 : vector<1x64xf32> to vector<1x64xbf16>
    %c1_152 = arith.constant 1 : index
    %c0_153 = arith.constant 0 : index
    %c0_154 = arith.constant 0 : index
    %178 = vector.load %arg7[%c1_152, %c0_153, %c0_154] : memref<4x64x32xbf16, #tpu.memory_space<vmem>>, vector<1x64x32xbf16>
    %179 = vector.shape_cast %178 : vector<1x64x32xbf16> to vector<64x32xbf16>
    %cst_155 = arith.constant dense<0.000000e+00> : vector<1x32xf32>
    %180 = tpu.matmul %177, %179, %cst_155 {dimension_numbers = #tpu.dot_dimension_numbers<[1], [0], [0], [1], [0, 0, 1, 1], [], []>} : vector<1x64xbf16>, vector<64x32xbf16>, vector<1x32xf32> -> vector<1x32xf32>
    %181 = arith.addf %175, %180 : vector<1x32xf32>
    %c15_156 = arith.constant 15 : index
    %c0_157 = arith.constant 0 : index
    %182 = vector.load %arg12[%c15_156, %c0_157] : memref<17x64xf32, #tpu.memory_space<vmem>>, vector<1x64xf32>
    %183 = arith.truncf %182 : vector<1x64xf32> to vector<1x64xbf16>
    %c2_158 = arith.constant 2 : index
    %c0_159 = arith.constant 0 : index
    %c0_160 = arith.constant 0 : index
    %184 = vector.load %arg7[%c2_158, %c0_159, %c0_160] : memref<4x64x32xbf16, #tpu.memory_space<vmem>>, vector<1x64x32xbf16>
    %185 = vector.shape_cast %184 : vector<1x64x32xbf16> to vector<64x32xbf16>
    %cst_161 = arith.constant dense<0.000000e+00> : vector<1x32xf32>
    %186 = tpu.matmul %183, %185, %cst_161 {dimension_numbers = #tpu.dot_dimension_numbers<[1], [0], [0], [1], [0, 0, 1, 1], [], []>} : vector<1x64xbf16>, vector<64x32xbf16>, vector<1x32xf32> -> vector<1x32xf32>
    %187 = arith.addf %181, %186 : vector<1x32xf32>
    %c16_162 = arith.constant 16 : index
    %c0_163 = arith.constant 0 : index
    %188 = vector.load %arg12[%c16_162, %c0_163] : memref<17x64xf32, #tpu.memory_space<vmem>>, vector<1x64xf32>
    %189 = arith.truncf %188 : vector<1x64xf32> to vector<1x64xbf16>
    %c3_164 = arith.constant 3 : index
    %c0_165 = arith.constant 0 : index
    %c0_166 = arith.constant 0 : index
    %190 = vector.load %arg7[%c3_164, %c0_165, %c0_166] : memref<4x64x32xbf16, #tpu.memory_space<vmem>>, vector<1x64x32xbf16>
    %191 = vector.shape_cast %190 : vector<1x64x32xbf16> to vector<64x32xbf16>
    %cst_167 = arith.constant dense<0.000000e+00> : vector<1x32xf32>
    %192 = tpu.matmul %189, %191, %cst_167 {dimension_numbers = #tpu.dot_dimension_numbers<[1], [0], [0], [1], [0, 0, 1, 1], [], []>} : vector<1x64xbf16>, vector<64x32xbf16>, vector<1x32xf32> -> vector<1x32xf32>
    %193 = arith.addf %187, %192 : vector<1x32xf32>
    %cst_168 = arith.constant 0.000000e+00 : f32
    %194 = vector.broadcast %cst_168 : f32 to vector<1x32xf32>
    %195 = arith.maximumf %193, %194 : vector<1x32xf32>
    %c0_169 = arith.constant 0 : index
    %c0_170 = arith.constant 0 : index
    %c0_171 = arith.constant 0 : index
    %196 = vector.load %arg9[%c0_169, %c0_170, %c0_171] : memref<1x1x32xf32, #tpu.memory_space<vmem>>, vector<1x1x32xf32>
    %197 = vector.shape_cast %196 : vector<1x1x32xf32> to vector<1x32xf32>
    %198 = vector.shape_cast %195 : vector<1x32xf32> to vector<1x1x32xf32>
    tpu.vector_store %arg9[%c0_169, %c0_170, %c0_171], %198 {strides = array<i32>} : memref<1x1x32xf32, #tpu.memory_space<vmem>>, vector<1x1x32xf32>,
    return
  }
  func.func @transform_0(%arg0: i32) -> (i32, i32, i32) {
    %c0_i32 = arith.constant 0 : i32
    %c0_i32_0 = arith.constant 0 : i32
    %c0_i32_1 = arith.constant 0 : i32
    return %arg0, %c0_i32, %c0_i32_0 : i32, i32, i32
  }
  func.func @transform_1(%arg0: i32) -> (i32, i32) {
    %c0_i32 = arith.constant 0 : i32
    %c0_i32_0 = arith.constant 0 : i32
    %c0_i32_1 = arith.constant 0 : i32
    return %c0_i32, %c0_i32_0 : i32, i32
  }
  func.func @transform_2(%arg0: i32) -> (i32, i32) {
    %c0_i32 = arith.constant 0 : i32
    %c0_i32_0 = arith.constant 0 : i32
    %c0_i32_1 = arith.constant 0 : i32
    return %c0_i32, %c0_i32_0 : i32, i32
  }
  func.func @transform_3(%arg0: i32) -> (i32, i32, i32) {
    %c0_i32 = arith.constant 0 : i32
    %c0_i32_0 = arith.constant 0 : i32
    %c0_i32_1 = arith.constant 0 : i32
    %c0_i32_2 = arith.constant 0 : i32
    return %c0_i32, %c0_i32_0, %c0_i32_1 : i32, i32, i32
  }
  func.func @transform_4(%arg0: i32) -> (i32, i32) {
    %c0_i32 = arith.constant 0 : i32
    %c0_i32_0 = arith.constant 0 : i32
    %c0_i32_1 = arith.constant 0 : i32
    return %c0_i32, %c0_i32_0 : i32, i32
  }
  func.func @transform_5(%arg0: i32) -> (i32, i32, i32) {
    %c0_i32 = arith.constant 0 : i32
    %c0_i32_0 = arith.constant 0 : i32
    %c0_i32_1 = arith.constant 0 : i32
    %c0_i32_2 = arith.constant 0 : i32
    return %c0_i32, %c0_i32_0, %c0_i32_1 : i32, i32, i32
  }
  func.func @transform_6(%arg0: i32) -> (i32, i32, i32) {
    %c0_i32 = arith.constant 0 : i32
    %c0_i32_0 = arith.constant 0 : i32
    %c0_i32_1 = arith.constant 0 : i32
    %c0_i32_2 = arith.constant 0 : i32
    return %c0_i32, %c0_i32_0, %c0_i32_1 : i32, i32, i32
  }
  func.func @transform_7(%arg0: i32) -> (i32, i32) {
    %c0_i32 = arith.constant 0 : i32
    %c0_i32_0 = arith.constant 0 : i32
    %c0_i32_1 = arith.constant 0 : i32
    return %c0_i32, %c0_i32_0 : i32, i32
  }
  func.func @transform_8(%arg0: i32) -> (i32, i32, i32) {
    %c0_i32 = arith.constant 0 : i32
    %c0_i32_0 = arith.constant 0 : i32
    %c0_i32_1 = arith.constant 0 : i32
    return %arg0, %c0_i32, %c0_i32_0 : i32, i32, i32
  }
}

</mosaic_0001>

<llo_original>
// kernel: forward.1
$region0: #{forward.1}
  #allocation0 [shape = 'u32[]', space=smem, size = 0x4, offset = 0x4, fixed_abs, tag = 'smem constant byte address 0x4 - core index']
  #allocation1 [shape = 'u32[144,128]{1,0:T(1,128)}', space=vmem, size = 0x12000, scoped, tag = 'internal scratch']
  #allocation2 [shape = 'f32[225,32]{1,0:T(8,128)}', space=vmem, size = 0x1d000, scoped, tag = 'scratch operand']
  #allocation3 [shape = 'f32[81,64]{1,0:T(8,128)}', space=vmem, size = 0xb000, scoped, tag = 'scratch operand']
  #allocation4 [shape = 'f32[17,64]{1,0:T(8,128)}', space=vmem, size = 0x3000, scoped, tag = 'scratch operand']
  %s0 = inlined_call_operand.vmem [shape: bf16[4,225,192], index: 0, kind: input, shape index: {}]
  %s1 = inlined_call_operand.vmem [shape: bf16[192,32], index: 1, kind: input, shape index: {}]
  %s2 = inlined_call_operand.vmem [shape: f32[1,32], index: 2, kind: input, shape index: {}]
  %s3 = inlined_call_operand.vmem [shape: bf16[16,32,64], index: 3, kind: input, shape index: {}]
  %s4 = inlined_call_operand.vmem [shape: f32[1,64], index: 4, kind: input, shape index: {}]
  %s5 = inlined_call_operand.vmem [shape: bf16[9,64,64], index: 5, kind: input, shape index: {}]
  %s6 = inlined_call_operand.vmem [shape: bf16[4,64,32], index: 6, kind: input, shape index: {}]
  %s7 = inlined_call_operand.vmem [shape: f32[1,32], index: 7, kind: input, shape index: {}]
  %s8 = inlined_call_operand.hbm [shape: f32[4,1,32], index: 8, kind: output, shape index: {}]
  %s9 = sld [smem:[#allocation0]]
  $region65: #{forward.1} parent=0
    _
  %s11 = ssub.s32 1, %s9
  %s12 = scalar_select 0, %s11, %s9
  $region1: #{forward.1} parent=0
    #allocation5 [shape = 'u8[1024]{0}', space=vmem, size = 0x400, scoped, tag = 'output window, operand 0']
    #allocation6 [shape = 's32[2]{0}', space=sflag, size = 0x8, scoped, tag = 'scoped memory for forward.1']
    %13 = vsyncpa [#allocation6], 0
    %s14 = scalar_lea.sflag [#allocation6], 1
    %15 = vsyncpa %s14, 0
    loop: start=0, step=1, limit=6
    $region2: #{forward.1} parent=1 // loop_pre_header
      _
    $region3: #{forward.1} parent=1 // loop_header
      %s17 = sphi 0, %s21
      %p18 = scmp.ge.s32.totalorder %s17, 6
      %s27 = sphi 0, %s29
      %s30 = sphi 0, %s27
      %s31 = sphi 0, %s30
      %s47 = sphi 0, %s31
      %s51 = sphi 0, %s51
      %s53 = sphi 0, %s51
      %s54 = sphi 0, %s53
      %s68 = sphi 0, %s54
      %s72 = sphi 0, %s72
      %s74 = sphi 0, %s72
      %s75 = sphi 0, %s74
      %s89 = sphi 0, %s75
      %s93 = sphi 0, %s93
      %s95 = sphi 0, %s93
      %s96 = sphi 0, %s95
      %s110 = sphi 0, %s96
      %s114 = sphi 0, %s114
      %s116 = sphi 0, %s114
      %s117 = sphi 0, %s116
      %s131 = sphi 0, %s117
      %s135 = sphi 0, %s135
      %s137 = sphi 0, %s135
      %s138 = sphi 0, %s137
      %s152 = sphi 0, %s138
      %s156 = sphi 0, %s156
      %s158 = sphi 0, %s156
      %s159 = sphi 0, %s158
      %s173 = sphi 0, %s159
      %s177 = sphi 0, %s177
      %s179 = sphi 0, %s177
      %s180 = sphi 0, %s179
      %s194 = sphi 0, %s180
      %s200 = sphi 0, %s202
      %s203 = sphi 0, %s200
      %s204 = sphi 0, %s203
      %s220 = sphi 0, %s204
    $region4: #{forward.1} parent=1 // loop_header_branch
      %20 = sbr.rel (%p18) target = $region8
    $region5: #{forward.1} parent=1 // loop_body
      %s22 = ssub.s32 %s17, 1
      %s23 = ssub.s32 %s17, 2
      %s24 = sadd.s32 %s17, 1
      %s25 = ssub.s32 %s17, %s24
      %p26 = scmp.eq.s32.totalorder %s25, 0
      %s28 = sadd.s32 %s27, 1
      %s29 = scalar_select %p26, %s27, %s28
      %p32 = pneg %p26
      %p33 = scmp.eq.s32.totalorder %s17, 3
      %p34 = por %p32, %p33
      %p35 = scmp.ne.s32.totalorder %s27, %s30
      %p36 = scmp.eq.s32.totalorder %s17, 0
      %p37 = por %p35, %p36
      %p38 = scmp.ne.s32.totalorder %s27, %s30
      %p39 = scmp.eq.s32.totalorder %s22, 3
      %p40 = por %p38, %p39
      %p41 = scmp.ne.s32.totalorder %s30, %s31
      %p42 = scmp.eq.s32.totalorder %s22, 0
      %p43 = por %p41, %p42
      %p44 = scmp.ne.s32.totalorder %s30, %s31
      %p45 = scmp.eq.s32.totalorder %s23, 3
      %p46 = por %p44, %p45
      %p48 = scmp.ne.s32.totalorder %s31, %s47
      %p49 = scmp.eq.s32.totalorder %s23, 0
      %p50 = por %p48, %p49
      %s52 = sadd.s32 %s51, 1
      %p55 = scmp.eq.s32.totalorder %s17, 3
      %p56 = scmp.ne.s32.totalorder %s51, %s53
      %p57 = scmp.eq.s32.totalorder %s17, 0
      %p58 = por %p56, %p57
      %p59 = scmp.ne.s32.totalorder %s51, %s53
      %p60 = scmp.eq.s32.totalorder %s22, 3
      %p61 = por %p59, %p60
      %p62 = scmp.ne.s32.totalorder %s53, %s54
      %p63 = scmp.eq.s32.totalorder %s22, 0
      %p64 = por %p62, %p63
      %p65 = scmp.ne.s32.totalorder %s53, %s54
      %p66 = scmp.eq.s32.totalorder %s23, 3
      %p67 = por %p65, %p66
      %p69 = scmp.ne.s32.totalorder %s54, %s68
      %p70 = scmp.eq.s32.totalorder %s23, 0
      %p71 = por %p69, %p70
      %s73 = sadd.s32 %s72, 1
      %p76 = scmp.eq.s32.totalorder %s17, 3
      %p77 = scmp.ne.s32.totalorder %s72, %s74
      %p78 = scmp.eq.s32.totalorder %s17, 0
      %p79 = por %p77, %p78
      %p80 = scmp.ne.s32.totalorder %s72, %s74
      %p81 = scmp.eq.s32.totalorder %s22, 3
      %p82 = por %p80, %p81
      %p83 = scmp.ne.s32.totalorder %s74, %s75
      %p84 = scmp.eq.s32.totalorder %s22, 0
      %p85 = por %p83, %p84
      %p86 = scmp.ne.s32.totalorder %s74, %s75
      %p87 = scmp.eq.s32.totalorder %s23, 3
      %p88 = por %p86, %p87
      %p90 = scmp.ne.s32.totalorder %s75, %s89
      %p91 = scmp.eq.s32.totalorder %s23, 0
      %p92 = por %p90, %p91
      %s94 = sadd.s32 %s93, 1
      %p97 = scmp.eq.s32.totalorder %s17, 3
      %p98 = scmp.ne.s32.totalorder %s93, %s95
      %p99 = scmp.eq.s32.totalorder %s17, 0
      %p100 = por %p98, %p99
      %p101 = scmp.ne.s32.totalorder %s93, %s95
      %p102 = scmp.eq.s32.totalorder %s22, 3
      %p103 = por %p101, %p102
      %p104 = scmp.ne.s32.totalorder %s95, %s96
      %p105 = scmp.eq.s32.totalorder %s22, 0
      %p106 = por %p104, %p105
      %p107 = scmp.ne.s32.totalorder %s95, %s96
      %p108 = scmp.eq.s32.totalorder %s23, 3
      %p109 = por %p107, %p108
      %p111 = scmp.ne.s32.totalorder %s96, %s110
      %p112 = scmp.eq.s32.totalorder %s23, 0
      %p113 = por %p111, %p112
      %s115 = sadd.s32 %s114, 1
      %p118 = scmp.eq.s32.totalorder %s17, 3
      %p119 = scmp.ne.s32.totalorder %s114, %s116
      %p120 = scmp.eq.s32.totalorder %s17, 0
      %p121 = por %p119, %p120
      %p122 = scmp.ne.s32.totalorder %s114, %s116
      %p123 = scmp.eq.s32.totalorder %s22, 3
      %p124 = por %p122, %p123
      %p125 = scmp.ne.s32.totalorder %s116, %s117
      %p126 = scmp.eq.s32.totalorder %s22, 0
      %p127 = por %p125, %p126
      %p128 = scmp.ne.s32.totalorder %s116, %s117
      %p129 = scmp.eq.s32.totalorder %s23, 3
      %p130 = por %p128, %p129
      %p132 = scmp.ne.s32.totalorder %s117, %s131
      %p133 = scmp.eq.s32.totalorder %s23, 0
      %p134 = por %p132, %p133
      %s136 = sadd.s32 %s135, 1
      %p139 = scmp.eq.s32.totalorder %s17, 3
      %p140 = scmp.ne.s32.totalorder %s135, %s137
      %p141 = scmp.eq.s32.totalorder %s17, 0
      %p142 = por %p140, %p141
      %p143 = scmp.ne.s32.totalorder %s135, %s137
      %p144 = scmp.eq.s32.totalorder %s22, 3
      %p145 = por %p143, %p144
      %p146 = scmp.ne.s32.totalorder %s137, %s138
      %p147 = scmp.eq.s32.totalorder %s22, 0
      %p148 = por %p146, %p147
      %p149 = scmp.ne.s32.totalorder %s137, %s138
      %p150 = scmp.eq.s32.totalorder %s23, 3
      %p151 = por %p149, %p150
      %p153 = scmp.ne.s32.totalorder %s138, %s152
      %p154 = scmp.eq.s32.totalorder %s23, 0
      %p155 = por %p153, %p154
      %s157 = sadd.s32 %s156, 1
      %p160 = scmp.eq.s32.totalorder %s17, 3
      %p161 = scmp.ne.s32.totalorder %s156, %s158
      %p162 = scmp.eq.s32.totalorder %s17, 0
      %p163 = por %p161, %p162
      %p164 = scmp.ne.s32.totalorder %s156, %s158
      %p165 = scmp.eq.s32.totalorder %s22, 3
      %p166 = por %p164, %p165
      %p167 = scmp.ne.s32.totalorder %s158, %s159
      %p168 = scmp.eq.s32.totalorder %s22, 0
      %p169 = por %p167, %p168
      %p170 = scmp.ne.s32.totalorder %s158, %s159
      %p171 = scmp.eq.s32.totalorder %s23, 3
      %p172 = por %p170, %p171
      %p174 = scmp.ne.s32.totalorder %s159, %s173
      %p175 = scmp.eq.s32.totalorder %s23, 0
      %p176 = por %p174, %p175
      %s178 = sadd.s32 %s177, 1
      %p181 = scmp.eq.s32.totalorder %s17, 3
      %p182 = scmp.ne.s32.totalorder %s177, %s179
      %p183 = scmp.eq.s32.totalorder %s17, 0
      %p184 = por %p182, %p183
      %p185 = scmp.ne.s32.totalorder %s177, %s179
      %p186 = scmp.eq.s32.totalorder %s22, 3
      %p187 = por %p185, %p186
      %p188 = scmp.ne.s32.totalorder %s179, %s180
      %p189 = scmp.eq.s32.totalorder %s22, 0
      %p190 = por %p188, %p189
      %p191 = scmp.ne.s32.totalorder %s179, %s180
      %p192 = scmp.eq.s32.totalorder %s23, 3
      %p193 = por %p191, %p192
      %p195 = scmp.ne.s32.totalorder %s180, %s194
      %p196 = scmp.eq.s32.totalorder %s23, 0
      %p197 = por %p195, %p196
      %s198 = ssub.s32 %s17, %s24
      %p199 = scmp.eq.s32.totalorder %s198, 0
      %s201 = sadd.s32 %s200, 1
      %s202 = scalar_select %p199, %s200, %s201
      %p205 = pneg %p199
      %p206 = scmp.eq.s32.totalorder %s17, 3
      %p207 = por %p205, %p206
      %p208 = scmp.ne.s32.totalorder %s200, %s203
      %p209 = scmp.eq.s32.totalorder %s17, 0
      %p210 = por %p208, %p209
      %p211 = scmp.ne.s32.totalorder %s200, %s203
      %p212 = scmp.eq.s32.totalorder %s22, 3
      %p213 = por %p211, %p212
      %p214 = scmp.ne.s32.totalorder %s203, %s204
      %p215 = scmp.eq.s32.totalorder %s22, 0
      %p216 = por %p214, %p215
      %p217 = scmp.ne.s32.totalorder %s203, %s204
      %p218 = scmp.eq.s32.totalorder %s23, 3
      %p219 = por %p217, %p218
      %p221 = scmp.ne.s32.totalorder %s204, %s220
      %p222 = scmp.eq.s32.totalorder %s23, 0
      %p223 = por %p221, %p222
      %p224 = scmp.le.s32.totalorder 1, %s17
      %p225 = scmp.lt.s32.totalorder %s17, 5
      %p226 = pnand %p224, %p225
      %p227 = pneg %p226
      // Predicated region
      $region9: #{forward.1} parent=5 // pred_check
        _
      $region10: #{forward.1} parent=5 // pred_check_branch
        %229 = sbr.rel (%p226) target = $region12
      $region11: #{forward.1} parent=5 // pred_region
        %s230 = ssub.s32 %s17, 1
        // Predicated region
        $region13: #{forward.1} parent=11 // pred_check
          %p231 = pneg %p64
        $region14: #{forward.1} parent=11 // pred_check_branch
          %233 = sbr.rel (%p231) target = $region16
        $region15: #{forward.1} parent=11 // pred_region
          _
        $region16: #{forward.1} parent=11 // pred_fallthru
          _
        // Predicated region
        $region17: #{forward.1} parent=11 // pred_check
          %p234 = pneg %p85
        $region18: #{forward.1} parent=11 // pred_check_branch
          %236 = sbr.rel (%p234) target = $region20
        $region19: #{forward.1} parent=11 // pred_region
          _
        $region20: #{forward.1} parent=11 // pred_fallthru
          _
        // Predicated region
        $region21: #{forward.1} parent=11 // pred_check
          %p237 = pneg %p106
        $region22: #{forward.1} parent=11 // pred_check_branch
          %239 = sbr.rel (%p237) target = $region24
        $region23: #{forward.1} parent=11 // pred_region
          _
        $region24: #{forward.1} parent=11 // pred_fallthru
          _
        // Predicated region
        $region25: #{forward.1} parent=11 // pred_check
          %p240 = pneg %p127
        $region26: #{forward.1} parent=11 // pred_check_branch
          %242 = sbr.rel (%p240) target = $region28
        $region27: #{forward.1} parent=11 // pred_region
          _
        $region28: #{forward.1} parent=11 // pred_fallthru
          _
        // Predicated region
        $region29: #{forward.1} parent=11 // pred_check
          %p243 = pneg %p148
        $region30: #{forward.1} parent=11 // pred_check_branch
          %245 = sbr.rel (%p243) target = $region32
        $region31: #{forward.1} parent=11 // pred_region
          _
        $region32: #{forward.1} parent=11 // pred_fallthru
          _
        // Predicated region
        $region33: #{forward.1} parent=11 // pred_check
          %p246 = pneg %p169
        $region34: #{forward.1} parent=11 // pred_check_branch
          %248 = sbr.rel (%p246) target = $region36
        $region35: #{forward.1} parent=11 // pred_region
          _
        $region36: #{forward.1} parent=11 // pred_fallthru
          _
        // Predicated region
        $region37: #{forward.1} parent=11 // pred_check
          %p249 = pneg %p190
        $region38: #{forward.1} parent=11 // pred_check_branch
          %251 = sbr.rel (%p249) target = $region40
        $region39: #{forward.1} parent=11 // pred_region
          _
        $region40: #{forward.1} parent=11 // pred_fallthru
          _
      $region12: #{forward.1} parent=5 // pred_fallthru
        _
      %p252 = scmp.lt.s32.totalorder %s17, 4
      // Predicated region
      $region41: #{forward.1} parent=5 // pred_check
        %p253 = pneg %p252
      $region42: #{forward.1} parent=5 // pred_check_branch
        %255 = sbr.rel (%p253) target = $region44
      $region43: #{forward.1} parent=5 // pred_region
        // Predicated region
        $region45: #{forward.1} parent=43 // pred_check
          %p256 = pneg %p37
        $region46: #{forward.1} parent=43 // pred_check_branch
          %258 = sbr.rel (%p256) target = $region48
        $region47: #{forward.1} parent=43 // pred_region
          %p259 = scmp.lt.s32.totalorder %s17, 3
          %s260 = scalar_select %p259, %s17, 3
          %s261 = smul.addr %s260, 58
          %s262 = smul.addr %s261, 4
          %s263 = scalar_lea.vmem %s0, %s262
        $region48: #{forward.1} parent=43 // pred_fallthru
          _
      $region44: #{forward.1} parent=5 // pred_fallthru
        _
      %p264 = scmp.le.s32.totalorder 1, %s17
      %p265 = scmp.lt.s32.totalorder %s17, 5
      %p266 = pnand %p264, %p265
      %p267 = pneg %p266
      // Predicated region
      $region49: #{forward.1} parent=5 // pred_check
        _
      $region50: #{forward.1} parent=5 // pred_check_branch
        %269 = sbr.rel (%p266) target = $region52
      $region51: #{forward.1} parent=5 // pred_region
        %s270 = ssub.s32 %s17, 1
        %p271 = scmp.lt.s32.totalorder %s22, 3
        %s272 = scalar_select %p271, %s22, 3
        %s273 = smul.addr %s272, 58
        %s274 = smul.addr %s273, 4
        %s275 = scalar_lea.vmem %s0, %s274
        %p276 = pneg %p43
        %p277 = pneg %p40
        %p278 = pneg %p64
        %p279 = pneg %p61
        %p280 = pneg %p85
        %p281 = pneg %p82
        %p282 = pneg %p106
        %p283 = pneg %p103
        %p284 = pneg %p127
        %p285 = pneg %p124
        %p286 = pneg %p148
        %p287 = pneg %p145
        %p288 = pneg %p169
        %p289 = pneg %p166
        %p290 = pneg %p190
        %p291 = pneg %p187
        %p292 = pneg %p216
        %p293 = pneg %p213
        %s294 = sand.u32 %s203, 1
        %s295 = scalar_lea.sflag [#allocation6], %s294
        %s296 = sand.u32 %s203, 1
        %s297 = scalar_lea.vmem [#allocation5], %s296
        %p298 = scmp.lt.s32.totalorder %s22, 3
        %s299 = scalar_select %p298, %s22, 3
        %s300 = smul.addr %s299, 58
        %s301 = smul.addr %s300, 4
        %s302 = scalar_lea.vmem %s0, %s301
        %v304 = vld [vmem:[%s302] sm:$0xff]
        %v305 = vld [vmem:[%s302 + $0x8] sm:$0xff]
        %v306 = vld [vmem:[%s302 + $0x10] sm:$0xff]
        %v307 = vld [vmem:[%s302 + $0x18] sm:$0xff]
        %v308 = vld [vmem:[%s302 + $0x20] sm:$0xff]
        %v309 = vld [vmem:[%s302 + $0x28] sm:$0xff]
        %v310 = vld [vmem:[%s302 + $0x30] sm:$0xff]
        %v311 = vld [vmem:[%s302 + $0x38] sm:$0xff]
        %v312 = vld [vmem:[%s302 + $0x40] sm:$0xff]
        %v313 = vld [vmem:[%s302 + $0x48] sm:$0xff]
        %v314 = vld [vmem:[%s302 + $0x50] sm:$0xff]
        %v315 = vld [vmem:[%s302 + $0x58] sm:$0xff]
        %v316 = vld [vmem:[%s302 + $0x60] sm:$0xff]
        %v317 = vld [vmem:[%s302 + $0x68] sm:$0xff]
        %v318 = vld [vmem:[%s302 + $0x70] sm:$0xff]
        %v319 = vld [vmem:[%s302 + $0x78] sm:$0xff]
        %v320 = vld [vmem:[%s302 + $0x80] sm:$0xff]
        %v321 = vld [vmem:[%s302 + $0x88] sm:$0xff]
        %v322 = vld [vmem:[%s302 + $0x90] sm:$0xff]
        %v323 = vld [vmem:[%s302 + $0x98] sm:$0xff]
        %v324 = vld [vmem:[%s302 + $0xa0] sm:$0xff]
        %v325 = vld [vmem:[%s302 + $0xa8] sm:$0xff]
        %v326 = vld [vmem:[%s302 + $0xb0] sm:$0xff]
        %v327 = vld [vmem:[%s302 + $0xb8] sm:$0xff]
        %v328 = vld [vmem:[%s302 + $0xc0] sm:$0xff]
        %v329 = vld [vmem:[%s302 + $0xc8] sm:$0xff]
        %v330 = vld [vmem:[%s302 + $0xd0] sm:$0xff]
        %v331 = vld [vmem:[%s302 + $0xd8] sm:$0xff]
        %v332 = vld [vmem:[%s302 + $0xe0] sm:$0x11]
        %v333 = vld [vmem:[%s1] sm:$0xf]
        %v334 = vld [vmem:[%s1 + $0x4] sm:$0xf]
        %v335 = vld [vmem:[%s1 + $0x8] sm:$0xf]
        %v336 = vld [vmem:[%s1 + $0xc] sm:$0xf]
        %v337 = vld [vmem:[%s1 + $0x10] sm:$0xf]
        %v338 = vld [vmem:[%s1 + $0x14] sm:$0xf]
        %v339 = vld [vmem:[%s1 + $0x18] sm:$0xf]
        %v340 = vld [vmem:[%s1 + $0x1c] sm:$0xf]
        %v341 = vld [vmem:[%s1 + $0x20] sm:$0xf]
        %v342 = vld [vmem:[%s1 + $0x24] sm:$0xf]
        %v343 = vld [vmem:[%s1 + $0x28] sm:$0xf]
        %v344 = vld [vmem:[%s1 + $0x2c] sm:$0xf]
        %v345 = vld [vmem:[%s1 + $0x30] sm:$0xf]
        %v346 = vld [vmem:[%s1 + $0x34] sm:$0xf]
        %v347 = vld [vmem:[%s1 + $0x38] sm:$0xf]
        %v348 = vld [vmem:[%s1 + $0x3c] sm:$0xf]
        %v349 = vld [vmem:[%s1 + $0x40] sm:$0xf]
        %v350 = vld [vmem:[%s1 + $0x44] sm:$0xf]
        %v351 = vld [vmem:[%s1 + $0x48] sm:$0xf]
        %v352 = vld [vmem:[%s1 + $0x4c] sm:$0xf]
        %v353 = vld [vmem:[%s1 + $0x50] sm:$0xf]
        %v354 = vld [vmem:[%s1 + $0x54] sm:$0xf]
        %v355 = vld [vmem:[%s1 + $0x58] sm:$0xf]
        %v356 = vld [vmem:[%s1 + $0x5c] sm:$0xf]
        %v357 = vld [vmem:[%s2] sm:$0x1]
        %v359 = vlaneseq
        %v360 = vshrl.u32 %v359, 7
        %v361 = vsub.s32 0, %v360
        %v362 = vrot.slane %v357, %v361
        %v393 = vunpack.c.l.b16 %v304
        %v394 = vunpack.c.h.b16 %v304
        %v395 = vunpack.c.l.b16 %v305
        %v396 = vunpack.c.h.b16 %v305
        %v397 = vunpack.c.l.b16 %v306
        %v398 = vunpack.c.h.b16 %v306
        %v399 = vunpack.c.l.b16 %v307
        %v400 = vunpack.c.h.b16 %v307
        %v401 = vunpack.c.l.b16 %v308
        %v402 = vunpack.c.h.b16 %v308
        %v403 = vunpack.c.l.b16 %v309
        %v404 = vunpack.c.h.b16 %v309
        %v405 = vunpack.c.l.b16 %v310
        %v406 = vunpack.c.h.b16 %v310
        %v407 = vunpack.c.l.b16 %v311
        %v408 = vunpack.c.h.b16 %v311
        %v409 = vunpack.c.l.b16 %v312
        %v410 = vunpack.c.h.b16 %v312
        %v411 = vunpack.c.l.b16 %v313
        %v412 = vunpack.c.h.b16 %v313
        %v413 = vunpack.c.l.b16 %v314
        %v414 = vunpack.c.h.b16 %v314
        %v415 = vunpack.c.l.b16 %v315
        %v416 = vunpack.c.h.b16 %v315
        %v417 = vunpack.c.l.b16 %v316
        %v418 = vunpack.c.h.b16 %v316
        %v419 = vunpack.c.l.b16 %v317
        %v420 = vunpack.c.h.b16 %v317
        %v421 = vunpack.c.l.b16 %v318
        %v422 = vunpack.c.h.b16 %v318
        %v423 = vunpack.c.l.b16 %v319
        %v424 = vunpack.c.h.b16 %v319
        %v425 = vunpack.c.l.b16 %v320
        %v426 = vunpack.c.h.b16 %v320
        %v427 = vunpack.c.l.b16 %v321
        %v428 = vunpack.c.h.b16 %v321
        %v429 = vunpack.c.l.b16 %v322
        %v430 = vunpack.c.h.b16 %v322
        %v431 = vunpack.c.l.b16 %v323
        %v432 = vunpack.c.h.b16 %v323
        %v433 = vunpack.c.l.b16 %v324
        %v434 = vunpack.c.h.b16 %v324
        %v435 = vunpack.c.l.b16 %v325
        %v436 = vunpack.c.h.b16 %v325
        %v437 = vunpack.c.l.b16 %v326
        %v438 = vunpack.c.h.b16 %v326
        %v439 = vunpack.c.l.b16 %v327
        %v440 = vunpack.c.h.b16 %v327
        %v441 = vunpack.c.l.b16 %v328
        %v442 = vunpack.c.h.b16 %v328
        %v443 = vunpack.c.l.b16 %v329
        %v444 = vunpack.c.h.b16 %v329
        %v445 = vunpack.c.l.b16 %v330
        %v446 = vunpack.c.h.b16 %v330
        %v447 = vunpack.c.l.b16 %v331
        %v448 = vunpack.c.h.b16 %v331
        %v449 = vunpack.c.l.b16 %v332
        %v450 = vunpack.c.h.b16 %v332
        %v451 = vpack.c.b16 %v395, %v393
        %v452 = vpack.c.b16 %v396, %v394
        %v453 = vpack.c.b16 %v399, %v397
        %v454 = vpack.c.b16 %v400, %v398
        %v455 = vpack.c.b16 %v403, %v401
        %v456 = vpack.c.b16 %v404, %v402
        %v457 = vpack.c.b16 %v407, %v405
        %v458 = vpack.c.b16 %v408, %v406
        %v459 = vpack.c.b16 %v411, %v409
        %v460 = vpack.c.b16 %v412, %v410
        %v461 = vpack.c.b16 %v415, %v413
        %v462 = vpack.c.b16 %v416, %v414
        %v463 = vpack.c.b16 %v419, %v417
        %v464 = vpack.c.b16 %v420, %v418
        %v465 = vpack.c.b16 %v423, %v421
        %v466 = vpack.c.b16 %v424, %v422
        %v467 = vpack.c.b16 %v427, %v425
        %v468 = vpack.c.b16 %v428, %v426
        %v469 = vpack.c.b16 %v431, %v429
        %v470 = vpack.c.b16 %v432, %v430
        %v471 = vpack.c.b16 %v435, %v433
        %v472 = vpack.c.b16 %v436, %v434
        %v473 = vpack.c.b16 %v439, %v437
        %v474 = vpack.c.b16 %v440, %v438
        %v475 = vpack.c.b16 %v443, %v441
        %v476 = vpack.c.b16 %v444, %v442
        %v477 = vpack.c.b16 %v447, %v445
        %v478 = vpack.c.b16 %v448, %v446
        %v479 = vpack.c.b16 %v449, %v449
        %v480 = vpack.c.b16 %v450, %v450
        %v520 = vunpack.c.l.b16 %v333
        %v521 = vunpack.c.l.b16 %v334
        %v522 = vunpack.c.l.b16 %v335
        %v523 = vunpack.c.l.b16 %v336
        %v524 = vunpack.c.l.b16 %v337
        %v525 = vunpack.c.l.b16 %v338
        %v526 = vunpack.c.l.b16 %v339
        %v527 = vunpack.c.l.b16 %v340
        %v528 = vunpack.c.l.b16 %v341
        %v529 = vunpack.c.l.b16 %v342
        %v530 = vunpack.c.l.b16 %v343
        %v531 = vunpack.c.l.b16 %v344
        %v532 = vunpack.c.l.b16 %v345
        %v533 = vunpack.c.l.b16 %v346
        %v534 = vunpack.c.l.b16 %v347
        %v535 = vunpack.c.l.b16 %v348
        %v536 = vunpack.c.l.b16 %v349
        %v537 = vunpack.c.l.b16 %v350
        %v538 = vunpack.c.l.b16 %v351
        %v539 = vunpack.c.l.b16 %v352
        %v540 = vunpack.c.l.b16 %v353
        %v541 = vunpack.c.l.b16 %v354
        %v542 = vunpack.c.l.b16 %v355
        %v543 = vunpack.c.l.b16 %v356
        %v544 = vpack.c.b16 %v521, %v520
        %v545 = vpack.c.b16 %v523, %v522
        %v546 = vpack.c.b16 %v525, %v524
        %v547 = vpack.c.b16 %v527, %v526
        %v548 = vpack.c.b16 %v529, %v528
        %v549 = vpack.c.b16 %v531, %v530
        %v550 = vpack.c.b16 %v533, %v532
        %v551 = vpack.c.b16 %v535, %v534
        %v552 = vpack.c.b16 %v537, %v536
        %v553 = vpack.c.b16 %v539, %v538
        %v554 = vpack.c.b16 %v541, %v540
        %v555 = vpack.c.b16 %v543, %v542
        %vm568 = vcmask 523264
        %v570 = vsel %vm568, %v452, 0
        %v573 = vsel %vm568, %v454, 0
        %v576 = vsel %vm568, %v456, 0
        %v579 = vsel %vm568, %v458, 0
        %v582 = vsel %vm568, %v460, 0
        %v585 = vsel %vm568, %v462, 0
        %v588 = vsel %vm568, %v464, 0
        %v591 = vsel %vm568, %v466, 0
        %v594 = vsel %vm568, %v468, 0
        %v597 = vsel %vm568, %v470, 0
        %v600 = vsel %vm568, %v472, 0
        %v603 = vsel %vm568, %v474, 0
        %v606 = vsel %vm568, %v476, 0
        %v609 = vsel %vm568, %v478, 0
        %v612 = vsel %vm568, %v480, 0
        %614 = vmatprep.subr.bf16.mxu0 0
        %615 = vmatpush1.bf16.msra.mxu0 %v551
        %616 = vmatprep.subr.bf16.mxu0 0
        %617 = vmatpush1.bf16.msra.mxu0 %v550
        %618 = vmatprep.subr.bf16.mxu0 0
        %619 = vmatpush1.bf16.msra.mxu0 %v549
        %620 = vmatprep.subr.bf16.mxu0 0
        %621 = vmatpush1.bf16.msra.mxu0 %v548
        %622 = vmatprep.subr.bf16.mxu0 0
        %623 = vmatpush1.bf16.msra.mxu0 %v547
        %624 = vmatprep.subr.bf16.mxu0 0
        %625 = vmatpush1.bf16.msra.mxu0 %v546
        %626 = vmatprep.subr.bf16.mxu0 0
        %627 = vmatpush1.bf16.msra.mxu0 %v545
        %628 = vmatprep.subr.bf16.mxu0 0
        %629 = vmatpush1.bf16.msra.mxu0 %v544
        %630 = vmatprep.subr.bf16.mxu0 0
        %631 = vmatpush2.bf16.msra.mxu0 0
        %632 = vmatprep.subr.bf16.mxu0 0
        %633 = vmatpush2.bf16.msra.mxu0 0
        %634 = vmatprep.subr.bf16.mxu0 0
        %635 = vmatpush2.bf16.msra.mxu0 0
        %636 = vmatprep.subr.bf16.mxu0 0
        %637 = vmatpush2.bf16.msra.mxu0 0
        %638 = vmatprep.subr.bf16.mxu0 0
        %639 = vmatpush2.bf16.msra.mxu0 %v555
        %640 = vmatprep.subr.bf16.mxu0 0
        %641 = vmatpush2.bf16.msra.mxu0 %v554
        %642 = vmatprep.subr.bf16.mxu0 0
        %643 = vmatpush2.bf16.msra.mxu0 %v553
        %644 = vmatprep.subr.bf16.mxu0 0
        %645 = vmatpush2.bf16.msra.mxu0 %v552
        %646 = vmatprep.mubr.bf16.mxu0 %v570
        %647 = vmatmul.mubr.bf16.gmra.mxu0 %v451
        %v648 = vpop.f32.mrf.mxu0
        %v649 = vadd.f32 %v362, %v648
        %v650 = vpop.f32.mrf.mxu0
        %v651 = vpop.f32.mrf.mxu0
        %v652 = vadd.f32 %v362, %v651
        %v653 = vpop.f32.mrf.mxu0
        %654 = vmatprep.mubr.bf16.mxu0 %v573
        %655 = vmatmul.mubr.bf16.gmra.mxu0 %v453
        %v656 = vpop.f32.mrf.mxu0
        %v657 = vadd.f32 %v362, %v656
        %v658 = vpop.f32.mrf.mxu0
        %v659 = vpop.f32.mrf.mxu0
        %v660 = vadd.f32 %v362, %v659
        %v661 = vpop.f32.mrf.mxu0
        %662 = vmatprep.mubr.bf16.mxu0 %v576
        %663 = vmatmul.mubr.bf16.gmra.mxu0 %v455
        %v664 = vpop.f32.mrf.mxu0
        %v665 = vadd.f32 %v362, %v664
        %v666 = vpop.f32.mrf.mxu0
        %v667 = vpop.f32.mrf.mxu0
        %v668 = vadd.f32 %v362, %v667
        %v669 = vpop.f32.mrf.mxu0
        %670 = vmatprep.mubr.bf16.mxu0 %v579
        %671 = vmatmul.mubr.bf16.gmra.mxu0 %v457
        %v672 = vpop.f32.mrf.mxu0
        %v673 = vadd.f32 %v362, %v672
        %v674 = vpop.f32.mrf.mxu0
        %v675 = vpop.f32.mrf.mxu0
        %v676 = vadd.f32 %v362, %v675
        %v677 = vpop.f32.mrf.mxu0
        %678 = vmatprep.mubr.bf16.mxu0 %v582
        %679 = vmatmul.mubr.bf16.gmra.mxu0 %v459
        %v680 = vpop.f32.mrf.mxu0
        %v681 = vadd.f32 %v362, %v680
        %v682 = vpop.f32.mrf.mxu0
        %v683 = vpop.f32.mrf.mxu0
        %v684 = vadd.f32 %v362, %v683
        %v685 = vpop.f32.mrf.mxu0
        %686 = vmatprep.mubr.bf16.mxu0 %v585
        %687 = vmatmul.mubr.bf16.gmra.mxu0 %v461
        %v688 = vpop.f32.mrf.mxu0
        %v689 = vadd.f32 %v362, %v688
        %v690 = vpop.f32.mrf.mxu0
        %v691 = vpop.f32.mrf.mxu0
        %v692 = vadd.f32 %v362, %v691
        %v693 = vpop.f32.mrf.mxu0
        %694 = vmatprep.mubr.bf16.mxu0 %v588
        %695 = vmatmul.mubr.bf16.gmra.mxu0 %v463
        %v696 = vpop.f32.mrf.mxu0
        %v697 = vadd.f32 %v362, %v696
        %v698 = vpop.f32.mrf.mxu0
        %v699 = vpop.f32.mrf.mxu0
        %v700 = vadd.f32 %v362, %v699
        %v701 = vpop.f32.mrf.mxu0
        %702 = vmatprep.mubr.bf16.mxu0 %v591
        %703 = vmatmul.mubr.bf16.gmra.mxu0 %v465
        %v704 = vpop.f32.mrf.mxu0
        %v705 = vadd.f32 %v362, %v704
        %v706 = vpop.f32.mrf.mxu0
        %v707 = vpop.f32.mrf.mxu0
        %v708 = vadd.f32 %v362, %v707
        %v709 = vpop.f32.mrf.mxu0
        %710 = vmatprep.mubr.bf16.mxu0 %v594
        %711 = vmatmul.mubr.bf16.gmra.mxu0 %v467
        %v712 = vpop.f32.mrf.mxu0
        %v713 = vadd.f32 %v362, %v712
        %v714 = vpop.f32.mrf.mxu0
        %v715 = vpop.f32.mrf.mxu0
        %v716 = vadd.f32 %v362, %v715
        %v717 = vpop.f32.mrf.mxu0
        %718 = vmatprep.mubr.bf16.mxu0 %v597
        %719 = vmatmul.mubr.bf16.gmra.mxu0 %v469
        %v720 = vpop.f32.mrf.mxu0
        %v721 = vadd.f32 %v362, %v720
        %v722 = vpop.f32.mrf.mxu0
        %v723 = vpop.f32.mrf.mxu0
        %v724 = vadd.f32 %v362, %v723
        %v725 = vpop.f32.mrf.mxu0
        %726 = vmatprep.mubr.bf16.mxu0 %v600
        %727 = vmatmul.mubr.bf16.gmra.mxu0 %v471
        %v728 = vpop.f32.mrf.mxu0
        %v729 = vadd.f32 %v362, %v728
        %v730 = vpop.f32.mrf.mxu0
        %v731 = vpop.f32.mrf.mxu0
        %v732 = vadd.f32 %v362, %v731
        %v733 = vpop.f32.mrf.mxu0
        %734 = vmatprep.mubr.bf16.mxu0 %v603
        %735 = vmatmul.mubr.bf16.gmra.mxu0 %v473
        %v736 = vpop.f32.mrf.mxu0
        %v737 = vadd.f32 %v362, %v736
        %v738 = vpop.f32.mrf.mxu0
        %v739 = vpop.f32.mrf.mxu0
        %v740 = vadd.f32 %v362, %v739
        %v741 = vpop.f32.mrf.mxu0
        %742 = vmatprep.mubr.bf16.mxu0 %v606
        %743 = vmatmul.mubr.bf16.gmra.mxu0 %v475
        %v744 = vpop.f32.mrf.mxu0
        %v745 = vadd.f32 %v362, %v744
        %v746 = vpop.f32.mrf.mxu0
        %v747 = vpop.f32.mrf.mxu0
        %v748 = vadd.f32 %v362, %v747
        %v749 = vpop.f32.mrf.mxu0
        %750 = vmatprep.mubr.bf16.mxu0 %v609
        %751 = vmatmul.mubr.bf16.gmra.mxu0 %v477
        %v752 = vpop.f32.mrf.mxu0
        %v753 = vadd.f32 %v362, %v752
        %v754 = vpop.f32.mrf.mxu0
        %v755 = vpop.f32.mrf.mxu0
        %v756 = vadd.f32 %v362, %v755
        %v757 = vpop.f32.mrf.mxu0
        %758 = vmatprep.mubr.bf16.mxu0 %v612
        %759 = vmatmul.mubr.bf16.gmra.mxu0 %v479
        %v760 = vpop.f32.mrf.mxu0
        %v761 = vadd.f32 %v362, %v760
        %v762 = vpop.f32.mrf.mxu0
        %v763 = vpop.f32.mrf.mxu0
        %v764 = vpop.f32.mrf.mxu0
        %765 = vdwg.mxu0
        %v766 = vmax.f32 %v649, 0.0
        %v767 = vmax.f32 %v652, 0.0
        %v768 = vmax.f32 %v657, 0.0
        %v769 = vmax.f32 %v660, 0.0
        %v770 = vmax.f32 %v665, 0.0
        %v771 = vmax.f32 %v668, 0.0
        %v772 = vmax.f32 %v673, 0.0
        %v773 = vmax.f32 %v676, 0.0
        %v774 = vmax.f32 %v681, 0.0
        %v775 = vmax.f32 %v684, 0.0
        %v776 = vmax.f32 %v689, 0.0
        %v777 = vmax.f32 %v692, 0.0
        %v778 = vmax.f32 %v697, 0.0
        %v779 = vmax.f32 %v700, 0.0
        %v780 = vmax.f32 %v705, 0.0
        %v781 = vmax.f32 %v708, 0.0
        %v782 = vmax.f32 %v713, 0.0
        %v783 = vmax.f32 %v716, 0.0
        %v784 = vmax.f32 %v721, 0.0
        %v785 = vmax.f32 %v724, 0.0
        %v786 = vmax.f32 %v729, 0.0
        %v787 = vmax.f32 %v732, 0.0
        %v788 = vmax.f32 %v737, 0.0
        %v789 = vmax.f32 %v740, 0.0
        %v790 = vmax.f32 %v745, 0.0
        %v791 = vmax.f32 %v748, 0.0
        %v792 = vmax.f32 %v753, 0.0
        %v793 = vmax.f32 %v756, 0.0
        %v794 = vmax.f32 %v761, 0.0
        %vm795 = vcmask 261120
        %796 = vst.msk [vmem:[#allocation2] sm:$0xff] %vm795, %v766
        %797 = vst.msk [vmem:[#allocation2 + $0x8] sm:$0xff] %vm795, %v767
        %798 = vst.msk [vmem:[#allocation2 + $0x10] sm:$0xff] %vm795, %v768
        %799 = vst.msk [vmem:[#allocation2 + $0x18] sm:$0xff] %vm795, %v769
        %800 = vst.msk [vmem:[#allocation2 + $0x20] sm:$0xff] %vm795, %v770
        %801 = vst.msk [vmem:[#allocation2 + $0x28] sm:$0xff] %vm795, %v771
        %802 = vst.msk [vmem:[#allocation2 + $0x30] sm:$0xff] %vm795, %v772
        %803 = vst.msk [vmem:[#allocation2 + $0x38] sm:$0xff] %vm795, %v773
        %804 = vst.msk [vmem:[#allocation2 + $0x40] sm:$0xff] %vm795, %v774
        %805 = vst.msk [vmem:[#allocation2 + $0x48] sm:$0xff] %vm795, %v775
        %806 = vst.msk [vmem:[#allocation2 + $0x50] sm:$0xff] %vm795, %v776
        %807 = vst.msk [vmem:[#allocation2 + $0x58] sm:$0xff] %vm795, %v777
        %808 = vst.msk [vmem:[#allocation2 + $0x60] sm:$0xff] %vm795, %v778
        %809 = vst.msk [vmem:[#allocation2 + $0x68] sm:$0xff] %vm795, %v779
        %810 = vst.msk [vmem:[#allocation2 + $0x70] sm:$0xff] %vm795, %v780
        %811 = vst.msk [vmem:[#allocation2 + $0x78] sm:$0xff] %vm795, %v781
        %812 = vst.msk [vmem:[#allocation2 + $0x80] sm:$0xff] %vm795, %v782
        %813 = vst.msk [vmem:[#allocation2 + $0x88] sm:$0xff] %vm795, %v783
        %814 = vst.msk [vmem:[#allocation2 + $0x90] sm:$0xff] %vm795, %v784
        %815 = vst.msk [vmem:[#allocation2 + $0x98] sm:$0xff] %vm795, %v785
        %816 = vst.msk [vmem:[#allocation2 + $0xa0] sm:$0xff] %vm795, %v786
        %817 = vst.msk [vmem:[#allocation2 + $0xa8] sm:$0xff] %vm795, %v787
        %818 = vst.msk [vmem:[#allocation2 + $0xb0] sm:$0xff] %vm795, %v788
        %819 = vst.msk [vmem:[#allocation2 + $0xb8] sm:$0xff] %vm795, %v789
        %820 = vst.msk [vmem:[#allocation2 + $0xc0] sm:$0xff] %vm795, %v790
        %821 = vst.msk [vmem:[#allocation2 + $0xc8] sm:$0xff] %vm795, %v791
        %822 = vst.msk [vmem:[#allocation2 + $0xd0] sm:$0xff] %vm795, %v792
        %823 = vst.msk [vmem:[#allocation2 + $0xd8] sm:$0xff] %vm795, %v793
        %vm824 = vcmask 253952
        %825 = vst.msk [vmem:[#allocation2 + $0xe0] sm:$0x1] %vm824, %v794
        %v826 = vld [vmem:[#allocation2] ss:$2 sm:$0xff]
        %s827 = scalar_lea.vmem [#allocation2], 16
        %v828 = vld [vmem:[%s827] ss:$2 sm:$0xff]
        %s829 = scalar_lea.vmem [#allocation2], 32
        %v830 = vld [vmem:[%s829] ss:$2 sm:$0xff]
        %s831 = scalar_lea.vmem [#allocation2], 48
        %v832 = vld [vmem:[%s831] ss:$2 sm:$0xff]
        %s833 = scalar_lea.vmem [#allocation2], 64
        %v834 = vld [vmem:[%s833] ss:$2 sm:$0xff]
        %s835 = scalar_lea.vmem [#allocation2], 80
        %v836 = vld [vmem:[%s835] ss:$2 sm:$0xff]
        %s837 = scalar_lea.vmem [#allocation2], 96
        %v838 = vld [vmem:[%s837] ss:$2 sm:$0xff]
        %s839 = scalar_lea.vmem [#allocation2], 112
        %v840 = vld [vmem:[%s839] ss:$2 sm:$0xff]
        %s841 = scalar_lea.vmem [#allocation2], 128
        %v842 = vld [vmem:[%s841] ss:$2 sm:$0xff]
        %s843 = scalar_lea.vmem [#allocation2], 144
        %v844 = vld [vmem:[%s843] ss:$2 sm:$0xff]
        %s845 = scalar_lea.vmem [#allocation2], 160
        %v846 = vld [vmem:[%s845] ss:$2 sm:$0x1]
        %v847 = vpack.c.bf16 %v828, %v826
        %v848 = vpack.c.bf16 %v832, %v830
        %v849 = vpack.c.bf16 %v836, %v834
        %v850 = vpack.c.bf16 %v840, %v838
        %v851 = vpack.c.bf16 %v844, %v842
        %v852 = vpack.c.bf16 %v846, %v846
        %v853 = vld [vmem:[%s3] sm:$0xf]
        %v854 = vld [vmem:[%s3 + $0x4] sm:$0xf]
        %v855 = vld [vmem:[%s3 + $0x8] sm:$0xf]
        %v856 = vld [vmem:[%s3 + $0xc] sm:$0xf]
        %s857 = scalar_lea.vmem [#allocation2], 1
        %v858 = vld [vmem:[%s857] ss:$2 sm:$0xff]
        %s859 = scalar_lea.vmem [#allocation2], 17
        %v860 = vld [vmem:[%s859] ss:$2 sm:$0xff]
        %s861 = scalar_lea.vmem [#allocation2], 33
        %v862 = vld [vmem:[%s861] ss:$2 sm:$0xff]
        %s863 = scalar_lea.vmem [#allocation2], 49
        %v864 = vld [vmem:[%s863] ss:$2 sm:$0xff]
        %s865 = scalar_lea.vmem [#allocation2], 65
        %v866 = vld [vmem:[%s865] ss:$2 sm:$0xff]
        %s867 = scalar_lea.vmem [#allocation2], 81
        %v868 = vld [vmem:[%s867] ss:$2 sm:$0xff]
        %s869 = scalar_lea.vmem [#allocation2], 97
        %v870 = vld [vmem:[%s869] ss:$2 sm:$0xff]
        %s871 = scalar_lea.vmem [#allocation2], 113
        %v872 = vld [vmem:[%s871] ss:$2 sm:$0xff]
        %s873 = scalar_lea.vmem [#allocation2], 129
        %v874 = vld [vmem:[%s873] ss:$2 sm:$0xff]
        %s875 = scalar_lea.vmem [#allocation2], 145
        %v876 = vld [vmem:[%s875] ss:$2 sm:$0xff]
        %s877 = scalar_lea.vmem [#allocation2], 161
        %v878 = vld [vmem:[%s877] ss:$2 sm:$0x1]
        %v879 = vpack.c.bf16 %v860, %v858
        %v880 = vpack.c.bf16 %v864, %v862
        %v881 = vpack.c.bf16 %v868, %v866
        %v882 = vpack.c.bf16 %v872, %v870
        %v883 = vpack.c.bf16 %v876, %v874
        %v884 = vpack.c.bf16 %v878, %v878
        %s885 = scalar_lea.vmem %s3, 16
        %v886 = vld [vmem:[%s885] sm:$0xf]
        %v887 = vld [vmem:[%s885 + $0x4] sm:$0xf]
        %v888 = vld [vmem:[%s885 + $0x8] sm:$0xf]
        %v889 = vld [vmem:[%s885 + $0xc] sm:$0xf]
        %v894 = vunpack.c.l.b16 %v886
        %v895 = vunpack.c.l.b16 %v887
        %v896 = vunpack.c.l.b16 %v888
        %v897 = vunpack.c.l.b16 %v889
        %v898 = vpack.c.b16 %v895, %v894
        %v899 = vpack.c.b16 %v897, %v896
        %v903 = vsel %vm795, %v879, 0
        %v906 = vsel %vm795, %v880, 0
        %v909 = vsel %vm795, %v881, 0
        %v912 = vsel %vm795, %v882, 0
        %v915 = vsel %vm795, %v883, 0
        %v918 = vsel %vm795, %v884, 0
        %920 = vmatprep.subr.bf16.mxu0 0
        %921 = vmatpush1.bf16.msra.mxu0 0
        %922 = vmatprep.subr.bf16.mxu0 0
        %923 = vmatpush1.bf16.msra.mxu0 0
        %924 = vmatprep.subr.bf16.mxu0 0
        %925 = vmatpush1.bf16.msra.mxu0 0
        %926 = vmatprep.subr.bf16.mxu0 0
        %927 = vmatpush1.bf16.msra.mxu0 0
        %928 = vmatprep.subr.bf16.mxu0 0
        %929 = vmatpush1.bf16.msra.mxu0 0
        %930 = vmatprep.subr.bf16.mxu0 0
        %931 = vmatpush1.bf16.msra.mxu0 0
        %932 = vmatprep.subr.bf16.mxu0 0
        %933 = vmatpush1.bf16.msra.mxu0 %v899
        %934 = vmatprep.subr.bf16.mxu0 0
        %935 = vmatpush1.bf16.msra.mxu0 %v898
        %936 = vmatprep.subr.bf16.mxu0 0
        %937 = vmatpush2.bf16.msra.mxu0 0
        %938 = vmatprep.subr.bf16.mxu0 0
        %939 = vmatpush2.bf16.msra.mxu0 0
        %940 = vmatprep.subr.bf16.mxu0 0
        %941 = vmatpush2.bf16.msra.mxu0 0
        %942 = vmatprep.subr.bf16.mxu0 0
        %943 = vmatpush2.bf16.msra.mxu0 0
        %944 = vmatprep.subr.bf16.mxu0 0
        %945 = vmatpush2.bf16.msra.mxu0 0
        %946 = vmatprep.subr.bf16.mxu0 0
        %947 = vmatpush2.bf16.msra.mxu0 0
        %948 = vmatprep.subr.bf16.mxu0 0
        %949 = vmatpush2.bf16.msra.mxu0 0
        %950 = vmatprep.subr.bf16.mxu0 0
        %951 = vmatpush2.bf16.msra.mxu0 0
        %952 = vmatprep.mubr.bf16.mxu0 0
        %953 = vmatmul.mubr.bf16.gmra.mxu0 %v903
        %v954 = vpop.f32.mrf.mxu0
        %v955 = vadd.f32 0.0, %v954
        %v956 = vpop.f32.mrf.mxu0
        %v957 = vpop.f32.mrf.mxu0
        %v958 = vadd.f32 0.0, %v957
        %v959 = vpop.f32.mrf.mxu0
        %960 = vmatprep.mubr.bf16.mxu0 0
        %961 = vmatmul.mubr.bf16.gmra.mxu0 %v906
        %v962 = vpop.f32.mrf.mxu0
        %v963 = vadd.f32 0.0, %v962
        %v964 = vpop.f32.mrf.mxu0
        %v965 = vpop.f32.mrf.mxu0
        %v966 = vadd.f32 0.0, %v965
        %v967 = vpop.f32.mrf.mxu0
        %968 = vmatprep.mubr.bf16.mxu0 0
        %969 = vmatmul.mubr.bf16.gmra.mxu0 %v909
        %v970 = vpop.f32.mrf.mxu0
        %v971 = vadd.f32 0.0, %v970
        %v972 = vpop.f32.mrf.mxu0
        %v973 = vpop.f32.mrf.mxu0
        %v974 = vadd.f32 0.0, %v973
        %v975 = vpop.f32.mrf.mxu0
        %976 = vmatprep.mubr.bf16.mxu0 0
        %977 = vmatmul.mubr.bf16.gmra.mxu0 %v912
        %v978 = vpop.f32.mrf.mxu0
        %v979 = vadd.f32 0.0, %v978
        %v980 = vpop.f32.mrf.mxu0
        %v981 = vpop.f32.mrf.mxu0
        %v982 = vadd.f32 0.0, %v981
        %v983 = vpop.f32.mrf.mxu0
        %984 = vmatprep.mubr.bf16.mxu0 0
        %985 = vmatmul.mubr.bf16.gmra.mxu0 %v915
        %v986 = vpop.f32.mrf.mxu0
        %v987 = vadd.f32 0.0, %v986
        %v988 = vpop.f32.mrf.mxu0
        %v989 = vpop.f32.mrf.mxu0
        %v990 = vadd.f32 0.0, %v989
        %v991 = vpop.f32.mrf.mxu0
        %992 = vmatprep.mubr.bf16.mxu0 0
        %993 = vmatmul.mubr.bf16.gmra.mxu0 %v918
        %v994 = vpop.f32.mrf.mxu0
        %v995 = vadd.f32 0.0, %v994
        %v996 = vpop.f32.mrf.mxu0
        %v997 = vpop.f32.mrf.mxu0
        %v998 = vpop.f32.mrf.mxu0
        %999 = vdwg.mxu0
        %v1004 = vunpack.c.l.b16 %v853
        %v1005 = vunpack.c.l.b16 %v854
        %v1006 = vunpack.c.l.b16 %v855
        %v1007 = vunpack.c.l.b16 %v856
        %v1008 = vpack.c.b16 %v1005, %v1004
        %v1009 = vpack.c.b16 %v1007, %v1006
        %v1013 = vsel %vm795, %v847, 0
        %v1016 = vsel %vm795, %v848, 0
        %v1019 = vsel %vm795, %v849, 0
        %v1022 = vsel %vm795, %v850, 0
        %v1025 = vsel %vm795, %v851, 0
        %v1028 = vsel %vm795, %v852, 0
        %1030 = vmatprep.subr.bf16.mxu0 0
        %1031 = vmatpush1.bf16.msra.mxu0 0
        %1032 = vmatprep.subr.bf16.mxu0 0
        %1033 = vmatpush1.bf16.msra.mxu0 0
        %1034 = vmatprep.subr.bf16.mxu0 0
        %1035 = vmatpush1.bf16.msra.mxu0 0
        %1036 = vmatprep.subr.bf16.mxu0 0
        %1037 = vmatpush1.bf16.msra.mxu0 0
        %1038 = vmatprep.subr.bf16.mxu0 0
        %1039 = vmatpush1.bf16.msra.mxu0 0
        %1040 = vmatprep.subr.bf16.mxu0 0
        %1041 = vmatpush1.bf16.msra.mxu0 0
        %1042 = vmatprep.subr.bf16.mxu0 0
        %1043 = vmatpush1.bf16.msra.mxu0 %v1009
        %1044 = vmatprep.subr.bf16.mxu0 0
        %1045 = vmatpush1.bf16.msra.mxu0 %v1008
        %1046 = vmatprep.subr.bf16.mxu0 0
        %1047 = vmatpush2.bf16.msra.mxu0 0
        %1048 = vmatprep.subr.bf16.mxu0 0
        %1049 = vmatpush2.bf16.msra.mxu0 0
        %1050 = vmatprep.subr.bf16.mxu0 0
        %1051 = vmatpush2.bf16.msra.mxu0 0
        %1052 = vmatprep.subr.bf16.mxu0 0
        %1053 = vmatpush2.bf16.msra.mxu0 0
        %1054 = vmatprep.subr.bf16.mxu0 0
        %1055 = vmatpush2.bf16.msra.mxu0 0
        %1056 = vmatprep.subr.bf16.mxu0 0
        %1057 = vmatpush2.bf16.msra.mxu0 0
        %1058 = vmatprep.subr.bf16.mxu0 0
        %1059 = vmatpush2.bf16.msra.mxu0 0
        %1060 = vmatprep.subr.bf16.mxu0 0
        %1061 = vmatpush2.bf16.msra.mxu0 0
        %1062 = vmatprep.mubr.bf16.mxu0 0
        %1063 = vmatmul.mubr.bf16.gmra.mxu0 %v1013
        %v1064 = vpop.f32.mrf.mxu0
        %v1065 = vadd.f32 %v955, %v1064
        %v1066 = vpop.f32.mrf.mxu0
        %v1067 = vpop.f32.mrf.mxu0
        %v1068 = vadd.f32 %v958, %v1067
        %v1069 = vpop.f32.mrf.mxu0
        %1070 = vmatprep.mubr.bf16.mxu0 0
        %1071 = vmatmul.mubr.bf16.gmra.mxu0 %v1016
        %v1072 = vpop.f32.mrf.mxu0
        %v1073 = vadd.f32 %v963, %v1072
        %v1074 = vpop.f32.mrf.mxu0
        %v1075 = vpop.f32.mrf.mxu0
        %v1076 = vadd.f32 %v966, %v1075
        %v1077 = vpop.f32.mrf.mxu0
        %1078 = vmatprep.mubr.bf16.mxu0 0
        %1079 = vmatmul.mubr.bf16.gmra.mxu0 %v1019
        %v1080 = vpop.f32.mrf.mxu0
        %v1081 = vadd.f32 %v971, %v1080
        %v1082 = vpop.f32.mrf.mxu0
        %v1083 = vpop.f32.mrf.mxu0
        %v1084 = vadd.f32 %v974, %v1083
        %v1085 = vpop.f32.mrf.mxu0
        %1086 = vmatprep.mubr.bf16.mxu0 0
        %1087 = vmatmul.mubr.bf16.gmra.mxu0 %v1022
        %v1088 = vpop.f32.mrf.mxu0
        %v1089 = vadd.f32 %v979, %v1088
        %v1090 = vpop.f32.mrf.mxu0
        %v1091 = vpop.f32.mrf.mxu0
        %v1092 = vadd.f32 %v982, %v1091
        %v1093 = vpop.f32.mrf.mxu0
        %1094 = vmatprep.mubr.bf16.mxu0 0
        %1095 = vmatmul.mubr.bf16.gmra.mxu0 %v1025
        %v1096 = vpop.f32.mrf.mxu0
        %v1097 = vadd.f32 %v987, %v1096
        %v1098 = vpop.f32.mrf.mxu0
        %v1099 = vpop.f32.mrf.mxu0
        %v1100 = vadd.f32 %v990, %v1099
        %v1101 = vpop.f32.mrf.mxu0
        %1102 = vmatprep.mubr.bf16.mxu0 0
        %1103 = vmatmul.mubr.bf16.gmra.mxu0 %v1028
        %v1104 = vpop.f32.mrf.mxu0
        %v1105 = vadd.f32 %v995, %v1104
        %v1106 = vpop.f32.mrf.mxu0
        %v1107 = vpop.f32.mrf.mxu0
        %v1108 = vpop.f32.mrf.mxu0
        %1109 = vdwg.mxu0
        %s1110 = scalar_lea.vmem [#allocation2], 2
        %v1111 = vld [vmem:[%s1110] ss:$2 sm:$0xff]
        %s1112 = scalar_lea.vmem [#allocation2], 18
        %v1113 = vld [vmem:[%s1112] ss:$2 sm:$0xff]
        %s1114 = scalar_lea.vmem [#allocation2], 34
        %v1115 = vld [vmem:[%s1114] ss:$2 sm:$0xff]
        %s1116 = scalar_lea.vmem [#allocation2], 50
        %v1117 = vld [vmem:[%s1116] ss:$2 sm:$0xff]
        %s1118 = scalar_lea.vmem [#allocation2], 66
        %v1119 = vld [vmem:[%s1118] ss:$2 sm:$0xff]
        %s1120 = scalar_lea.vmem [#allocation2], 82
        %v1121 = vld [vmem:[%s1120] ss:$2 sm:$0xff]
        %s1122 = scalar_lea.vmem [#allocation2], 98
        %v1123 = vld [vmem:[%s1122] ss:$2 sm:$0xff]
        %s1124 = scalar_lea.vmem [#allocation2], 114
        %v1125 = vld [vmem:[%s1124] ss:$2 sm:$0xff]
        %s1126 = scalar_lea.vmem [#allocation2], 130
        %v1127 = vld [vmem:[%s1126] ss:$2 sm:$0xff]
        %s1128 = scalar_lea.vmem [#allocation2], 146
        %v1129 = vld [vmem:[%s1128] ss:$2 sm:$0xff]
        %s1130 = scalar_lea.vmem [#allocation2], 162
        %v1131 = vld [vmem:[%s1130] ss:$2 sm:$0x1]
        %v1132 = vpack.c.bf16 %v1113, %v1111
        %v1133 = vpack.c.bf16 %v1117, %v1115
        %v1134 = vpack.c.bf16 %v1121, %v1119
        %v1135 = vpack.c.bf16 %v1125, %v1123
        %v1136 = vpack.c.bf16 %v1129, %v1127
        %v1137 = vpack.c.bf16 %v1131, %v1131
        %s1138 = scalar_lea.vmem %s3, 32
        %v1139 = vld [vmem:[%s1138] sm:$0xf]
        %v1140 = vld [vmem:[%s1138 + $0x4] sm:$0xf]
        %v1141 = vld [vmem:[%s1138 + $0x8] sm:$0xf]
        %v1142 = vld [vmem:[%s1138 + $0xc] sm:$0xf]
        %v1147 = vunpack.c.l.b16 %v1139
        %v1148 = vunpack.c.l.b16 %v1140
        %v1149 = vunpack.c.l.b16 %v1141
        %v1150 = vunpack.c.l.b16 %v1142
        %v1151 = vpack.c.b16 %v1148, %v1147
        %v1152 = vpack.c.b16 %v1150, %v1149
        %v1156 = vsel %vm795, %v1132, 0
        %v1159 = vsel %vm795, %v1133, 0
        %v1162 = vsel %vm795, %v1134, 0
        %v1165 = vsel %vm795, %v1135, 0
        %v1168 = vsel %vm795, %v1136, 0
        %v1171 = vsel %vm795, %v1137, 0
        %1173 = vmatprep.subr.bf16.mxu0 0
        %1174 = vmatpush1.bf16.msra.mxu0 0
        %1175 = vmatprep.subr.bf16.mxu0 0
        %1176 = vmatpush1.bf16.msra.mxu0 0
        %1177 = vmatprep.subr.bf16.mxu0 0
        %1178 = vmatpush1.bf16.msra.mxu0 0
        %1179 = vmatprep.subr.bf16.mxu0 0
        %1180 = vmatpush1.bf16.msra.mxu0 0
        %1181 = vmatprep.subr.bf16.mxu0 0
        %1182 = vmatpush1.bf16.msra.mxu0 0
        %1183 = vmatprep.subr.bf16.mxu0 0
        %1184 = vmatpush1.bf16.msra.mxu0 0
        %1185 = vmatprep.subr.bf16.mxu0 0
        %1186 = vmatpush1.bf16.msra.mxu0 %v1152
        %1187 = vmatprep.subr.bf16.mxu0 0
        %1188 = vmatpush1.bf16.msra.mxu0 %v1151
        %1189 = vmatprep.subr.bf16.mxu0 0
        %1190 = vmatpush2.bf16.msra.mxu0 0
        %1191 = vmatprep.subr.bf16.mxu0 0
        %1192 = vmatpush2.bf16.msra.mxu0 0
        %1193 = vmatprep.subr.bf16.mxu0 0
        %1194 = vmatpush2.bf16.msra.mxu0 0
        %1195 = vmatprep.subr.bf16.mxu0 0
        %1196 = vmatpush2.bf16.msra.mxu0 0
        %1197 = vmatprep.subr.bf16.mxu0 0
        %1198 = vmatpush2.bf16.msra.mxu0 0
        %1199 = vmatprep.subr.bf16.mxu0 0
        %1200 = vmatpush2.bf16.msra.mxu0 0
        %1201 = vmatprep.subr.bf16.mxu0 0
        %1202 = vmatpush2.bf16.msra.mxu0 0
        %1203 = vmatprep.subr.bf16.mxu0 0
        %1204 = vmatpush2.bf16.msra.mxu0 0
        %1205 = vmatprep.mubr.bf16.mxu0 0
        %1206 = vmatmul.mubr.bf16.gmra.mxu0 %v1156
        %v1207 = vpop.f32.mrf.mxu0
        %v1208 = vadd.f32 0.0, %v1207
        %v1209 = vpop.f32.mrf.mxu0
        %v1210 = vpop.f32.mrf.mxu0
        %v1211 = vadd.f32 0.0, %v1210
        %v1212 = vpop.f32.mrf.mxu0
        %1213 = vmatprep.mubr.bf16.mxu0 0
        %1214 = vmatmul.mubr.bf16.gmra.mxu0 %v1159
        %v1215 = vpop.f32.mrf.mxu0
        %v1216 = vadd.f32 0.0, %v1215
        %v1217 = vpop.f32.mrf.mxu0
        %v1218 = vpop.f32.mrf.mxu0
        %v1219 = vadd.f32 0.0, %v1218
        %v1220 = vpop.f32.mrf.mxu0
        %1221 = vmatprep.mubr.bf16.mxu0 0
        %1222 = vmatmul.mubr.bf16.gmra.mxu0 %v1162
        %v1223 = vpop.f32.mrf.mxu0
        %v1224 = vadd.f32 0.0, %v1223
        %v1225 = vpop.f32.mrf.mxu0
        %v1226 = vpop.f32.mrf.mxu0
        %v1227 = vadd.f32 0.0, %v1226
        %v1228 = vpop.f32.mrf.mxu0
        %1229 = vmatprep.mubr.bf16.mxu0 0
        %1230 = vmatmul.mubr.bf16.gmra.mxu0 %v1165
        %v1231 = vpop.f32.mrf.mxu0
        %v1232 = vadd.f32 0.0, %v1231
        %v1233 = vpop.f32.mrf.mxu0
        %v1234 = vpop.f32.mrf.mxu0
        %v1235 = vadd.f32 0.0, %v1234
        %v1236 = vpop.f32.mrf.mxu0
        %1237 = vmatprep.mubr.bf16.mxu0 0
        %1238 = vmatmul.mubr.bf16.gmra.mxu0 %v1168
        %v1239 = vpop.f32.mrf.mxu0
        %v1240 = vadd.f32 0.0, %v1239
        %v1241 = vpop.f32.mrf.mxu0
        %v1242 = vpop.f32.mrf.mxu0
        %v1243 = vadd.f32 0.0, %v1242
        %v1244 = vpop.f32.mrf.mxu0
        %1245 = vmatprep.mubr.bf16.mxu0 0
        %1246 = vmatmul.mubr.bf16.gmra.mxu0 %v1171
        %v1247 = vpop.f32.mrf.mxu0
        %v1248 = vadd.f32 0.0, %v1247
        %v1249 = vpop.f32.mrf.mxu0
        %v1250 = vpop.f32.mrf.mxu0
        %v1251 = vpop.f32.mrf.mxu0
        %1252 = vdwg.mxu0
        %v1253 = vadd.f32 %v1065, %v1208
        %v1254 = vadd.f32 %v1068, %v1211
        %v1255 = vadd.f32 %v1073, %v1216
        %v1256 = vadd.f32 %v1076, %v1219
        %v1257 = vadd.f32 %v1081, %v1224
        %v1258 = vadd.f32 %v1084, %v1227
        %v1259 = vadd.f32 %v1089, %v1232
        %v1260 = vadd.f32 %v1092, %v1235
        %v1261 = vadd.f32 %v1097, %v1240
        %v1262 = vadd.f32 %v1100, %v1243
        %v1263 = vadd.f32 %v1105, %v1248
        %s1264 = scalar_lea.vmem [#allocation2], 3
        %v1265 = vld [vmem:[%s1264] ss:$2 sm:$0xff]
        %s1266 = scalar_lea.vmem [#allocation2], 19
        %v1267 = vld [vmem:[%s1266] ss:$2 sm:$0xff]
        %s1268 = scalar_lea.vmem [#allocation2], 35
        %v1269 = vld [vmem:[%s1268] ss:$2 sm:$0xff]
        %s1270 = scalar_lea.vmem [#allocation2], 51
        %v1271 = vld [vmem:[%s1270] ss:$2 sm:$0xff]
        %s1272 = scalar_lea.vmem [#allocation2], 67
        %v1273 = vld [vmem:[%s1272] ss:$2 sm:$0xff]
        %s1274 = scalar_lea.vmem [#allocation2], 83
        %v1275 = vld [vmem:[%s1274] ss:$2 sm:$0xff]
        %s1276 = scalar_lea.vmem [#allocation2], 99
        %v1277 = vld [vmem:[%s1276] ss:$2 sm:$0xff]
        %s1278 = scalar_lea.vmem [#allocation2], 115
        %v1279 = vld [vmem:[%s1278] ss:$2 sm:$0xff]
        %s1280 = scalar_lea.vmem [#allocation2], 131
        %v1281 = vld [vmem:[%s1280] ss:$2 sm:$0xff]
        %s1282 = scalar_lea.vmem [#allocation2], 147
        %v1283 = vld [vmem:[%s1282] ss:$2 sm:$0xff]
        %s1284 = scalar_lea.vmem [#allocation2], 163
        %v1285 = vld [vmem:[%s1284] ss:$2 sm:$0x1]
        %v1286 = vpack.c.bf16 %v1267, %v1265
        %v1287 = vpack.c.bf16 %v1271, %v1269
        %v1288 = vpack.c.bf16 %v1275, %v1273
        %v1289 = vpack.c.bf16 %v1279, %v1277
        %v1290 = vpack.c.bf16 %v1283, %v1281
        %v1291 = vpack.c.bf16 %v1285, %v1285
        %s1292 = scalar_lea.vmem %s3, 48
        %v1293 = vld [vmem:[%s1292] sm:$0xf]
        %v1294 = vld [vmem:[%s1292 + $0x4] sm:$0xf]
        %v1295 = vld [vmem:[%s1292 + $0x8] sm:$0xf]
        %v1296 = vld [vmem:[%s1292 + $0xc] sm:$0xf]
        %v1301 = vunpack.c.l.b16 %v1293
        %v1302 = vunpack.c.l.b16 %v1294
        %v1303 = vunpack.c.l.b16 %v1295
        %v1304 = vunpack.c.l.b16 %v1296
        %v1305 = vpack.c.b16 %v1302, %v1301
        %v1306 = vpack.c.b16 %v1304, %v1303
        %v1310 = vsel %vm795, %v1286, 0
        %v1313 = vsel %vm795, %v1287, 0
        %v1316 = vsel %vm795, %v1288, 0
        %v1319 = vsel %vm795, %v1289, 0
        %v1322 = vsel %vm795, %v1290, 0
        %v1325 = vsel %vm795, %v1291, 0
        %1327 = vmatprep.subr.bf16.mxu0 0
        %1328 = vmatpush1.bf16.msra.mxu0 0
        %1329 = vmatprep.subr.bf16.mxu0 0
        %1330 = vmatpush1.bf16.msra.mxu0 0
        %1331 = vmatprep.subr.bf16.mxu0 0
        %1332 = vmatpush1.bf16.msra.mxu0 0
        %1333 = vmatprep.subr.bf16.mxu0 0
        %1334 = vmatpush1.bf16.msra.mxu0 0
        %1335 = vmatprep.subr.bf16.mxu0 0
        %1336 = vmatpush1.bf16.msra.mxu0 0
        %1337 = vmatprep.subr.bf16.mxu0 0
        %1338 = vmatpush1.bf16.msra.mxu0 0
        %1339 = vmatprep.subr.bf16.mxu0 0
        %1340 = vmatpush1.bf16.msra.mxu0 %v1306
        %1341 = vmatprep.subr.bf16.mxu0 0
        %1342 = vmatpush1.bf16.msra.mxu0 %v1305
        %1343 = vmatprep.subr.bf16.mxu0 0
        %1344 = vmatpush2.bf16.msra.mxu0 0
        %1345 = vmatprep.subr.bf16.mxu0 0
        %1346 = vmatpush2.bf16.msra.mxu0 0
        %1347 = vmatprep.subr.bf16.mxu0 0
        %1348 = vmatpush2.bf16.msra.mxu0 0
        %1349 = vmatprep.subr.bf16.mxu0 0
        %1350 = vmatpush2.bf16.msra.mxu0 0
        %1351 = vmatprep.subr.bf16.mxu0 0
        %1352 = vmatpush2.bf16.msra.mxu0 0
        %1353 = vmatprep.subr.bf16.mxu0 0
        %1354 = vmatpush2.bf16.msra.mxu0 0
        %1355 = vmatprep.subr.bf16.mxu0 0
        %1356 = vmatpush2.bf16.msra.mxu0 0
        %1357 = vmatprep.subr.bf16.mxu0 0
        %1358 = vmatpush2.bf16.msra.mxu0 0
        %1359 = vmatprep.mubr.bf16.mxu0 0
        %1360 = vmatmul.mubr.bf16.gmra.mxu0 %v1310
        %v1361 = vpop.f32.mrf.mxu0
        %v1362 = vadd.f32 0.0, %v1361
        %v1363 = vpop.f32.mrf.mxu0
        %v1364 = vpop.f32.mrf.mxu0
        %v1365 = vadd.f32 0.0, %v1364
        %v1366 = vpop.f32.mrf.mxu0
        %1367 = vmatprep.mubr.bf16.mxu0 0
        %1368 = vmatmul.mubr.bf16.gmra.mxu0 %v1313
        %v1369 = vpop.f32.mrf.mxu0
        %v1370 = vadd.f32 0.0, %v1369
        %v1371 = vpop.f32.mrf.mxu0
        %v1372 = vpop.f32.mrf.mxu0
        %v1373 = vadd.f32 0.0, %v1372
        %v1374 = vpop.f32.mrf.mxu0
        %1375 = vmatprep.mubr.bf16.mxu0 0
        %1376 = vmatmul.mubr.bf16.gmra.mxu0 %v1316
        %v1377 = vpop.f32.mrf.mxu0
        %v1378 = vadd.f32 0.0, %v1377
        %v1379 = vpop.f32.mrf.mxu0
        %v1380 = vpop.f32.mrf.mxu0
        %v1381 = vadd.f32 0.0, %v1380
        %v1382 = vpop.f32.mrf.mxu0
        %1383 = vmatprep.mubr.bf16.mxu0 0
        %1384 = vmatmul.mubr.bf16.gmra.mxu0 %v1319
        %v1385 = vpop.f32.mrf.mxu0
        %v1386 = vadd.f32 0.0, %v1385
        %v1387 = vpop.f32.mrf.mxu0
        %v1388 = vpop.f32.mrf.mxu0
        %v1389 = vadd.f32 0.0, %v1388
        %v1390 = vpop.f32.mrf.mxu0
        %1391 = vmatprep.mubr.bf16.mxu0 0
        %1392 = vmatmul.mubr.bf16.gmra.mxu0 %v1322
        %v1393 = vpop.f32.mrf.mxu0
        %v1394 = vadd.f32 0.0, %v1393
        %v1395 = vpop.f32.mrf.mxu0
        %v1396 = vpop.f32.mrf.mxu0
        %v1397 = vadd.f32 0.0, %v1396
        %v1398 = vpop.f32.mrf.mxu0
        %1399 = vmatprep.mubr.bf16.mxu0 0
        %1400 = vmatmul.mubr.bf16.gmra.mxu0 %v1325
        %v1401 = vpop.f32.mrf.mxu0
        %v1402 = vadd.f32 0.0, %v1401
        %v1403 = vpop.f32.mrf.mxu0
        %v1404 = vpop.f32.mrf.mxu0
        %v1405 = vpop.f32.mrf.mxu0
        %1406 = vdwg.mxu0
        %v1407 = vadd.f32 %v1253, %v1362
        %v1408 = vadd.f32 %v1254, %v1365
        %v1409 = vadd.f32 %v1255, %v1370
        %v1410 = vadd.f32 %v1256, %v1373
        %v1411 = vadd.f32 %v1257, %v1378
        %v1412 = vadd.f32 %v1258, %v1381
        %v1413 = vadd.f32 %v1259, %v1386
        %v1414 = vadd.f32 %v1260, %v1389
        %v1415 = vadd.f32 %v1261, %v1394
        %v1416 = vadd.f32 %v1262, %v1397
        %v1417 = vadd.f32 %v1263, %v1402
        %s1418 = scalar_lea.vmem [#allocation2], 15
        %v1419 = vld [vmem:[%s1418] ss:$2 sm:$0xff]
        %s1420 = scalar_lea.vmem [#allocation2], 31
        %v1421 = vld [vmem:[%s1420] ss:$2 sm:$0xff]
        %s1422 = scalar_lea.vmem [#allocation2], 47
        %v1423 = vld [vmem:[%s1422] ss:$2 sm:$0xff]
        %s1424 = scalar_lea.vmem [#allocation2], 63
        %v1425 = vld [vmem:[%s1424] ss:$2 sm:$0xff]
        %s1426 = scalar_lea.vmem [#allocation2], 79
        %v1427 = vld [vmem:[%s1426] ss:$2 sm:$0xff]
        %s1428 = scalar_lea.vmem [#allocation2], 95
        %v1429 = vld [vmem:[%s1428] ss:$2 sm:$0xff]
        %s1430 = scalar_lea.vmem [#allocation2], 111
        %v1431 = vld [vmem:[%s1430] ss:$2 sm:$0xff]
        %s1432 = scalar_lea.vmem [#allocation2], 127
        %v1433 = vld [vmem:[%s1432] ss:$2 sm:$0xff]
        %s1434 = scalar_lea.vmem [#allocation2], 143
        %v1435 = vld [vmem:[%s1434] ss:$2 sm:$0xff]
        %s1436 = scalar_lea.vmem [#allocation2], 159
        %v1437 = vld [vmem:[%s1436] ss:$2 sm:$0xff]
        %s1438 = scalar_lea.vmem [#allocation2], 175
        %v1439 = vld [vmem:[%s1438] ss:$2 sm:$0x1]
        %v1440 = vpack.c.bf16 %v1421, %v1419
        %v1441 = vpack.c.bf16 %v1425, %v1423
        %v1442 = vpack.c.bf16 %v1429, %v1427
        %v1443 = vpack.c.bf16 %v1433, %v1431
        %v1444 = vpack.c.bf16 %v1437, %v1435
        %v1445 = vpack.c.bf16 %v1439, %v1439
        %s1446 = scalar_lea.vmem %s3, 64
        %v1447 = vld [vmem:[%s1446] sm:$0xf]
        %v1448 = vld [vmem:[%s1446 + $0x4] sm:$0xf]
        %v1449 = vld [vmem:[%s1446 + $0x8] sm:$0xf]
        %v1450 = vld [vmem:[%s1446 + $0xc] sm:$0xf]
        %v1455 = vunpack.c.l.b16 %v1447
        %v1456 = vunpack.c.l.b16 %v1448
        %v1457 = vunpack.c.l.b16 %v1449
        %v1458 = vunpack.c.l.b16 %v1450
        %v1459 = vpack.c.b16 %v1456, %v1455
        %v1460 = vpack.c.b16 %v1458, %v1457
        %v1464 = vsel %vm795, %v1440, 0
        %v1467 = vsel %vm795, %v1441, 0
        %v1470 = vsel %vm795, %v1442, 0
        %v1473 = vsel %vm795, %v1443, 0
        %v1476 = vsel %vm795, %v1444, 0
        %v1479 = vsel %vm795, %v1445, 0
        %1481 = vmatprep.subr.bf16.mxu0 0
        %1482 = vmatpush1.bf16.msra.mxu0 0
        %1483 = vmatprep.subr.bf16.mxu0 0
        %1484 = vmatpush1.bf16.msra.mxu0 0
        %1485 = vmatprep.subr.bf16.mxu0 0
        %1486 = vmatpush1.bf16.msra.mxu0 0
        %1487 = vmatprep.subr.bf16.mxu0 0
        %1488 = vmatpush1.bf16.msra.mxu0 0
        %1489 = vmatprep.subr.bf16.mxu0 0
        %1490 = vmatpush1.bf16.msra.mxu0 0
        %1491 = vmatprep.subr.bf16.mxu0 0
        %1492 = vmatpush1.bf16.msra.mxu0 0
        %1493 = vmatprep.subr.bf16.mxu0 0
        %1494 = vmatpush1.bf16.msra.mxu0 %v1460
        %1495 = vmatprep.subr.bf16.mxu0 0
        %1496 = vmatpush1.bf16.msra.mxu0 %v1459
        %1497 = vmatprep.subr.bf16.mxu0 0
        %1498 = vmatpush2.bf16.msra.mxu0 0
        %1499 = vmatprep.subr.bf16.mxu0 0
        %1500 = vmatpush2.bf16.msra.mxu0 0
        %1501 = vmatprep.subr.bf16.mxu0 0
        %1502 = vmatpush2.bf16.msra.mxu0 0
        %1503 = vmatprep.subr.bf16.mxu0 0
        %1504 = vmatpush2.bf16.msra.mxu0 0
        %1505 = vmatprep.subr.bf16.mxu0 0
        %1506 = vmatpush2.bf16.msra.mxu0 0
        %1507 = vmatprep.subr.bf16.mxu0 0
        %1508 = vmatpush2.bf16.msra.mxu0 0
        %1509 = vmatprep.subr.bf16.mxu0 0
        %1510 = vmatpush2.bf16.msra.mxu0 0
        %1511 = vmatprep.subr.bf16.mxu0 0
        %1512 = vmatpush2.bf16.msra.mxu0 0
        %1513 = vmatprep.mubr.bf16.mxu0 0
        %1514 = vmatmul.mubr.bf16.gmra.mxu0 %v1464
        %v1515 = vpop.f32.mrf.mxu0
        %v1516 = vadd.f32 0.0, %v1515
        %v1517 = vpop.f32.mrf.mxu0
        %v1518 = vpop.f32.mrf.mxu0
        %v1519 = vadd.f32 0.0, %v1518
        %v1520 = vpop.f32.mrf.mxu0
        %1521 = vmatprep.mubr.bf16.mxu0 0
        %1522 = vmatmul.mubr.bf16.gmra.mxu0 %v1467
        %v1523 = vpop.f32.mrf.mxu0
        %v1524 = vadd.f32 0.0, %v1523
        %v1525 = vpop.f32.mrf.mxu0
        %v1526 = vpop.f32.mrf.mxu0
        %v1527 = vadd.f32 0.0, %v1526
        %v1528 = vpop.f32.mrf.mxu0
        %1529 = vmatprep.mubr.bf16.mxu0 0
        %1530 = vmatmul.mubr.bf16.gmra.mxu0 %v1470
        %v1531 = vpop.f32.mrf.mxu0
        %v1532 = vadd.f32 0.0, %v1531
        %v1533 = vpop.f32.mrf.mxu0
        %v1534 = vpop.f32.mrf.mxu0
        %v1535 = vadd.f32 0.0, %v1534
        %v1536 = vpop.f32.mrf.mxu0
        %1537 = vmatprep.mubr.bf16.mxu0 0
        %1538 = vmatmul.mubr.bf16.gmra.mxu0 %v1473
        %v1539 = vpop.f32.mrf.mxu0
        %v1540 = vadd.f32 0.0, %v1539
        %v1541 = vpop.f32.mrf.mxu0
        %v1542 = vpop.f32.mrf.mxu0
        %v1543 = vadd.f32 0.0, %v1542
        %v1544 = vpop.f32.mrf.mxu0
        %1545 = vmatprep.mubr.bf16.mxu0 0
        %1546 = vmatmul.mubr.bf16.gmra.mxu0 %v1476
        %v1547 = vpop.f32.mrf.mxu0
        %v1548 = vadd.f32 0.0, %v1547
        %v1549 = vpop.f32.mrf.mxu0
        %v1550 = vpop.f32.mrf.mxu0
        %v1551 = vadd.f32 0.0, %v1550
        %v1552 = vpop.f32.mrf.mxu0
        %1553 = vmatprep.mubr.bf16.mxu0 0
        %1554 = vmatmul.mubr.bf16.gmra.mxu0 %v1479
        %v1555 = vpop.f32.mrf.mxu0
        %v1556 = vadd.f32 0.0, %v1555
        %v1557 = vpop.f32.mrf.mxu0
        %v1558 = vpop.f32.mrf.mxu0
        %v1559 = vpop.f32.mrf.mxu0
        %1560 = vdwg.mxu0
        %v1561 = vadd.f32 %v1407, %v1516
        %v1562 = vadd.f32 %v1408, %v1519
        %v1563 = vadd.f32 %v1409, %v1524
        %v1564 = vadd.f32 %v1410, %v1527
        %v1565 = vadd.f32 %v1411, %v1532
        %v1566 = vadd.f32 %v1412, %v1535
        %v1567 = vadd.f32 %v1413, %v1540
        %v1568 = vadd.f32 %v1414, %v1543
        %v1569 = vadd.f32 %v1415, %v1548
        %v1570 = vadd.f32 %v1416, %v1551
        %v1571 = vadd.f32 %v1417, %v1556
        %v1572 = vld [vmem:[%s827] ss:$2 sm:$0xff]
        %v1573 = vld [vmem:[%s829] ss:$2 sm:$0xff]
        %v1574 = vld [vmem:[%s831] ss:$2 sm:$0xff]
        %v1575 = vld [vmem:[%s833] ss:$2 sm:$0xff]
        %v1576 = vld [vmem:[%s835] ss:$2 sm:$0xff]
        %v1577 = vld [vmem:[%s837] ss:$2 sm:$0xff]
        %v1578 = vld [vmem:[%s839] ss:$2 sm:$0xff]
        %v1579 = vld [vmem:[%s841] ss:$2 sm:$0xff]
        %v1580 = vld [vmem:[%s843] ss:$2 sm:$0xff]
        %v1581 = vld [vmem:[%s845] ss:$2 sm:$0xff]
        %s1582 = scalar_lea.vmem [#allocation2], 176
        %v1583 = vld [vmem:[%s1582] ss:$2 sm:$0x1]
        %v1584 = vpack.c.bf16 %v1573, %v1572
        %v1585 = vpack.c.bf16 %v1575, %v1574
        %v1586 = vpack.c.bf16 %v1577, %v1576
        %v1587 = vpack.c.bf16 %v1579, %v1578
        %v1588 = vpack.c.bf16 %v1581, %v1580
        %v1589 = vpack.c.bf16 %v1583, %v1583
        %s1590 = scalar_lea.vmem %s3, 80
        %v1591 = vld [vmem:[%s1590] sm:$0xf]
        %v1592 = vld [vmem:[%s1590 + $0x4] sm:$0xf]
        %v1593 = vld [vmem:[%s1590 + $0x8] sm:$0xf]
        %v1594 = vld [vmem:[%s1590 + $0xc] sm:$0xf]
        %v1599 = vunpack.c.l.b16 %v1591
        %v1600 = vunpack.c.l.b16 %v1592
        %v1601 = vunpack.c.l.b16 %v1593
        %v1602 = vunpack.c.l.b16 %v1594
        %v1603 = vpack.c.b16 %v1600, %v1599
        %v1604 = vpack.c.b16 %v1602, %v1601
        %v1608 = vsel %vm795, %v1584, 0
        %v1611 = vsel %vm795, %v1585, 0
        %v1614 = vsel %vm795, %v1586, 0
        %v1617 = vsel %vm795, %v1587, 0
        %v1620 = vsel %vm795, %v1588, 0
        %v1623 = vsel %vm795, %v1589, 0
        %1625 = vmatprep.subr.bf16.mxu0 0
        %1626 = vmatpush1.bf16.msra.mxu0 0
        %1627 = vmatprep.subr.bf16.mxu0 0
        %1628 = vmatpush1.bf16.msra.mxu0 0
        %1629 = vmatprep.subr.bf16.mxu0 0
        %1630 = vmatpush1.bf16.msra.mxu0 0
        %1631 = vmatprep.subr.bf16.mxu0 0
        %1632 = vmatpush1.bf16.msra.mxu0 0
        %1633 = vmatprep.subr.bf16.mxu0 0
        %1634 = vmatpush1.bf16.msra.mxu0 0
        %1635 = vmatprep.subr.bf16.mxu0 0
        %1636 = vmatpush1.bf16.msra.mxu0 0
        %1637 = vmatprep.subr.bf16.mxu0 0
        %1638 = vmatpush1.bf16.msra.mxu0 %v1604
        %1639 = vmatprep.subr.bf16.mxu0 0
        %1640 = vmatpush1.bf16.msra.mxu0 %v1603
        %1641 = vmatprep.subr.bf16.mxu0 0
        %1642 = vmatpush2.bf16.msra.mxu0 0
        %1643 = vmatprep.subr.bf16.mxu0 0
        %1644 = vmatpush2.bf16.msra.mxu0 0
        %1645 = vmatprep.subr.bf16.mxu0 0
        %1646 = vmatpush2.bf16.msra.mxu0 0
        %1647 = vmatprep.subr.bf16.mxu0 0
        %1648 = vmatpush2.bf16.msra.mxu0 0
        %1649 = vmatprep.subr.bf16.mxu0 0
        %1650 = vmatpush2.bf16.msra.mxu0 0
        %1651 = vmatprep.subr.bf16.mxu0 0
        %1652 = vmatpush2.bf16.msra.mxu0 0
        %1653 = vmatprep.subr.bf16.mxu0 0
        %1654 = vmatpush2.bf16.msra.mxu0 0
        %1655 = vmatprep.subr.bf16.mxu0 0
        %1656 = vmatpush2.bf16.msra.mxu0 0
        %1657 = vmatprep.mubr.bf16.mxu0 0
        %1658 = vmatmul.mubr.bf16.gmra.mxu0 %v1608
        %v1659 = vpop.f32.mrf.mxu0
        %v1660 = vadd.f32 0.0, %v1659
        %v1661 = vpop.f32.mrf.mxu0
        %v1662 = vpop.f32.mrf.mxu0
        %v1663 = vadd.f32 0.0, %v1662
        %v1664 = vpop.f32.mrf.mxu0
        %1665 = vmatprep.mubr.bf16.mxu0 0
        %1666 = vmatmul.mubr.bf16.gmra.mxu0 %v1611
        %v1667 = vpop.f32.mrf.mxu0
        %v1668 = vadd.f32 0.0, %v1667
        %v1669 = vpop.f32.mrf.mxu0
        %v1670 = vpop.f32.mrf.mxu0
        %v1671 = vadd.f32 0.0, %v1670
        %v1672 = vpop.f32.mrf.mxu0
        %1673 = vmatprep.mubr.bf16.mxu0 0
        %1674 = vmatmul.mubr.bf16.gmra.mxu0 %v1614
        %v1675 = vpop.f32.mrf.mxu0
        %v1676 = vadd.f32 0.0, %v1675
        %v1677 = vpop.f32.mrf.mxu0
        %v1678 = vpop.f32.mrf.mxu0
        %v1679 = vadd.f32 0.0, %v1678
        %v1680 = vpop.f32.mrf.mxu0
        %1681 = vmatprep.mubr.bf16.mxu0 0
        %1682 = vmatmul.mubr.bf16.gmra.mxu0 %v1617
        %v1683 = vpop.f32.mrf.mxu0
        %v1684 = vadd.f32 0.0, %v1683
        %v1685 = vpop.f32.mrf.mxu0
        %v1686 = vpop.f32.mrf.mxu0
        %v1687 = vadd.f32 0.0, %v1686
        %v1688 = vpop.f32.mrf.mxu0
        %1689 = vmatprep.mubr.bf16.mxu0 0
        %1690 = vmatmul.mubr.bf16.gmra.mxu0 %v1620
        %v1691 = vpop.f32.mrf.mxu0
        %v1692 = vadd.f32 0.0, %v1691
        %v1693 = vpop.f32.mrf.mxu0
        %v1694 = vpop.f32.mrf.mxu0
        %v1695 = vadd.f32 0.0, %v1694
        %v1696 = vpop.f32.mrf.mxu0
        %1697 = vmatprep.mubr.bf16.mxu0 0
        %1698 = vmatmul.mubr.bf16.gmra.mxu0 %v1623
        %v1699 = vpop.f32.mrf.mxu0
        %v1700 = vadd.f32 0.0, %v1699
        %v1701 = vpop.f32.mrf.mxu0
        %v1702 = vpop.f32.mrf.mxu0
        %v1703 = vpop.f32.mrf.mxu0
        %1704 = vdwg.mxu0
        %v1705 = vadd.f32 %v1561, %v1660
        %v1706 = vadd.f32 %v1562, %v1663
        %v1707 = vadd.f32 %v1563, %v1668
        %v1708 = vadd.f32 %v1564, %v1671
        %v1709 = vadd.f32 %v1565, %v1676
        %v1710 = vadd.f32 %v1566, %v1679
        %v1711 = vadd.f32 %v1567, %v1684
        %v1712 = vadd.f32 %v1568, %v1687
        %v1713 = vadd.f32 %v1569, %v1692
        %v1714 = vadd.f32 %v1570, %v1695
        %v1715 = vadd.f32 %v1571, %v1700
        %v1716 = vld [vmem:[%s859] ss:$2 sm:$0xff]
        %v1717 = vld [vmem:[%s861] ss:$2 sm:$0xff]
        %v1718 = vld [vmem:[%s863] ss:$2 sm:$0xff]
        %v1719 = vld [vmem:[%s865] ss:$2 sm:$0xff]
        %v1720 = vld [vmem:[%s867] ss:$2 sm:$0xff]
        %v1721 = vld [vmem:[%s869] ss:$2 sm:$0xff]
        %v1722 = vld [vmem:[%s871] ss:$2 sm:$0xff]
        %v1723 = vld [vmem:[%s873] ss:$2 sm:$0xff]
        %v1724 = vld [vmem:[%s875] ss:$2 sm:$0xff]
        %v1725 = vld [vmem:[%s877] ss:$2 sm:$0xff]
        %s1726 = scalar_lea.vmem [#allocation2], 177
        %v1727 = vld [vmem:[%s1726] ss:$2 sm:$0x1]
        %v1728 = vpack.c.bf16 %v1717, %v1716
        %v1729 = vpack.c.bf16 %v1719, %v1718
        %v1730 = vpack.c.bf16 %v1721, %v1720
        %v1731 = vpack.c.bf16 %v1723, %v1722
        %v1732 = vpack.c.bf16 %v1725, %v1724
        %v1733 = vpack.c.bf16 %v1727, %v1727
        %s1734 = scalar_lea.vmem %s3, 96
        %v1735 = vld [vmem:[%s1734] sm:$0xf]
        %v1736 = vld [vmem:[%s1734 + $0x4] sm:$0xf]
        %v1737 = vld [vmem:[%s1734 + $0x8] sm:$0xf]
        %v1738 = vld [vmem:[%s1734 + $0xc] sm:$0xf]
        %v1743 = vunpack.c.l.b16 %v1735
        %v1744 = vunpack.c.l.b16 %v1736
        %v1745 = vunpack.c.l.b16 %v1737
        %v1746 = vunpack.c.l.b16 %v1738
        %v1747 = vpack.c.b16 %v1744, %v1743
        %v1748 = vpack.c.b16 %v1746, %v1745
        %v1752 = vsel %vm795, %v1728, 0
        %v1755 = vsel %vm795, %v1729, 0
        %v1758 = vsel %vm795, %v1730, 0
        %v1761 = vsel %vm795, %v1731, 0
        %v1764 = vsel %vm795, %v1732, 0
        %v1767 = vsel %vm795, %v1733, 0
        %1769 = vmatprep.subr.bf16.mxu0 0
        %1770 = vmatpush1.bf16.msra.mxu0 0
        %1771 = vmatprep.subr.bf16.mxu0 0
        %1772 = vmatpush1.bf16.msra.mxu0 0
        %1773 = vmatprep.subr.bf16.mxu0 0
        %1774 = vmatpush1.bf16.msra.mxu0 0
        %1775 = vmatprep.subr.bf16.mxu0 0
        %1776 = vmatpush1.bf16.msra.mxu0 0
        %1777 = vmatprep.subr.bf16.mxu0 0
        %1778 = vmatpush1.bf16.msra.mxu0 0
        %1779 = vmatprep.subr.bf16.mxu0 0
        %1780 = vmatpush1.bf16.msra.mxu0 0
        %1781 = vmatprep.subr.bf16.mxu0 0
        %1782 = vmatpush1.bf16.msra.mxu0 %v1748
        %1783 = vmatprep.subr.bf16.mxu0 0
        %1784 = vmatpush1.bf16.msra.mxu0 %v1747
        %1785 = vmatprep.subr.bf16.mxu0 0
        %1786 = vmatpush2.bf16.msra.mxu0 0
        %1787 = vmatprep.subr.bf16.mxu0 0
        %1788 = vmatpush2.bf16.msra.mxu0 0
        %1789 = vmatprep.subr.bf16.mxu0 0
        %1790 = vmatpush2.bf16.msra.mxu0 0
        %1791 = vmatprep.subr.bf16.mxu0 0
        %1792 = vmatpush2.bf16.msra.mxu0 0
        %1793 = vmatprep.subr.bf16.mxu0 0
        %1794 = vmatpush2.bf16.msra.mxu0 0
        %1795 = vmatprep.subr.bf16.mxu0 0
        %1796 = vmatpush2.bf16.msra.mxu0 0
        %1797 = vmatprep.subr.bf16.mxu0 0
        %1798 = vmatpush2.bf16.msra.mxu0 0
        %1799 = vmatprep.subr.bf16.mxu0 0
        %1800 = vmatpush2.bf16.msra.mxu0 0
        %1801 = vmatprep.mubr.bf16.mxu0 0
        %1802 = vmatmul.mubr.bf16.gmra.mxu0 %v1752
        %v1803 = vpop.f32.mrf.mxu0
        %v1804 = vadd.f32 0.0, %v1803
        %v1805 = vpop.f32.mrf.mxu0
        %v1806 = vpop.f32.mrf.mxu0
        %v1807 = vadd.f32 0.0, %v1806
        %v1808 = vpop.f32.mrf.mxu0
        %1809 = vmatprep.mubr.bf16.mxu0 0
        %1810 = vmatmul.mubr.bf16.gmra.mxu0 %v1755
        %v1811 = vpop.f32.mrf.mxu0
        %v1812 = vadd.f32 0.0, %v1811
        %v1813 = vpop.f32.mrf.mxu0
        %v1814 = vpop.f32.mrf.mxu0
        %v1815 = vadd.f32 0.0, %v1814
        %v1816 = vpop.f32.mrf.mxu0
        %1817 = vmatprep.mubr.bf16.mxu0 0
        %1818 = vmatmul.mubr.bf16.gmra.mxu0 %v1758
        %v1819 = vpop.f32.mrf.mxu0
        %v1820 = vadd.f32 0.0, %v1819
        %v1821 = vpop.f32.mrf.mxu0
        %v1822 = vpop.f32.mrf.mxu0
        %v1823 = vadd.f32 0.0, %v1822
        %v1824 = vpop.f32.mrf.mxu0
        %1825 = vmatprep.mubr.bf16.mxu0 0
        %1826 = vmatmul.mubr.bf16.gmra.mxu0 %v1761
        %v1827 = vpop.f32.mrf.mxu0
        %v1828 = vadd.f32 0.0, %v1827
        %v1829 = vpop.f32.mrf.mxu0
        %v1830 = vpop.f32.mrf.mxu0
        %v1831 = vadd.f32 0.0, %v1830
        %v1832 = vpop.f32.mrf.mxu0
        %1833 = vmatprep.mubr.bf16.mxu0 0
        %1834 = vmatmul.mubr.bf16.gmra.mxu0 %v1764
        %v1835 = vpop.f32.mrf.mxu0
        %v1836 = vadd.f32 0.0, %v1835
        %v1837 = vpop.f32.mrf.mxu0
        %v1838 = vpop.f32.mrf.mxu0
        %v1839 = vadd.f32 0.0, %v1838
        %v1840 = vpop.f32.mrf.mxu0
        %1841 = vmatprep.mubr.bf16.mxu0 0
        %1842 = vmatmul.mubr.bf16.gmra.mxu0 %v1767
        %v1843 = vpop.f32.mrf.mxu0
        %v1844 = vadd.f32 0.0, %v1843
        %v1845 = vpop.f32.mrf.mxu0
        %v1846 = vpop.f32.mrf.mxu0
        %v1847 = vpop.f32.mrf.mxu0
        %1848 = vdwg.mxu0
        %v1849 = vadd.f32 %v1705, %v1804
        %v1850 = vadd.f32 %v1706, %v1807
        %v1851 = vadd.f32 %v1707, %v1812
        %v1852 = vadd.f32 %v1708, %v1815
        %v1853 = vadd.f32 %v1709, %v1820
        %v1854 = vadd.f32 %v1710, %v1823
        %v1855 = vadd.f32 %v1711, %v1828
        %v1856 = vadd.f32 %v1712, %v1831
        %v1857 = vadd.f32 %v1713, %v1836
        %v1858 = vadd.f32 %v1714, %v1839
        %v1859 = vadd.f32 %v1715, %v1844
        %v1860 = vld [vmem:[%s1112] ss:$2 sm:$0xff]
        %v1861 = vld [vmem:[%s1114] ss:$2 sm:$0xff]
        %v1862 = vld [vmem:[%s1116] ss:$2 sm:$0xff]
        %v1863 = vld [vmem:[%s1118] ss:$2 sm:$0xff]
        %v1864 = vld [vmem:[%s1120] ss:$2 sm:$0xff]
        %v1865 = vld [vmem:[%s1122] ss:$2 sm:$0xff]
        %v1866 = vld [vmem:[%s1124] ss:$2 sm:$0xff]
        %v1867 = vld [vmem:[%s1126] ss:$2 sm:$0xff]
        %v1868 = vld [vmem:[%s1128] ss:$2 sm:$0xff]
        %v1869 = vld [vmem:[%s1130] ss:$2 sm:$0xff]
        %s1870 = scalar_lea.vmem [#allocation2], 178
        %v1871 = vld [vmem:[%s1870] ss:$2 sm:$0x1]
        %v1872 = vpack.c.bf16 %v1861, %v1860
        %v1873 = vpack.c.bf16 %v1863, %v1862
        %v1874 = vpack.c.bf16 %v1865, %v1864
        %v1875 = vpack.c.bf16 %v1867, %v1866
        %v1876 = vpack.c.bf16 %v1869, %v1868
        %v1877 = vpack.c.bf16 %v1871, %v1871
        %s1878 = scalar_lea.vmem %s3, 112
        %v1879 = vld [vmem:[%s1878] sm:$0xf]
        %v1880 = vld [vmem:[%s1878 + $0x4] sm:$0xf]
        %v1881 = vld [vmem:[%s1878 + $0x8] sm:$0xf]
        %v1882 = vld [vmem:[%s1878 + $0xc] sm:$0xf]
        %v1887 = vunpack.c.l.b16 %v1879
        %v1888 = vunpack.c.l.b16 %v1880
        %v1889 = vunpack.c.l.b16 %v1881
        %v1890 = vunpack.c.l.b16 %v1882
        %v1891 = vpack.c.b16 %v1888, %v1887
        %v1892 = vpack.c.b16 %v1890, %v1889
        %v1896 = vsel %vm795, %v1872, 0
        %v1899 = vsel %vm795, %v1873, 0
        %v1902 = vsel %vm795, %v1874, 0
        %v1905 = vsel %vm795, %v1875, 0
        %v1908 = vsel %vm795, %v1876, 0
        %v1911 = vsel %vm795, %v1877, 0
        %1913 = vmatprep.subr.bf16.mxu0 0
        %1914 = vmatpush1.bf16.msra.mxu0 0
        %1915 = vmatprep.subr.bf16.mxu0 0
        %1916 = vmatpush1.bf16.msra.mxu0 0
        %1917 = vmatprep.subr.bf16.mxu0 0
        %1918 = vmatpush1.bf16.msra.mxu0 0
        %1919 = vmatprep.subr.bf16.mxu0 0
        %1920 = vmatpush1.bf16.msra.mxu0 0
        %1921 = vmatprep.subr.bf16.mxu0 0
        %1922 = vmatpush1.bf16.msra.mxu0 0
        %1923 = vmatprep.subr.bf16.mxu0 0
        %1924 = vmatpush1.bf16.msra.mxu0 0
        %1925 = vmatprep.subr.bf16.mxu0 0
        %1926 = vmatpush1.bf16.msra.mxu0 %v1892
        %1927 = vmatprep.subr.bf16.mxu0 0
        %1928 = vmatpush1.bf16.msra.mxu0 %v1891
        %1929 = vmatprep.subr.bf16.mxu0 0
        %1930 = vmatpush2.bf16.msra.mxu0 0
        %1931 = vmatprep.subr.bf16.mxu0 0
        %1932 = vmatpush2.bf16.msra.mxu0 0
        %1933 = vmatprep.subr.bf16.mxu0 0
        %1934 = vmatpush2.bf16.msra.mxu0 0
        %1935 = vmatprep.subr.bf16.mxu0 0
        %1936 = vmatpush2.bf16.msra.mxu0 0
        %1937 = vmatprep.subr.bf16.mxu0 0
        %1938 = vmatpush2.bf16.msra.mxu0 0
        %1939 = vmatprep.subr.bf16.mxu0 0
        %1940 = vmatpush2.bf16.msra.mxu0 0
        %1941 = vmatprep.subr.bf16.mxu0 0
        %1942 = vmatpush2.bf16.msra.mxu0 0
        %1943 = vmatprep.subr.bf16.mxu0 0
        %1944 = vmatpush2.bf16.msra.mxu0 0
        %1945 = vmatprep.mubr.bf16.mxu0 0
        %1946 = vmatmul.mubr.bf16.gmra.mxu0 %v1896
        %v1947 = vpop.f32.mrf.mxu0
        %v1948 = vadd.f32 0.0, %v1947
        %v1949 = vpop.f32.mrf.mxu0
        %v1950 = vpop.f32.mrf.mxu0
        %v1951 = vadd.f32 0.0, %v1950
        %v1952 = vpop.f32.mrf.mxu0
        %1953 = vmatprep.mubr.bf16.mxu0 0
        %1954 = vmatmul.mubr.bf16.gmra.mxu0 %v1899
        %v1955 = vpop.f32.mrf.mxu0
        %v1956 = vadd.f32 0.0, %v1955
        %v1957 = vpop.f32.mrf.mxu0
        %v1958 = vpop.f32.mrf.mxu0
        %v1959 = vadd.f32 0.0, %v1958
        %v1960 = vpop.f32.mrf.mxu0
        %1961 = vmatprep.mubr.bf16.mxu0 0
        %1962 = vmatmul.mubr.bf16.gmra.mxu0 %v1902
        %v1963 = vpop.f32.mrf.mxu0
        %v1964 = vadd.f32 0.0, %v1963
        %v1965 = vpop.f32.mrf.mxu0
        %v1966 = vpop.f32.mrf.mxu0
        %v1967 = vadd.f32 0.0, %v1966
        %v1968 = vpop.f32.mrf.mxu0
        %1969 = vmatprep.mubr.bf16.mxu0 0
        %1970 = vmatmul.mubr.bf16.gmra.mxu0 %v1905
        %v1971 = vpop.f32.mrf.mxu0
        %v1972 = vadd.f32 0.0, %v1971
        %v1973 = vpop.f32.mrf.mxu0
        %v1974 = vpop.f32.mrf.mxu0
        %v1975 = vadd.f32 0.0, %v1974
        %v1976 = vpop.f32.mrf.mxu0
        %1977 = vmatprep.mubr.bf16.mxu0 0
        %1978 = vmatmul.mubr.bf16.gmra.mxu0 %v1908
        %v1979 = vpop.f32.mrf.mxu0
        %v1980 = vadd.f32 0.0, %v1979
        %v1981 = vpop.f32.mrf.mxu0
        %v1982 = vpop.f32.mrf.mxu0
        %v1983 = vadd.f32 0.0, %v1982
        %v1984 = vpop.f32.mrf.mxu0
        %1985 = vmatprep.mubr.bf16.mxu0 0
        %1986 = vmatmul.mubr.bf16.gmra.mxu0 %v1911
        %v1987 = vpop.f32.mrf.mxu0
        %v1988 = vadd.f32 0.0, %v1987
        %v1989 = vpop.f32.mrf.mxu0
        %v1990 = vpop.f32.mrf.mxu0
        %v1991 = vpop.f32.mrf.mxu0
        %1992 = vdwg.mxu0
        %v1993 = vadd.f32 %v1849, %v1948
        %v1994 = vadd.f32 %v1850, %v1951
        %v1995 = vadd.f32 %v1851, %v1956
        %v1996 = vadd.f32 %v1852, %v1959
        %v1997 = vadd.f32 %v1853, %v1964
        %v1998 = vadd.f32 %v1854, %v1967
        %v1999 = vadd.f32 %v1855, %v1972
        %v2000 = vadd.f32 %v1856, %v1975
        %v2001 = vadd.f32 %v1857, %v1980
        %v2002 = vadd.f32 %v1858, %v1983
        %v2003 = vadd.f32 %v1859, %v1988
        %s2004 = scalar_lea.vmem [#allocation2], 30
        %v2005 = vld [vmem:[%s2004] ss:$2 sm:$0xff]
        %s2006 = scalar_lea.vmem [#allocation2], 46
        %v2007 = vld [vmem:[%s2006] ss:$2 sm:$0xff]
        %s2008 = scalar_lea.vmem [#allocation2], 62
        %v2009 = vld [vmem:[%s2008] ss:$2 sm:$0xff]
        %s2010 = scalar_lea.vmem [#allocation2], 78
        %v2011 = vld [vmem:[%s2010] ss:$2 sm:$0xff]
        %s2012 = scalar_lea.vmem [#allocation2], 94
        %v2013 = vld [vmem:[%s2012] ss:$2 sm:$0xff]
        %s2014 = scalar_lea.vmem [#allocation2], 110
        %v2015 = vld [vmem:[%s2014] ss:$2 sm:$0xff]
        %s2016 = scalar_lea.vmem [#allocation2], 126
        %v2017 = vld [vmem:[%s2016] ss:$2 sm:$0xff]
        %s2018 = scalar_lea.vmem [#allocation2], 142
        %v2019 = vld [vmem:[%s2018] ss:$2 sm:$0xff]
        %s2020 = scalar_lea.vmem [#allocation2], 158
        %v2021 = vld [vmem:[%s2020] ss:$2 sm:$0xff]
        %s2022 = scalar_lea.vmem [#allocation2], 174
        %v2023 = vld [vmem:[%s2022] ss:$2 sm:$0xff]
        %s2024 = scalar_lea.vmem [#allocation2], 190
        %v2025 = vld [vmem:[%s2024] ss:$2 sm:$0x1]
        %v2026 = vpack.c.bf16 %v2007, %v2005
        %v2027 = vpack.c.bf16 %v2011, %v2009
        %v2028 = vpack.c.bf16 %v2015, %v2013
        %v2029 = vpack.c.bf16 %v2019, %v2017
        %v2030 = vpack.c.bf16 %v2023, %v2021
        %v2031 = vpack.c.bf16 %v2025, %v2025
        %s2032 = scalar_lea.vmem %s3, 128
        %v2033 = vld [vmem:[%s2032] sm:$0xf]
        %v2034 = vld [vmem:[%s2032 + $0x4] sm:$0xf]
        %v2035 = vld [vmem:[%s2032 + $0x8] sm:$0xf]
        %v2036 = vld [vmem:[%s2032 + $0xc] sm:$0xf]
        %v2041 = vunpack.c.l.b16 %v2033
        %v2042 = vunpack.c.l.b16 %v2034
        %v2043 = vunpack.c.l.b16 %v2035
        %v2044 = vunpack.c.l.b16 %v2036
        %v2045 = vpack.c.b16 %v2042, %v2041
        %v2046 = vpack.c.b16 %v2044, %v2043
        %v2050 = vsel %vm795, %v2026, 0
        %v2053 = vsel %vm795, %v2027, 0
        %v2056 = vsel %vm795, %v2028, 0
        %v2059 = vsel %vm795, %v2029, 0
        %v2062 = vsel %vm795, %v2030, 0
        %v2065 = vsel %vm795, %v2031, 0
        %2067 = vmatprep.subr.bf16.mxu0 0
        %2068 = vmatpush1.bf16.msra.mxu0 0
        %2069 = vmatprep.subr.bf16.mxu0 0
        %2070 = vmatpush1.bf16.msra.mxu0 0
        %2071 = vmatprep.subr.bf16.mxu0 0
        %2072 = vmatpush1.bf16.msra.mxu0 0
        %2073 = vmatprep.subr.bf16.mxu0 0
        %2074 = vmatpush1.bf16.msra.mxu0 0
        %2075 = vmatprep.subr.bf16.mxu0 0
        %2076 = vmatpush1.bf16.msra.mxu0 0
        %2077 = vmatprep.subr.bf16.mxu0 0
        %2078 = vmatpush1.bf16.msra.mxu0 0
        %2079 = vmatprep.subr.bf16.mxu0 0
        %2080 = vmatpush1.bf16.msra.mxu0 %v2046
        %2081 = vmatprep.subr.bf16.mxu0 0
        %2082 = vmatpush1.bf16.msra.mxu0 %v2045
        %2083 = vmatprep.subr.bf16.mxu0 0
        %2084 = vmatpush2.bf16.msra.mxu0 0
        %2085 = vmatprep.subr.bf16.mxu0 0
        %2086 = vmatpush2.bf16.msra.mxu0 0
        %2087 = vmatprep.subr.bf16.mxu0 0
        %2088 = vmatpush2.bf16.msra.mxu0 0
        %2089 = vmatprep.subr.bf16.mxu0 0
        %2090 = vmatpush2.bf16.msra.mxu0 0
        %2091 = vmatprep.subr.bf16.mxu0 0
        %2092 = vmatpush2.bf16.msra.mxu0 0
        %2093 = vmatprep.subr.bf16.mxu0 0
        %2094 = vmatpush2.bf16.msra.mxu0 0
        %2095 = vmatprep.subr.bf16.mxu0 0
        %2096 = vmatpush2.bf16.msra.mxu0 0
        %2097 = vmatprep.subr.bf16.mxu0 0
        %2098 = vmatpush2.bf16.msra.mxu0 0
        %2099 = vmatprep.mubr.bf16.mxu0 0
        %2100 = vmatmul.mubr.bf16.gmra.mxu0 %v2050
        %v2101 = vpop.f32.mrf.mxu0
        %v2102 = vadd.f32 0.0, %v2101
        %v2103 = vpop.f32.mrf.mxu0
        %v2104 = vpop.f32.mrf.mxu0
        %v2105 = vadd.f32 0.0, %v2104
        %v2106 = vpop.f32.mrf.mxu0
        %2107 = vmatprep.mubr.bf16.mxu0 0
        %2108 = vmatmul.mubr.bf16.gmra.mxu0 %v2053
        %v2109 = vpop.f32.mrf.mxu0
        %v2110 = vadd.f32 0.0, %v2109
        %v2111 = vpop.f32.mrf.mxu0
        %v2112 = vpop.f32.mrf.mxu0
        %v2113 = vadd.f32 0.0, %v2112
        %v2114 = vpop.f32.mrf.mxu0
        %2115 = vmatprep.mubr.bf16.mxu0 0
        %2116 = vmatmul.mubr.bf16.gmra.mxu0 %v2056
        %v2117 = vpop.f32.mrf.mxu0
        %v2118 = vadd.f32 0.0, %v2117
        %v2119 = vpop.f32.mrf.mxu0
        %v2120 = vpop.f32.mrf.mxu0
        %v2121 = vadd.f32 0.0, %v2120
        %v2122 = vpop.f32.mrf.mxu0
        %2123 = vmatprep.mubr.bf16.mxu0 0
        %2124 = vmatmul.mubr.bf16.gmra.mxu0 %v2059
        %v2125 = vpop.f32.mrf.mxu0
        %v2126 = vadd.f32 0.0, %v2125
        %v2127 = vpop.f32.mrf.mxu0
        %v2128 = vpop.f32.mrf.mxu0
        %v2129 = vadd.f32 0.0, %v2128
        %v2130 = vpop.f32.mrf.mxu0
        %2131 = vmatprep.mubr.bf16.mxu0 0
        %2132 = vmatmul.mubr.bf16.gmra.mxu0 %v2062
        %v2133 = vpop.f32.mrf.mxu0
        %v2134 = vadd.f32 0.0, %v2133
        %v2135 = vpop.f32.mrf.mxu0
        %v2136 = vpop.f32.mrf.mxu0
        %v2137 = vadd.f32 0.0, %v2136
        %v2138 = vpop.f32.mrf.mxu0
        %2139 = vmatprep.mubr.bf16.mxu0 0
        %2140 = vmatmul.mubr.bf16.gmra.mxu0 %v2065
        %v2141 = vpop.f32.mrf.mxu0
        %v2142 = vadd.f32 0.0, %v2141
        %v2143 = vpop.f32.mrf.mxu0
        %v2144 = vpop.f32.mrf.mxu0
        %v2145 = vpop.f32.mrf.mxu0
        %2146 = vdwg.mxu0
        %v2147 = vadd.f32 %v1993, %v2102
        %v2148 = vadd.f32 %v1994, %v2105
        %v2149 = vadd.f32 %v1995, %v2110
        %v2150 = vadd.f32 %v1996, %v2113
        %v2151 = vadd.f32 %v1997, %v2118
        %v2152 = vadd.f32 %v1998, %v2121
        %v2153 = vadd.f32 %v1999, %v2126
        %v2154 = vadd.f32 %v2000, %v2129
        %v2155 = vadd.f32 %v2001, %v2134
        %v2156 = vadd.f32 %v2002, %v2137
        %v2157 = vadd.f32 %v2003, %v2142
        %v2158 = vld [vmem:[%s1420] ss:$2 sm:$0xff]
        %v2159 = vld [vmem:[%s1422] ss:$2 sm:$0xff]
        %v2160 = vld [vmem:[%s1424] ss:$2 sm:$0xff]
        %v2161 = vld [vmem:[%s1426] ss:$2 sm:$0xff]
        %v2162 = vld [vmem:[%s1428] ss:$2 sm:$0xff]
        %v2163 = vld [vmem:[%s1430] ss:$2 sm:$0xff]
        %v2164 = vld [vmem:[%s1432] ss:$2 sm:$0xff]
        %v2165 = vld [vmem:[%s1434] ss:$2 sm:$0xff]
        %v2166 = vld [vmem:[%s1436] ss:$2 sm:$0xff]
        %v2167 = vld [vmem:[%s1438] ss:$2 sm:$0xff]
        %s2168 = scalar_lea.vmem [#allocation2], 191
        %v2169 = vld [vmem:[%s2168] ss:$2 sm:$0x1]
        %v2170 = vpack.c.bf16 %v2159, %v2158
        %v2171 = vpack.c.bf16 %v2161, %v2160
        %v2172 = vpack.c.bf16 %v2163, %v2162
        %v2173 = vpack.c.bf16 %v2165, %v2164
        %v2174 = vpack.c.bf16 %v2167, %v2166
        %v2175 = vpack.c.bf16 %v2169, %v2169
        %s2176 = scalar_lea.vmem %s3, 144
        %v2177 = vld [vmem:[%s2176] sm:$0xf]
        %v2178 = vld [vmem:[%s2176 + $0x4] sm:$0xf]
        %v2179 = vld [vmem:[%s2176 + $0x8] sm:$0xf]
        %v2180 = vld [vmem:[%s2176 + $0xc] sm:$0xf]
        %v2185 = vunpack.c.l.b16 %v2177
        %v2186 = vunpack.c.l.b16 %v2178
        %v2187 = vunpack.c.l.b16 %v2179
        %v2188 = vunpack.c.l.b16 %v2180
        %v2189 = vpack.c.b16 %v2186, %v2185
        %v2190 = vpack.c.b16 %v2188, %v2187
        %v2194 = vsel %vm795, %v2170, 0
        %v2197 = vsel %vm795, %v2171, 0
        %v2200 = vsel %vm795, %v2172, 0
        %v2203 = vsel %vm795, %v2173, 0
        %v2206 = vsel %vm795, %v2174, 0
        %v2209 = vsel %vm795, %v2175, 0
        %2211 = vmatprep.subr.bf16.mxu0 0
        %2212 = vmatpush1.bf16.msra.mxu0 0
        %2213 = vmatprep.subr.bf16.mxu0 0
        %2214 = vmatpush1.bf16.msra.mxu0 0
        %2215 = vmatprep.subr.bf16.mxu0 0
        %2216 = vmatpush1.bf16.msra.mxu0 0
        %2217 = vmatprep.subr.bf16.mxu0 0
        %2218 = vmatpush1.bf16.msra.mxu0 0
        %2219 = vmatprep.subr.bf16.mxu0 0
        %2220 = vmatpush1.bf16.msra.mxu0 0
        %2221 = vmatprep.subr.bf16.mxu0 0
        %2222 = vmatpush1.bf16.msra.mxu0 0
        %2223 = vmatprep.subr.bf16.mxu0 0
        %2224 = vmatpush1.bf16.msra.mxu0 %v2190
        %2225 = vmatprep.subr.bf16.mxu0 0
        %2226 = vmatpush1.bf16.msra.mxu0 %v2189
        %2227 = vmatprep.subr.bf16.mxu0 0
        %2228 = vmatpush2.bf16.msra.mxu0 0
        %2229 = vmatprep.subr.bf16.mxu0 0
        %2230 = vmatpush2.bf16.msra.mxu0 0
        %2231 = vmatprep.subr.bf16.mxu0 0
        %2232 = vmatpush2.bf16.msra.mxu0 0
        %2233 = vmatprep.subr.bf16.mxu0 0
        %2234 = vmatpush2.bf16.msra.mxu0 0
        %2235 = vmatprep.subr.bf16.mxu0 0
        %2236 = vmatpush2.bf16.msra.mxu0 0
        %2237 = vmatprep.subr.bf16.mxu0 0
        %2238 = vmatpush2.bf16.msra.mxu0 0
        %2239 = vmatprep.subr.bf16.mxu0 0
        %2240 = vmatpush2.bf16.msra.mxu0 0
        %2241 = vmatprep.subr.bf16.mxu0 0
        %2242 = vmatpush2.bf16.msra.mxu0 0
        %2243 = vmatprep.mubr.bf16.mxu0 0
        %2244 = vmatmul.mubr.bf16.gmra.mxu0 %v2194
        %v2245 = vpop.f32.mrf.mxu0
        %v2246 = vadd.f32 0.0, %v2245
        %v2247 = vpop.f32.mrf.mxu0
        %v2248 = vpop.f32.mrf.mxu0
        %v2249 = vadd.f32 0.0, %v2248
        %v2250 = vpop.f32.mrf.mxu0
        %2251 = vmatprep.mubr.bf16.mxu0 0
        %2252 = vmatmul.mubr.bf16.gmra.mxu0 %v2197
        %v2253 = vpop.f32.mrf.mxu0
        %v2254 = vadd.f32 0.0, %v2253
        %v2255 = vpop.f32.mrf.mxu0
        %v2256 = vpop.f32.mrf.mxu0
        %v2257 = vadd.f32 0.0, %v2256
        %v2258 = vpop.f32.mrf.mxu0
        %2259 = vmatprep.mubr.bf16.mxu0 0
        %2260 = vmatmul.mubr.bf16.gmra.mxu0 %v2200
        %v2261 = vpop.f32.mrf.mxu0
        %v2262 = vadd.f32 0.0, %v2261
        %v2263 = vpop.f32.mrf.mxu0
        %v2264 = vpop.f32.mrf.mxu0
        %v2265 = vadd.f32 0.0, %v2264
        %v2266 = vpop.f32.mrf.mxu0
        %2267 = vmatprep.mubr.bf16.mxu0 0
        %2268 = vmatmul.mubr.bf16.gmra.mxu0 %v2203
        %v2269 = vpop.f32.mrf.mxu0
        %v2270 = vadd.f32 0.0, %v2269
        %v2271 = vpop.f32.mrf.mxu0
        %v2272 = vpop.f32.mrf.mxu0
        %v2273 = vadd.f32 0.0, %v2272
        %v2274 = vpop.f32.mrf.mxu0
        %2275 = vmatprep.mubr.bf16.mxu0 0
        %2276 = vmatmul.mubr.bf16.gmra.mxu0 %v2206
        %v2277 = vpop.f32.mrf.mxu0
        %v2278 = vadd.f32 0.0, %v2277
        %v2279 = vpop.f32.mrf.mxu0
        %v2280 = vpop.f32.mrf.mxu0
        %v2281 = vadd.f32 0.0, %v2280
        %v2282 = vpop.f32.mrf.mxu0
        %2283 = vmatprep.mubr.bf16.mxu0 0
        %2284 = vmatmul.mubr.bf16.gmra.mxu0 %v2209
        %v2285 = vpop.f32.mrf.mxu0
        %v2286 = vadd.f32 0.0, %v2285
        %v2287 = vpop.f32.mrf.mxu0
        %v2288 = vpop.f32.mrf.mxu0
        %v2289 = vpop.f32.mrf.mxu0
        %2290 = vdwg.mxu0
        %v2291 = vadd.f32 %v2147, %v2246
        %v2292 = vadd.f32 %v2148, %v2249
        %v2293 = vadd.f32 %v2149, %v2254
        %v2294 = vadd.f32 %v2150, %v2257
        %v2295 = vadd.f32 %v2151, %v2262
        %v2296 = vadd.f32 %v2152, %v2265
        %v2297 = vadd.f32 %v2153, %v2270
        %v2298 = vadd.f32 %v2154, %v2273
        %v2299 = vadd.f32 %v2155, %v2278
        %v2300 = vadd.f32 %v2156, %v2281
        %v2301 = vadd.f32 %v2157, %v2286
        %v2302 = vld [vmem:[%s829] ss:$2 sm:$0xff]
        %v2303 = vld [vmem:[%s831] ss:$2 sm:$0xff]
        %v2304 = vld [vmem:[%s833] ss:$2 sm:$0xff]
        %v2305 = vld [vmem:[%s835] ss:$2 sm:$0xff]
        %v2306 = vld [vmem:[%s837] ss:$2 sm:$0xff]
        %v2307 = vld [vmem:[%s839] ss:$2 sm:$0xff]
        %v2308 = vld [vmem:[%s841] ss:$2 sm:$0xff]
        %v2309 = vld [vmem:[%s843] ss:$2 sm:$0xff]
        %v2310 = vld [vmem:[%s845] ss:$2 sm:$0xff]
        %v2311 = vld [vmem:[%s1582] ss:$2 sm:$0xff]
        %s2312 = scalar_lea.vmem [#allocation2], 192
        %v2313 = vld [vmem:[%s2312] ss:$2 sm:$0x1]
        %v2314 = vpack.c.bf16 %v2303, %v2302
        %v2315 = vpack.c.bf16 %v2305, %v2304
        %v2316 = vpack.c.bf16 %v2307, %v2306
        %v2317 = vpack.c.bf16 %v2309, %v2308
        %v2318 = vpack.c.bf16 %v2311, %v2310
        %v2319 = vpack.c.bf16 %v2313, %v2313
        %s2320 = scalar_lea.vmem %s3, 160
        %v2321 = vld [vmem:[%s2320] sm:$0xf]
        %v2322 = vld [vmem:[%s2320 + $0x4] sm:$0xf]
        %v2323 = vld [vmem:[%s2320 + $0x8] sm:$0xf]
        %v2324 = vld [vmem:[%s2320 + $0xc] sm:$0xf]
        %v2329 = vunpack.c.l.b16 %v2321
        %v2330 = vunpack.c.l.b16 %v2322
        %v2331 = vunpack.c.l.b16 %v2323
        %v2332 = vunpack.c.l.b16 %v2324
        %v2333 = vpack.c.b16 %v2330, %v2329
        %v2334 = vpack.c.b16 %v2332, %v2331
        %v2338 = vsel %vm795, %v2314, 0
        %v2341 = vsel %vm795, %v2315, 0
        %v2344 = vsel %vm795, %v2316, 0
        %v2347 = vsel %vm795, %v2317, 0
        %v2350 = vsel %vm795, %v2318, 0
        %v2353 = vsel %vm795, %v2319, 0
        %2355 = vmatprep.subr.bf16.mxu0 0
        %2356 = vmatpush1.bf16.msra.mxu0 0
        %2357 = vmatprep.subr.bf16.mxu0 0
        %2358 = vmatpush1.bf16.msra.mxu0 0
        %2359 = vmatprep.subr.bf16.mxu0 0
        %2360 = vmatpush1.bf16.msra.mxu0 0
        %2361 = vmatprep.subr.bf16.mxu0 0
        %2362 = vmatpush1.bf16.msra.mxu0 0
        %2363 = vmatprep.subr.bf16.mxu0 0
        %2364 = vmatpush1.bf16.msra.mxu0 0
        %2365 = vmatprep.subr.bf16.mxu0 0
        %2366 = vmatpush1.bf16.msra.mxu0 0
        %2367 = vmatprep.subr.bf16.mxu0 0
        %2368 = vmatpush1.bf16.msra.mxu0 %v2334
        %2369 = vmatprep.subr.bf16.mxu0 0
        %2370 = vmatpush1.bf16.msra.mxu0 %v2333
        %2371 = vmatprep.subr.bf16.mxu0 0
        %2372 = vmatpush2.bf16.msra.mxu0 0
        %2373 = vmatprep.subr.bf16.mxu0 0
        %2374 = vmatpush2.bf16.msra.mxu0 0
        %2375 = vmatprep.subr.bf16.mxu0 0
        %2376 = vmatpush2.bf16.msra.mxu0 0
        %2377 = vmatprep.subr.bf16.mxu0 0
        %2378 = vmatpush2.bf16.msra.mxu0 0
        %2379 = vmatprep.subr.bf16.mxu0 0
        %2380 = vmatpush2.bf16.msra.mxu0 0
        %2381 = vmatprep.subr.bf16.mxu0 0
        %2382 = vmatpush2.bf16.msra.mxu0 0
        %2383 = vmatprep.subr.bf16.mxu0 0
        %2384 = vmatpush2.bf16.msra.mxu0 0
        %2385 = vmatprep.subr.bf16.mxu0 0
        %2386 = vmatpush2.bf16.msra.mxu0 0
        %2387 = vmatprep.mubr.bf16.mxu0 0
        %2388 = vmatmul.mubr.bf16.gmra.mxu0 %v2338
        %v2389 = vpop.f32.mrf.mxu0
        %v2390 = vadd.f32 0.0, %v2389
        %v2391 = vpop.f32.mrf.mxu0
        %v2392 = vpop.f32.mrf.mxu0
        %v2393 = vadd.f32 0.0, %v2392
        %v2394 = vpop.f32.mrf.mxu0
        %2395 = vmatprep.mubr.bf16.mxu0 0
        %2396 = vmatmul.mubr.bf16.gmra.mxu0 %v2341
        %v2397 = vpop.f32.mrf.mxu0
        %v2398 = vadd.f32 0.0, %v2397
        %v2399 = vpop.f32.mrf.mxu0
        %v2400 = vpop.f32.mrf.mxu0
        %v2401 = vadd.f32 0.0, %v2400
        %v2402 = vpop.f32.mrf.mxu0
        %2403 = vmatprep.mubr.bf16.mxu0 0
        %2404 = vmatmul.mubr.bf16.gmra.mxu0 %v2344
        %v2405 = vpop.f32.mrf.mxu0
        %v2406 = vadd.f32 0.0, %v2405
        %v2407 = vpop.f32.mrf.mxu0
        %v2408 = vpop.f32.mrf.mxu0
        %v2409 = vadd.f32 0.0, %v2408
        %v2410 = vpop.f32.mrf.mxu0
        %2411 = vmatprep.mubr.bf16.mxu0 0
        %2412 = vmatmul.mubr.bf16.gmra.mxu0 %v2347
        %v2413 = vpop.f32.mrf.mxu0
        %v2414 = vadd.f32 0.0, %v2413
        %v2415 = vpop.f32.mrf.mxu0
        %v2416 = vpop.f32.mrf.mxu0
        %v2417 = vadd.f32 0.0, %v2416
        %v2418 = vpop.f32.mrf.mxu0
        %2419 = vmatprep.mubr.bf16.mxu0 0
        %2420 = vmatmul.mubr.bf16.gmra.mxu0 %v2350
        %v2421 = vpop.f32.mrf.mxu0
        %v2422 = vadd.f32 0.0, %v2421
        %v2423 = vpop.f32.mrf.mxu0
        %v2424 = vpop.f32.mrf.mxu0
        %v2425 = vadd.f32 0.0, %v2424
        %v2426 = vpop.f32.mrf.mxu0
        %2427 = vmatprep.mubr.bf16.mxu0 0
        %2428 = vmatmul.mubr.bf16.gmra.mxu0 %v2353
        %v2429 = vpop.f32.mrf.mxu0
        %v2430 = vadd.f32 0.0, %v2429
        %v2431 = vpop.f32.mrf.mxu0
        %v2432 = vpop.f32.mrf.mxu0
        %v2433 = vpop.f32.mrf.mxu0
        %2434 = vdwg.mxu0
        %v2435 = vadd.f32 %v2291, %v2390
        %v2436 = vadd.f32 %v2292, %v2393
        %v2437 = vadd.f32 %v2293, %v2398
        %v2438 = vadd.f32 %v2294, %v2401
        %v2439 = vadd.f32 %v2295, %v2406
        %v2440 = vadd.f32 %v2296, %v2409
        %v2441 = vadd.f32 %v2297, %v2414
        %v2442 = vadd.f32 %v2298, %v2417
        %v2443 = vadd.f32 %v2299, %v2422
        %v2444 = vadd.f32 %v2300, %v2425
        %v2445 = vadd.f32 %v2301, %v2430
        %v2446 = vld [vmem:[%s861] ss:$2 sm:$0xff]
        %v2447 = vld [vmem:[%s863] ss:$2 sm:$0xff]
        %v2448 = vld [vmem:[%s865] ss:$2 sm:$0xff]
        %v2449 = vld [vmem:[%s867] ss:$2 sm:$0xff]
        %v2450 = vld [vmem:[%s869] ss:$2 sm:$0xff]
        %v2451 = vld [vmem:[%s871] ss:$2 sm:$0xff]
        %v2452 = vld [vmem:[%s873] ss:$2 sm:$0xff]
        %v2453 = vld [vmem:[%s875] ss:$2 sm:$0xff]
        %v2454 = vld [vmem:[%s877] ss:$2 sm:$0xff]
        %v2455 = vld [vmem:[%s1726] ss:$2 sm:$0xff]
        %s2456 = scalar_lea.vmem [#allocation2], 193
        %v2457 = vld [vmem:[%s2456] ss:$2 sm:$0x1]
        %v2458 = vpack.c.bf16 %v2447, %v2446
        %v2459 = vpack.c.bf16 %v2449, %v2448
        %v2460 = vpack.c.bf16 %v2451, %v2450
        %v2461 = vpack.c.bf16 %v2453, %v2452
        %v2462 = vpack.c.bf16 %v2455, %v2454
        %v2463 = vpack.c.bf16 %v2457, %v2457
        %s2464 = scalar_lea.vmem %s3, 176
        %v2465 = vld [vmem:[%s2464] sm:$0xf]
        %v2466 = vld [vmem:[%s2464 + $0x4] sm:$0xf]
        %v2467 = vld [vmem:[%s2464 + $0x8] sm:$0xf]
        %v2468 = vld [vmem:[%s2464 + $0xc] sm:$0xf]
        %v2473 = vunpack.c.l.b16 %v2465
        %v2474 = vunpack.c.l.b16 %v2466
        %v2475 = vunpack.c.l.b16 %v2467
        %v2476 = vunpack.c.l.b16 %v2468
        %v2477 = vpack.c.b16 %v2474, %v2473
        %v2478 = vpack.c.b16 %v2476, %v2475
        %v2482 = vsel %vm795, %v2458, 0
        %v2485 = vsel %vm795, %v2459, 0
        %v2488 = vsel %vm795, %v2460, 0
        %v2491 = vsel %vm795, %v2461, 0
        %v2494 = vsel %vm795, %v2462, 0
        %v2497 = vsel %vm795, %v2463, 0
        %2499 = vmatprep.subr.bf16.mxu0 0
        %2500 = vmatpush1.bf16.msra.mxu0 0
        %2501 = vmatprep.subr.bf16.mxu0 0
        %2502 = vmatpush1.bf16.msra.mxu0 0
        %2503 = vmatprep.subr.bf16.mxu0 0
        %2504 = vmatpush1.bf16.msra.mxu0 0
        %2505 = vmatprep.subr.bf16.mxu0 0
        %2506 = vmatpush1.bf16.msra.mxu0 0
        %2507 = vmatprep.subr.bf16.mxu0 0
        %2508 = vmatpush1.bf16.msra.mxu0 0
        %2509 = vmatprep.subr.bf16.mxu0 0
        %2510 = vmatpush1.bf16.msra.mxu0 0
        %2511 = vmatprep.subr.bf16.mxu0 0
        %2512 = vmatpush1.bf16.msra.mxu0 %v2478
        %2513 = vmatprep.subr.bf16.mxu0 0
        %2514 = vmatpush1.bf16.msra.mxu0 %v2477
        %2515 = vmatprep.subr.bf16.mxu0 0
        %2516 = vmatpush2.bf16.msra.mxu0 0
        %2517 = vmatprep.subr.bf16.mxu0 0
        %2518 = vmatpush2.bf16.msra.mxu0 0
        %2519 = vmatprep.subr.bf16.mxu0 0
        %2520 = vmatpush2.bf16.msra.mxu0 0
        %2521 = vmatprep.subr.bf16.mxu0 0
        %2522 = vmatpush2.bf16.msra.mxu0 0
        %2523 = vmatprep.subr.bf16.mxu0 0
        %2524 = vmatpush2.bf16.msra.mxu0 0
        %2525 = vmatprep.subr.bf16.mxu0 0
        %2526 = vmatpush2.bf16.msra.mxu0 0
        %2527 = vmatprep.subr.bf16.mxu0 0
        %2528 = vmatpush2.bf16.msra.mxu0 0
        %2529 = vmatprep.subr.bf16.mxu0 0
        %2530 = vmatpush2.bf16.msra.mxu0 0
        %2531 = vmatprep.mubr.bf16.mxu0 0
        %2532 = vmatmul.mubr.bf16.gmra.mxu0 %v2482
        %v2533 = vpop.f32.mrf.mxu0
        %v2534 = vadd.f32 0.0, %v2533
        %v2535 = vpop.f32.mrf.mxu0
        %v2536 = vpop.f32.mrf.mxu0
        %v2537 = vadd.f32 0.0, %v2536
        %v2538 = vpop.f32.mrf.mxu0
        %2539 = vmatprep.mubr.bf16.mxu0 0
        %2540 = vmatmul.mubr.bf16.gmra.mxu0 %v2485
        %v2541 = vpop.f32.mrf.mxu0
        %v2542 = vadd.f32 0.0, %v2541
        %v2543 = vpop.f32.mrf.mxu0
        %v2544 = vpop.f32.mrf.mxu0
        %v2545 = vadd.f32 0.0, %v2544
        %v2546 = vpop.f32.mrf.mxu0
        %2547 = vmatprep.mubr.bf16.mxu0 0
        %2548 = vmatmul.mubr.bf16.gmra.mxu0 %v2488
        %v2549 = vpop.f32.mrf.mxu0
        %v2550 = vadd.f32 0.0, %v2549
        %v2551 = vpop.f32.mrf.mxu0
        %v2552 = vpop.f32.mrf.mxu0
        %v2553 = vadd.f32 0.0, %v2552
        %v2554 = vpop.f32.mrf.mxu0
        %2555 = vmatprep.mubr.bf16.mxu0 0
        %2556 = vmatmul.mubr.bf16.gmra.mxu0 %v2491
        %v2557 = vpop.f32.mrf.mxu0
        %v2558 = vadd.f32 0.0, %v2557
        %v2559 = vpop.f32.mrf.mxu0
        %v2560 = vpop.f32.mrf.mxu0
        %v2561 = vadd.f32 0.0, %v2560
        %v2562 = vpop.f32.mrf.mxu0
        %2563 = vmatprep.mubr.bf16.mxu0 0
        %2564 = vmatmul.mubr.bf16.gmra.mxu0 %v2494
        %v2565 = vpop.f32.mrf.mxu0
        %v2566 = vadd.f32 0.0, %v2565
        %v2567 = vpop.f32.mrf.mxu0
        %v2568 = vpop.f32.mrf.mxu0
        %v2569 = vadd.f32 0.0, %v2568
        %v2570 = vpop.f32.mrf.mxu0
        %2571 = vmatprep.mubr.bf16.mxu0 0
        %2572 = vmatmul.mubr.bf16.gmra.mxu0 %v2497
        %v2573 = vpop.f32.mrf.mxu0
        %v2574 = vadd.f32 0.0, %v2573
        %v2575 = vpop.f32.mrf.mxu0
        %v2576 = vpop.f32.mrf.mxu0
        %v2577 = vpop.f32.mrf.mxu0
        %2578 = vdwg.mxu0
        %v2579 = vadd.f32 %v2435, %v2534
        %v2580 = vadd.f32 %v2436, %v2537
        %v2581 = vadd.f32 %v2437, %v2542
        %v2582 = vadd.f32 %v2438, %v2545
        %v2583 = vadd.f32 %v2439, %v2550
        %v2584 = vadd.f32 %v2440, %v2553
        %v2585 = vadd.f32 %v2441, %v2558
        %v2586 = vadd.f32 %v2442, %v2561
        %v2587 = vadd.f32 %v2443, %v2566
        %v2588 = vadd.f32 %v2444, %v2569
        %v2589 = vadd.f32 %v2445, %v2574
        %s2590 = scalar_lea.vmem [#allocation2], 45
        %v2591 = vld [vmem:[%s2590] ss:$2 sm:$0xff]
        %s2592 = scalar_lea.vmem [#allocation2], 61
        %v2593 = vld [vmem:[%s2592] ss:$2 sm:$0xff]
        %s2594 = scalar_lea.vmem [#allocation2], 77
        %v2595 = vld [vmem:[%s2594] ss:$2 sm:$0xff]
        %s2596 = scalar_lea.vmem [#allocation2], 93
        %v2597 = vld [vmem:[%s2596] ss:$2 sm:$0xff]
        %s2598 = scalar_lea.vmem [#allocation2], 109
        %v2599 = vld [vmem:[%s2598] ss:$2 sm:$0xff]
        %s2600 = scalar_lea.vmem [#allocation2], 125
        %v2601 = vld [vmem:[%s2600] ss:$2 sm:$0xff]
        %s2602 = scalar_lea.vmem [#allocation2], 141
        %v2603 = vld [vmem:[%s2602] ss:$2 sm:$0xff]
        %s2604 = scalar_lea.vmem [#allocation2], 157
        %v2605 = vld [vmem:[%s2604] ss:$2 sm:$0xff]
        %s2606 = scalar_lea.vmem [#allocation2], 173
        %v2607 = vld [vmem:[%s2606] ss:$2 sm:$0xff]
        %s2608 = scalar_lea.vmem [#allocation2], 189
        %v2609 = vld [vmem:[%s2608] ss:$2 sm:$0xff]
        %s2610 = scalar_lea.vmem [#allocation2], 205
        %v2611 = vld [vmem:[%s2610] ss:$2 sm:$0x1]
        %v2612 = vpack.c.bf16 %v2593, %v2591
        %v2613 = vpack.c.bf16 %v2597, %v2595
        %v2614 = vpack.c.bf16 %v2601, %v2599
        %v2615 = vpack.c.bf16 %v2605, %v2603
        %v2616 = vpack.c.bf16 %v2609, %v2607
        %v2617 = vpack.c.bf16 %v2611, %v2611
        %s2618 = scalar_lea.vmem %s3, 192
        %v2619 = vld [vmem:[%s2618] sm:$0xf]
        %v2620 = vld [vmem:[%s2618 + $0x4] sm:$0xf]
        %v2621 = vld [vmem:[%s2618 + $0x8] sm:$0xf]
        %v2622 = vld [vmem:[%s2618 + $0xc] sm:$0xf]
        %v2627 = vunpack.c.l.b16 %v2619
        %v2628 = vunpack.c.l.b16 %v2620
        %v2629 = vunpack.c.l.b16 %v2621
        %v2630 = vunpack.c.l.b16 %v2622
        %v2631 = vpack.c.b16 %v2628, %v2627
        %v2632 = vpack.c.b16 %v2630, %v2629
        %v2636 = vsel %vm795, %v2612, 0
        %v2639 = vsel %vm795, %v2613, 0
        %v2642 = vsel %vm795, %v2614, 0
        %v2645 = vsel %vm795, %v2615, 0
        %v2648 = vsel %vm795, %v2616, 0
        %v2651 = vsel %vm795, %v2617, 0
        %2653 = vmatprep.subr.bf16.mxu0 0
        %2654 = vmatpush1.bf16.msra.mxu0 0
        %2655 = vmatprep.subr.bf16.mxu0 0
        %2656 = vmatpush1.bf16.msra.mxu0 0
        %2657 = vmatprep.subr.bf16.mxu0 0
        %2658 = vmatpush1.bf16.msra.mxu0 0
        %2659 = vmatprep.subr.bf16.mxu0 0
        %2660 = vmatpush1.bf16.msra.mxu0 0
        %2661 = vmatprep.subr.bf16.mxu0 0
        %2662 = vmatpush1.bf16.msra.mxu0 0
        %2663 = vmatprep.subr.bf16.mxu0 0
        %2664 = vmatpush1.bf16.msra.mxu0 0
        %2665 = vmatprep.subr.bf16.mxu0 0
        %2666 = vmatpush1.bf16.msra.mxu0 %v2632
        %2667 = vmatprep.subr.bf16.mxu0 0
        %2668 = vmatpush1.bf16.msra.mxu0 %v2631
        %2669 = vmatprep.subr.bf16.mxu0 0
        %2670 = vmatpush2.bf16.msra.mxu0 0
        %2671 = vmatprep.subr.bf16.mxu0 0
        %2672 = vmatpush2.bf16.msra.mxu0 0
        %2673 = vmatprep.subr.bf16.mxu0 0
        %2674 = vmatpush2.bf16.msra.mxu0 0
        %2675 = vmatprep.subr.bf16.mxu0 0
        %2676 = vmatpush2.bf16.msra.mxu0 0
        %2677 = vmatprep.subr.bf16.mxu0 0
        %2678 = vmatpush2.bf16.msra.mxu0 0
        %2679 = vmatprep.subr.bf16.mxu0 0
        %2680 = vmatpush2.bf16.msra.mxu0 0
        %2681 = vmatprep.subr.bf16.mxu0 0
        %2682 = vmatpush2.bf16.msra.mxu0 0
        %2683 = vmatprep.subr.bf16.mxu0 0
        %2684 = vmatpush2.bf16.msra.mxu0 0
        %2685 = vmatprep.mubr.bf16.mxu0 0
        %2686 = vmatmul.mubr.bf16.gmra.mxu0 %v2636
        %v2687 = vpop.f32.mrf.mxu0
        %v2688 = vadd.f32 0.0, %v2687
        %v2689 = vpop.f32.mrf.mxu0
        %v2690 = vpop.f32.mrf.mxu0
        %v2691 = vadd.f32 0.0, %v2690
        %v2692 = vpop.f32.mrf.mxu0
        %2693 = vmatprep.mubr.bf16.mxu0 0
        %2694 = vmatmul.mubr.bf16.gmra.mxu0 %v2639
        %v2695 = vpop.f32.mrf.mxu0
        %v2696 = vadd.f32 0.0, %v2695
        %v2697 = vpop.f32.mrf.mxu0
        %v2698 = vpop.f32.mrf.mxu0
        %v2699 = vadd.f32 0.0, %v2698
        %v2700 = vpop.f32.mrf.mxu0
        %2701 = vmatprep.mubr.bf16.mxu0 0
        %2702 = vmatmul.mubr.bf16.gmra.mxu0 %v2642
        %v2703 = vpop.f32.mrf.mxu0
        %v2704 = vadd.f32 0.0, %v2703
        %v2705 = vpop.f32.mrf.mxu0
        %v2706 = vpop.f32.mrf.mxu0
        %v2707 = vadd.f32 0.0, %v2706
        %v2708 = vpop.f32.mrf.mxu0
        %2709 = vmatprep.mubr.bf16.mxu0 0
        %2710 = vmatmul.mubr.bf16.gmra.mxu0 %v2645
        %v2711 = vpop.f32.mrf.mxu0
        %v2712 = vadd.f32 0.0, %v2711
        %v2713 = vpop.f32.mrf.mxu0
        %v2714 = vpop.f32.mrf.mxu0
        %v2715 = vadd.f32 0.0, %v2714
        %v2716 = vpop.f32.mrf.mxu0
        %2717 = vmatprep.mubr.bf16.mxu0 0
        %2718 = vmatmul.mubr.bf16.gmra.mxu0 %v2648
        %v2719 = vpop.f32.mrf.mxu0
        %v2720 = vadd.f32 0.0, %v2719
        %v2721 = vpop.f32.mrf.mxu0
        %v2722 = vpop.f32.mrf.mxu0
        %v2723 = vadd.f32 0.0, %v2722
        %v2724 = vpop.f32.mrf.mxu0
        %2725 = vmatprep.mubr.bf16.mxu0 0
        %2726 = vmatmul.mubr.bf16.gmra.mxu0 %v2651
        %v2727 = vpop.f32.mrf.mxu0
        %v2728 = vadd.f32 0.0, %v2727
        %v2729 = vpop.f32.mrf.mxu0
        %v2730 = vpop.f32.mrf.mxu0
        %v2731 = vpop.f32.mrf.mxu0
        %2732 = vdwg.mxu0
        %v2733 = vadd.f32 %v2579, %v2688
        %v2734 = vadd.f32 %v2580, %v2691
        %v2735 = vadd.f32 %v2581, %v2696
        %v2736 = vadd.f32 %v2582, %v2699
        %v2737 = vadd.f32 %v2583, %v2704
        %v2738 = vadd.f32 %v2584, %v2707
        %v2739 = vadd.f32 %v2585, %v2712
        %v2740 = vadd.f32 %v2586, %v2715
        %v2741 = vadd.f32 %v2587, %v2720
        %v2742 = vadd.f32 %v2588, %v2723
        %v2743 = vadd.f32 %v2589, %v2728
        %v2744 = vld [vmem:[%s2006] ss:$2 sm:$0xff]
        %v2745 = vld [vmem:[%s2008] ss:$2 sm:$0xff]
        %v2746 = vld [vmem:[%s2010] ss:$2 sm:$0xff]
        %v2747 = vld [vmem:[%s2012] ss:$2 sm:$0xff]
        %v2748 = vld [vmem:[%s2014] ss:$2 sm:$0xff]
        %v2749 = vld [vmem:[%s2016] ss:$2 sm:$0xff]
        %v2750 = vld [vmem:[%s2018] ss:$2 sm:$0xff]
        %v2751 = vld [vmem:[%s2020] ss:$2 sm:$0xff]
        %v2752 = vld [vmem:[%s2022] ss:$2 sm:$0xff]
        %v2753 = vld [vmem:[%s2024] ss:$2 sm:$0xff]
        %s2754 = scalar_lea.vmem [#allocation2], 206
        %v2755 = vld [vmem:[%s2754] ss:$2 sm:$0x1]
        %v2756 = vpack.c.bf16 %v2745, %v2744
        %v2757 = vpack.c.bf16 %v2747, %v2746
        %v2758 = vpack.c.bf16 %v2749, %v2748
        %v2759 = vpack.c.bf16 %v2751, %v2750
        %v2760 = vpack.c.bf16 %v2753, %v2752
        %v2761 = vpack.c.bf16 %v2755, %v2755
        %s2762 = scalar_lea.vmem %s3, 208
        %v2763 = vld [vmem:[%s2762] sm:$0xf]
        %v2764 = vld [vmem:[%s2762 + $0x4] sm:$0xf]
        %v2765 = vld [vmem:[%s2762 + $0x8] sm:$0xf]
        %v2766 = vld [vmem:[%s2762 + $0xc] sm:$0xf]
        %v2771 = vunpack.c.l.b16 %v2763
        %v2772 = vunpack.c.l.b16 %v2764
        %v2773 = vunpack.c.l.b16 %v2765
        %v2774 = vunpack.c.l.b16 %v2766
        %v2775 = vpack.c.b16 %v2772, %v2771
        %v2776 = vpack.c.b16 %v2774, %v2773
        %v2780 = vsel %vm795, %v2756, 0
        %v2783 = vsel %vm795, %v2757, 0
        %v2786 = vsel %vm795, %v2758, 0
        %v2789 = vsel %vm795, %v2759, 0
        %v2792 = vsel %vm795, %v2760, 0
        %v2795 = vsel %vm795, %v2761, 0
        %2797 = vmatprep.subr.bf16.mxu0 0
        %2798 = vmatpush1.bf16.msra.mxu0 0
        %2799 = vmatprep.subr.bf16.mxu0 0
        %2800 = vmatpush1.bf16.msra.mxu0 0
        %2801 = vmatprep.subr.bf16.mxu0 0
        %2802 = vmatpush1.bf16.msra.mxu0 0
        %2803 = vmatprep.subr.bf16.mxu0 0
        %2804 = vmatpush1.bf16.msra.mxu0 0
        %2805 = vmatprep.subr.bf16.mxu0 0
        %2806 = vmatpush1.bf16.msra.mxu0 0
        %2807 = vmatprep.subr.bf16.mxu0 0
        %2808 = vmatpush1.bf16.msra.mxu0 0
        %2809 = vmatprep.subr.bf16.mxu0 0
        %2810 = vmatpush1.bf16.msra.mxu0 %v2776
        %2811 = vmatprep.subr.bf16.mxu0 0
        %2812 = vmatpush1.bf16.msra.mxu0 %v2775
        %2813 = vmatprep.subr.bf16.mxu0 0
        %2814 = vmatpush2.bf16.msra.mxu0 0
        %2815 = vmatprep.subr.bf16.mxu0 0
        %2816 = vmatpush2.bf16.msra.mxu0 0
        %2817 = vmatprep.subr.bf16.mxu0 0
        %2818 = vmatpush2.bf16.msra.mxu0 0
        %2819 = vmatprep.subr.bf16.mxu0 0
        %2820 = vmatpush2.bf16.msra.mxu0 0
        %2821 = vmatprep.subr.bf16.mxu0 0
        %2822 = vmatpush2.bf16.msra.mxu0 0
        %2823 = vmatprep.subr.bf16.mxu0 0
        %2824 = vmatpush2.bf16.msra.mxu0 0
        %2825 = vmatprep.subr.bf16.mxu0 0
        %2826 = vmatpush2.bf16.msra.mxu0 0
        %2827 = vmatprep.subr.bf16.mxu0 0
        %2828 = vmatpush2.bf16.msra.mxu0 0
        %2829 = vmatprep.mubr.bf16.mxu0 0
        %2830 = vmatmul.mubr.bf16.gmra.mxu0 %v2780
        %v2831 = vpop.f32.mrf.mxu0
        %v2832 = vadd.f32 0.0, %v2831
        %v2833 = vpop.f32.mrf.mxu0
        %v2834 = vpop.f32.mrf.mxu0
        %v2835 = vadd.f32 0.0, %v2834
        %v2836 = vpop.f32.mrf.mxu0
        %2837 = vmatprep.mubr.bf16.mxu0 0
        %2838 = vmatmul.mubr.bf16.gmra.mxu0 %v2783
        %v2839 = vpop.f32.mrf.mxu0
        %v2840 = vadd.f32 0.0, %v2839
        %v2841 = vpop.f32.mrf.mxu0
        %v2842 = vpop.f32.mrf.mxu0
        %v2843 = vadd.f32 0.0, %v2842
        %v2844 = vpop.f32.mrf.mxu0
        %2845 = vmatprep.mubr.bf16.mxu0 0
        %2846 = vmatmul.mubr.bf16.gmra.mxu0 %v2786
        %v2847 = vpop.f32.mrf.mxu0
        %v2848 = vadd.f32 0.0, %v2847
        %v2849 = vpop.f32.mrf.mxu0
        %v2850 = vpop.f32.mrf.mxu0
        %v2851 = vadd.f32 0.0, %v2850
        %v2852 = vpop.f32.mrf.mxu0
        %2853 = vmatprep.mubr.bf16.mxu0 0
        %2854 = vmatmul.mubr.bf16.gmra.mxu0 %v2789
        %v2855 = vpop.f32.mrf.mxu0
        %v2856 = vadd.f32 0.0, %v2855
        %v2857 = vpop.f32.mrf.mxu0
        %v2858 = vpop.f32.mrf.mxu0
        %v2859 = vadd.f32 0.0, %v2858
        %v2860 = vpop.f32.mrf.mxu0
        %2861 = vmatprep.mubr.bf16.mxu0 0
        %2862 = vmatmul.mubr.bf16.gmra.mxu0 %v2792
        %v2863 = vpop.f32.mrf.mxu0
        %v2864 = vadd.f32 0.0, %v2863
        %v2865 = vpop.f32.mrf.mxu0
        %v2866 = vpop.f32.mrf.mxu0
        %v2867 = vadd.f32 0.0, %v2866
        %v2868 = vpop.f32.mrf.mxu0
        %2869 = vmatprep.mubr.bf16.mxu0 0
        %2870 = vmatmul.mubr.bf16.gmra.mxu0 %v2795
        %v2871 = vpop.f32.mrf.mxu0
        %v2872 = vadd.f32 0.0, %v2871
        %v2873 = vpop.f32.mrf.mxu0
        %v2874 = vpop.f32.mrf.mxu0
        %v2875 = vpop.f32.mrf.mxu0
        %2876 = vdwg.mxu0
        %v2877 = vadd.f32 %v2733, %v2832
        %v2878 = vadd.f32 %v2734, %v2835
        %v2879 = vadd.f32 %v2735, %v2840
        %v2880 = vadd.f32 %v2736, %v2843
        %v2881 = vadd.f32 %v2737, %v2848
        %v2882 = vadd.f32 %v2738, %v2851
        %v2883 = vadd.f32 %v2739, %v2856
        %v2884 = vadd.f32 %v2740, %v2859
        %v2885 = vadd.f32 %v2741, %v2864
        %v2886 = vadd.f32 %v2742, %v2867
        %v2887 = vadd.f32 %v2743, %v2872
        %v2888 = vld [vmem:[%s1422] ss:$2 sm:$0xff]
        %v2889 = vld [vmem:[%s1424] ss:$2 sm:$0xff]
        %v2890 = vld [vmem:[%s1426] ss:$2 sm:$0xff]
        %v2891 = vld [vmem:[%s1428] ss:$2 sm:$0xff]
        %v2892 = vld [vmem:[%s1430] ss:$2 sm:$0xff]
        %v2893 = vld [vmem:[%s1432] ss:$2 sm:$0xff]
        %v2894 = vld [vmem:[%s1434] ss:$2 sm:$0xff]
        %v2895 = vld [vmem:[%s1436] ss:$2 sm:$0xff]
        %v2896 = vld [vmem:[%s1438] ss:$2 sm:$0xff]
        %v2897 = vld [vmem:[%s2168] ss:$2 sm:$0xff]
        %s2898 = scalar_lea.vmem [#allocation2], 207
        %v2899 = vld [vmem:[%s2898] ss:$2 sm:$0x1]
        %v2900 = vpack.c.bf16 %v2889, %v2888
        %v2901 = vpack.c.bf16 %v2891, %v2890
        %v2902 = vpack.c.bf16 %v2893, %v2892
        %v2903 = vpack.c.bf16 %v2895, %v2894
        %v2904 = vpack.c.bf16 %v2897, %v2896
        %v2905 = vpack.c.bf16 %v2899, %v2899
        %s2906 = scalar_lea.vmem %s3, 224
        %v2907 = vld [vmem:[%s2906] sm:$0xf]
        %v2908 = vld [vmem:[%s2906 + $0x4] sm:$0xf]
        %v2909 = vld [vmem:[%s2906 + $0x8] sm:$0xf]
        %v2910 = vld [vmem:[%s2906 + $0xc] sm:$0xf]
        %v2915 = vunpack.c.l.b16 %v2907
        %v2916 = vunpack.c.l.b16 %v2908
        %v2917 = vunpack.c.l.b16 %v2909
        %v2918 = vunpack.c.l.b16 %v2910
        %v2919 = vpack.c.b16 %v2916, %v2915
        %v2920 = vpack.c.b16 %v2918, %v2917
        %v2924 = vsel %vm795, %v2900, 0
        %v2927 = vsel %vm795, %v2901, 0
        %v2930 = vsel %vm795, %v2902, 0
        %v2933 = vsel %vm795, %v2903, 0
        %v2936 = vsel %vm795, %v2904, 0
        %v2939 = vsel %vm795, %v2905, 0
        %2941 = vmatprep.subr.bf16.mxu0 0
        %2942 = vmatpush1.bf16.msra.mxu0 0
        %2943 = vmatprep.subr.bf16.mxu0 0
        %2944 = vmatpush1.bf16.msra.mxu0 0
        %2945 = vmatprep.subr.bf16.mxu0 0
        %2946 = vmatpush1.bf16.msra.mxu0 0
        %2947 = vmatprep.subr.bf16.mxu0 0
        %2948 = vmatpush1.bf16.msra.mxu0 0
        %2949 = vmatprep.subr.bf16.mxu0 0
        %2950 = vmatpush1.bf16.msra.mxu0 0
        %2951 = vmatprep.subr.bf16.mxu0 0
        %2952 = vmatpush1.bf16.msra.mxu0 0
        %2953 = vmatprep.subr.bf16.mxu0 0
        %2954 = vmatpush1.bf16.msra.mxu0 %v2920
        %2955 = vmatprep.subr.bf16.mxu0 0
        %2956 = vmatpush1.bf16.msra.mxu0 %v2919
        %2957 = vmatprep.subr.bf16.mxu0 0
        %2958 = vmatpush2.bf16.msra.mxu0 0
        %2959 = vmatprep.subr.bf16.mxu0 0
        %2960 = vmatpush2.bf16.msra.mxu0 0
        %2961 = vmatprep.subr.bf16.mxu0 0
        %2962 = vmatpush2.bf16.msra.mxu0 0
        %2963 = vmatprep.subr.bf16.mxu0 0
        %2964 = vmatpush2.bf16.msra.mxu0 0
        %2965 = vmatprep.subr.bf16.mxu0 0
        %2966 = vmatpush2.bf16.msra.mxu0 0
        %2967 = vmatprep.subr.bf16.mxu0 0
        %2968 = vmatpush2.bf16.msra.mxu0 0
        %2969 = vmatprep.subr.bf16.mxu0 0
        %2970 = vmatpush2.bf16.msra.mxu0 0
        %2971 = vmatprep.subr.bf16.mxu0 0
        %2972 = vmatpush2.bf16.msra.mxu0 0
        %2973 = vmatprep.mubr.bf16.mxu0 0
        %2974 = vmatmul.mubr.bf16.gmra.mxu0 %v2924
        %v2975 = vpop.f32.mrf.mxu0
        %v2976 = vadd.f32 0.0, %v2975
        %v2977 = vpop.f32.mrf.mxu0
        %v2978 = vpop.f32.mrf.mxu0
        %v2979 = vadd.f32 0.0, %v2978
        %v2980 = vpop.f32.mrf.mxu0
        %2981 = vmatprep.mubr.bf16.mxu0 0
        %2982 = vmatmul.mubr.bf16.gmra.mxu0 %v2927
        %v2983 = vpop.f32.mrf.mxu0
        %v2984 = vadd.f32 0.0, %v2983
        %v2985 = vpop.f32.mrf.mxu0
        %v2986 = vpop.f32.mrf.mxu0
        %v2987 = vadd.f32 0.0, %v2986
        %v2988 = vpop.f32.mrf.mxu0
        %2989 = vmatprep.mubr.bf16.mxu0 0
        %2990 = vmatmul.mubr.bf16.gmra.mxu0 %v2930
        %v2991 = vpop.f32.mrf.mxu0
        %v2992 = vadd.f32 0.0, %v2991
        %v2993 = vpop.f32.mrf.mxu0
        %v2994 = vpop.f32.mrf.mxu0
        %v2995 = vadd.f32 0.0, %v2994
        %v2996 = vpop.f32.mrf.mxu0
        %2997 = vmatprep.mubr.bf16.mxu0 0
        %2998 = vmatmul.mubr.bf16.gmra.mxu0 %v2933
        %v2999 = vpop.f32.mrf.mxu0
        %v3000 = vadd.f32 0.0, %v2999
        %v3001 = vpop.f32.mrf.mxu0
        %v3002 = vpop.f32.mrf.mxu0
        %v3003 = vadd.f32 0.0, %v3002
        %v3004 = vpop.f32.mrf.mxu0
        %3005 = vmatprep.mubr.bf16.mxu0 0
        %3006 = vmatmul.mubr.bf16.gmra.mxu0 %v2936
        %v3007 = vpop.f32.mrf.mxu0
        %v3008 = vadd.f32 0.0, %v3007
        %v3009 = vpop.f32.mrf.mxu0
        %v3010 = vpop.f32.mrf.mxu0
        %v3011 = vadd.f32 0.0, %v3010
        %v3012 = vpop.f32.mrf.mxu0
        %3013 = vmatprep.mubr.bf16.mxu0 0
        %3014 = vmatmul.mubr.bf16.gmra.mxu0 %v2939
        %v3015 = vpop.f32.mrf.mxu0
        %v3016 = vadd.f32 0.0, %v3015
        %v3017 = vpop.f32.mrf.mxu0
        %v3018 = vpop.f32.mrf.mxu0
        %v3019 = vpop.f32.mrf.mxu0
        %3020 = vdwg.mxu0
        %v3021 = vadd.f32 %v2877, %v2976
        %v3022 = vadd.f32 %v2878, %v2979
        %v3023 = vadd.f32 %v2879, %v2984
        %v3024 = vadd.f32 %v2880, %v2987
        %v3025 = vadd.f32 %v2881, %v2992
        %v3026 = vadd.f32 %v2882, %v2995
        %v3027 = vadd.f32 %v2883, %v3000
        %v3028 = vadd.f32 %v2884, %v3003
        %v3029 = vadd.f32 %v2885, %v3008
        %v3030 = vadd.f32 %v2886, %v3011
        %v3031 = vadd.f32 %v2887, %v3016
        %v3032 = vld [vmem:[%s831] ss:$2 sm:$0xff]
        %v3033 = vld [vmem:[%s833] ss:$2 sm:$0xff]
        %v3034 = vld [vmem:[%s835] ss:$2 sm:$0xff]
        %v3035 = vld [vmem:[%s837] ss:$2 sm:$0xff]
        %v3036 = vld [vmem:[%s839] ss:$2 sm:$0xff]
        %v3037 = vld [vmem:[%s841] ss:$2 sm:$0xff]
        %v3038 = vld [vmem:[%s843] ss:$2 sm:$0xff]
        %v3039 = vld [vmem:[%s845] ss:$2 sm:$0xff]
        %v3040 = vld [vmem:[%s1582] ss:$2 sm:$0xff]
        %v3041 = vld [vmem:[%s2312] ss:$2 sm:$0xff]
        %s3042 = scalar_lea.vmem [#allocation2], 208
        %v3043 = vld [vmem:[%s3042] ss:$2 sm:$0x1]
        %v3044 = vpack.c.bf16 %v3033, %v3032
        %v3045 = vpack.c.bf16 %v3035, %v3034
        %v3046 = vpack.c.bf16 %v3037, %v3036
        %v3047 = vpack.c.bf16 %v3039, %v3038
        %v3048 = vpack.c.bf16 %v3041, %v3040
        %v3049 = vpack.c.bf16 %v3043, %v3043
        %s3050 = scalar_lea.vmem %s3, 240
        %v3051 = vld [vmem:[%s3050] sm:$0xf]
        %v3052 = vld [vmem:[%s3050 + $0x4] sm:$0xf]
        %v3053 = vld [vmem:[%s3050 + $0x8] sm:$0xf]
        %v3054 = vld [vmem:[%s3050 + $0xc] sm:$0xf]
        %v3059 = vunpack.c.l.b16 %v3051
        %v3060 = vunpack.c.l.b16 %v3052
        %v3061 = vunpack.c.l.b16 %v3053
        %v3062 = vunpack.c.l.b16 %v3054
        %v3063 = vpack.c.b16 %v3060, %v3059
        %v3064 = vpack.c.b16 %v3062, %v3061
        %v3068 = vsel %vm795, %v3044, 0
        %v3071 = vsel %vm795, %v3045, 0
        %v3074 = vsel %vm795, %v3046, 0
        %v3077 = vsel %vm795, %v3047, 0
        %v3080 = vsel %vm795, %v3048, 0
        %v3083 = vsel %vm795, %v3049, 0
        %3085 = vmatprep.subr.bf16.mxu0 0
        %3086 = vmatpush1.bf16.msra.mxu0 0
        %3087 = vmatprep.subr.bf16.mxu0 0
        %3088 = vmatpush1.bf16.msra.mxu0 0
        %3089 = vmatprep.subr.bf16.mxu0 0
        %3090 = vmatpush1.bf16.msra.mxu0 0
        %3091 = vmatprep.subr.bf16.mxu0 0
        %3092 = vmatpush1.bf16.msra.mxu0 0
        %3093 = vmatprep.subr.bf16.mxu0 0
        %3094 = vmatpush1.bf16.msra.mxu0 0
        %3095 = vmatprep.subr.bf16.mxu0 0
        %3096 = vmatpush1.bf16.msra.mxu0 0
        %3097 = vmatprep.subr.bf16.mxu0 0
        %3098 = vmatpush1.bf16.msra.mxu0 %v3064
        %3099 = vmatprep.subr.bf16.mxu0 0
        %3100 = vmatpush1.bf16.msra.mxu0 %v3063
        %3101 = vmatprep.subr.bf16.mxu0 0
        %3102 = vmatpush2.bf16.msra.mxu0 0
        %3103 = vmatprep.subr.bf16.mxu0 0
        %3104 = vmatpush2.bf16.msra.mxu0 0
        %3105 = vmatprep.subr.bf16.mxu0 0
        %3106 = vmatpush2.bf16.msra.mxu0 0
        %3107 = vmatprep.subr.bf16.mxu0 0
        %3108 = vmatpush2.bf16.msra.mxu0 0
        %3109 = vmatprep.subr.bf16.mxu0 0
        %3110 = vmatpush2.bf16.msra.mxu0 0
        %3111 = vmatprep.subr.bf16.mxu0 0
        %3112 = vmatpush2.bf16.msra.mxu0 0
        %3113 = vmatprep.subr.bf16.mxu0 0
        %3114 = vmatpush2.bf16.msra.mxu0 0
        %3115 = vmatprep.subr.bf16.mxu0 0
        %3116 = vmatpush2.bf16.msra.mxu0 0
        %3117 = vmatprep.mubr.bf16.mxu0 0
        %3118 = vmatmul.mubr.bf16.gmra.mxu0 %v3068
        %v3119 = vpop.f32.mrf.mxu0
        %v3120 = vadd.f32 0.0, %v3119
        %v3121 = vpop.f32.mrf.mxu0
        %v3122 = vpop.f32.mrf.mxu0
        %v3123 = vadd.f32 0.0, %v3122
        %v3124 = vpop.f32.mrf.mxu0
        %3125 = vmatprep.mubr.bf16.mxu0 0
        %3126 = vmatmul.mubr.bf16.gmra.mxu0 %v3071
        %v3127 = vpop.f32.mrf.mxu0
        %v3128 = vadd.f32 0.0, %v3127
        %v3129 = vpop.f32.mrf.mxu0
        %v3130 = vpop.f32.mrf.mxu0
        %v3131 = vadd.f32 0.0, %v3130
        %v3132 = vpop.f32.mrf.mxu0
        %3133 = vmatprep.mubr.bf16.mxu0 0
        %3134 = vmatmul.mubr.bf16.gmra.mxu0 %v3074
        %v3135 = vpop.f32.mrf.mxu0
        %v3136 = vadd.f32 0.0, %v3135
        %v3137 = vpop.f32.mrf.mxu0
        %v3138 = vpop.f32.mrf.mxu0
        %v3139 = vadd.f32 0.0, %v3138
        %v3140 = vpop.f32.mrf.mxu0
        %3141 = vmatprep.mubr.bf16.mxu0 0
        %3142 = vmatmul.mubr.bf16.gmra.mxu0 %v3077
        %v3143 = vpop.f32.mrf.mxu0
        %v3144 = vadd.f32 0.0, %v3143
        %v3145 = vpop.f32.mrf.mxu0
        %v3146 = vpop.f32.mrf.mxu0
        %v3147 = vadd.f32 0.0, %v3146
        %v3148 = vpop.f32.mrf.mxu0
        %3149 = vmatprep.mubr.bf16.mxu0 0
        %3150 = vmatmul.mubr.bf16.gmra.mxu0 %v3080
        %v3151 = vpop.f32.mrf.mxu0
        %v3152 = vadd.f32 0.0, %v3151
        %v3153 = vpop.f32.mrf.mxu0
        %v3154 = vpop.f32.mrf.mxu0
        %v3155 = vadd.f32 0.0, %v3154
        %v3156 = vpop.f32.mrf.mxu0
        %3157 = vmatprep.mubr.bf16.mxu0 0
        %3158 = vmatmul.mubr.bf16.gmra.mxu0 %v3083
        %v3159 = vpop.f32.mrf.mxu0
        %v3160 = vadd.f32 0.0, %v3159
        %v3161 = vpop.f32.mrf.mxu0
        %v3162 = vpop.f32.mrf.mxu0
        %v3163 = vpop.f32.mrf.mxu0
        %3164 = vdwg.mxu0
        %v3165 = vadd.f32 %v3021, %v3120
        %v3166 = vadd.f32 %v3022, %v3123
        %v3167 = vadd.f32 %v3023, %v3128
        %v3168 = vadd.f32 %v3024, %v3131
        %v3169 = vadd.f32 %v3025, %v3136
        %v3170 = vadd.f32 %v3026, %v3139
        %v3171 = vadd.f32 %v3027, %v3144
        %v3172 = vadd.f32 %v3028, %v3147
        %v3173 = vadd.f32 %v3029, %v3152
        %v3174 = vadd.f32 %v3030, %v3155
        %v3175 = vadd.f32 %v3031, %v3160
        %v3176 = vld [vmem:[%s4] sm:$0x1]
        %v3178 = vlaneseq
        %v3179 = vshrl.u32 %v3178, 7
        %v3180 = vsub.s32 0, %v3179
        %v3181 = vrot.slane %v3176, %v3180
        %v3183 = vadd.f32 %v3165, %v3181
        %v3184 = vadd.f32 %v3166, %v3181
        %v3185 = vadd.f32 %v3167, %v3181
        %v3186 = vadd.f32 %v3168, %v3181
        %v3187 = vadd.f32 %v3169, %v3181
        %v3188 = vadd.f32 %v3170, %v3181
        %v3189 = vadd.f32 %v3171, %v3181
        %v3190 = vadd.f32 %v3172, %v3181
        %v3191 = vadd.f32 %v3173, %v3181
        %v3192 = vadd.f32 %v3174, %v3181
        %v3193 = vadd.f32 %v3175, %v3181
        %v3194 = vmax.f32 %v3183, 0.0
        %v3195 = vmax.f32 %v3184, 0.0
        %v3196 = vmax.f32 %v3185, 0.0
        %v3197 = vmax.f32 %v3186, 0.0
        %v3198 = vmax.f32 %v3187, 0.0
        %v3199 = vmax.f32 %v3188, 0.0
        %v3200 = vmax.f32 %v3189, 0.0
        %v3201 = vmax.f32 %v3190, 0.0
        %v3202 = vmax.f32 %v3191, 0.0
        %v3203 = vmax.f32 %v3192, 0.0
        %v3204 = vmax.f32 %v3193, 0.0
        %3205 = vst.msk [vmem:[#allocation3] sm:$0xff] %vm568, %v3194
        %3206 = vst.msk [vmem:[#allocation3 + $0x8] sm:$0xff] %vm568, %v3195
        %3207 = vst.msk [vmem:[#allocation3 + $0x10] sm:$0xff] %vm568, %v3196
        %3208 = vst.msk [vmem:[#allocation3 + $0x18] sm:$0xff] %vm568, %v3197
        %3209 = vst.msk [vmem:[#allocation3 + $0x20] sm:$0xff] %vm568, %v3198
        %3210 = vst.msk [vmem:[#allocation3 + $0x28] sm:$0xff] %vm568, %v3199
        %3211 = vst.msk [vmem:[#allocation3 + $0x30] sm:$0xff] %vm568, %v3200
        %3212 = vst.msk [vmem:[#allocation3 + $0x38] sm:$0xff] %vm568, %v3201
        %3213 = vst.msk [vmem:[#allocation3 + $0x40] sm:$0xff] %vm568, %v3202
        %3214 = vst.msk [vmem:[#allocation3 + $0x48] sm:$0xff] %vm568, %v3203
        %vm3215 = vcmask 516096
        %3216 = vst.msk [vmem:[#allocation3 + $0x50] sm:$0x1] %vm3215, %v3204
        %v3217 = vld [vmem:[#allocation3] ss:$2 sm:$0xff]
        %s3218 = scalar_lea.vmem [#allocation3], 16
        %v3219 = vld [vmem:[%s3218] ss:$2 sm:$0xff]
        %s3220 = scalar_lea.vmem [#allocation3], 32
        %v3221 = vld [vmem:[%s3220] ss:$2 sm:$0x1]
        %v3222 = vpack.c.bf16 %v3219, %v3217
        %v3223 = vpack.c.bf16 %v3221, %v3221
        %v3224 = vld [vmem:[%s5] sm:$0xf]
        %v3225 = vld [vmem:[%s5 + $0x4] sm:$0xf]
        %v3226 = vld [vmem:[%s5 + $0x8] sm:$0xf]
        %v3227 = vld [vmem:[%s5 + $0xc] sm:$0xf]
        %v3228 = vld [vmem:[%s5 + $0x10] sm:$0xf]
        %v3229 = vld [vmem:[%s5 + $0x14] sm:$0xf]
        %v3230 = vld [vmem:[%s5 + $0x18] sm:$0xf]
        %v3231 = vld [vmem:[%s5 + $0x1c] sm:$0xf]
        %s3232 = scalar_lea.vmem [#allocation3], 1
        %v3233 = vld [vmem:[%s3232] ss:$2 sm:$0xff]
        %s3234 = scalar_lea.vmem [#allocation3], 17
        %v3235 = vld [vmem:[%s3234] ss:$2 sm:$0xff]
        %s3236 = scalar_lea.vmem [#allocation3], 33
        %v3237 = vld [vmem:[%s3236] ss:$2 sm:$0x1]
        %v3238 = vpack.c.bf16 %v3235, %v3233
        %v3239 = vpack.c.bf16 %v3237, %v3237
        %s3240 = scalar_lea.vmem %s5, 32
        %v3241 = vld [vmem:[%s3240] sm:$0xf]
        %v3242 = vld [vmem:[%s3240 + $0x4] sm:$0xf]
        %v3243 = vld [vmem:[%s3240 + $0x8] sm:$0xf]
        %v3244 = vld [vmem:[%s3240 + $0xc] sm:$0xf]
        %v3245 = vld [vmem:[%s3240 + $0x10] sm:$0xf]
        %v3246 = vld [vmem:[%s3240 + $0x14] sm:$0xf]
        %v3247 = vld [vmem:[%s3240 + $0x18] sm:$0xf]
        %v3248 = vld [vmem:[%s3240 + $0x1c] sm:$0xf]
        %v3257 = vunpack.c.l.b16 %v3241
        %v3258 = vunpack.c.l.b16 %v3242
        %v3259 = vunpack.c.l.b16 %v3243
        %v3260 = vunpack.c.l.b16 %v3244
        %v3261 = vunpack.c.l.b16 %v3245
        %v3262 = vunpack.c.l.b16 %v3246
        %v3263 = vunpack.c.l.b16 %v3247
        %v3264 = vunpack.c.l.b16 %v3248
        %v3265 = vpack.c.b16 %v3258, %v3257
        %v3266 = vpack.c.b16 %v3260, %v3259
        %v3267 = vpack.c.b16 %v3262, %v3261
        %v3268 = vpack.c.b16 %v3264, %v3263
        %v3274 = vsel %vm568, %v3238, 0
        %v3277 = vsel %vm568, %v3239, 0
        %3279 = vmatprep.subr.bf16.mxu0 0
        %3280 = vmatpush1.bf16.msra.mxu0 0
        %3281 = vmatprep.subr.bf16.mxu0 0
        %3282 = vmatpush1.bf16.msra.mxu0 0
        %3283 = vmatprep.subr.bf16.mxu0 0
        %3284 = vmatpush1.bf16.msra.mxu0 0
        %3285 = vmatprep.subr.bf16.mxu0 0
        %3286 = vmatpush1.bf16.msra.mxu0 0
        %3287 = vmatprep.subr.bf16.mxu0 0
        %3288 = vmatpush1.bf16.msra.mxu0 %v3268
        %3289 = vmatprep.subr.bf16.mxu0 0
        %3290 = vmatpush1.bf16.msra.mxu0 %v3267
        %3291 = vmatprep.subr.bf16.mxu0 0
        %3292 = vmatpush1.bf16.msra.mxu0 %v3266
        %3293 = vmatprep.subr.bf16.mxu0 0
        %3294 = vmatpush1.bf16.msra.mxu0 %v3265
        %3295 = vmatprep.subr.bf16.mxu0 0
        %3296 = vmatpush2.bf16.msra.mxu0 0
        %3297 = vmatprep.subr.bf16.mxu0 0
        %3298 = vmatpush2.bf16.msra.mxu0 0
        %3299 = vmatprep.subr.bf16.mxu0 0
        %3300 = vmatpush2.bf16.msra.mxu0 0
        %3301 = vmatprep.subr.bf16.mxu0 0
        %3302 = vmatpush2.bf16.msra.mxu0 0
        %3303 = vmatprep.subr.bf16.mxu0 0
        %3304 = vmatpush2.bf16.msra.mxu0 0
        %3305 = vmatprep.subr.bf16.mxu0 0
        %3306 = vmatpush2.bf16.msra.mxu0 0
        %3307 = vmatprep.subr.bf16.mxu0 0
        %3308 = vmatpush2.bf16.msra.mxu0 0
        %3309 = vmatprep.subr.bf16.mxu0 0
        %3310 = vmatpush2.bf16.msra.mxu0 0
        %3311 = vmatprep.mubr.bf16.mxu0 0
        %3312 = vmatmul.mubr.bf16.gmra.mxu0 %v3274
        %v3313 = vpop.f32.mrf.mxu0
        %v3314 = vadd.f32 0.0, %v3313
        %v3315 = vpop.f32.mrf.mxu0
        %v3316 = vpop.f32.mrf.mxu0
        %v3317 = vadd.f32 0.0, %v3316
        %v3318 = vpop.f32.mrf.mxu0
        %3319 = vmatprep.mubr.bf16.mxu0 0
        %3320 = vmatmul.mubr.bf16.gmra.mxu0 %v3277
        %v3321 = vpop.f32.mrf.mxu0
        %v3322 = vadd.f32 0.0, %v3321
        %v3323 = vpop.f32.mrf.mxu0
        %v3324 = vpop.f32.mrf.mxu0
        %v3325 = vpop.f32.mrf.mxu0
        %3326 = vdwg.mxu0
        %v3335 = vunpack.c.l.b16 %v3224
        %v3336 = vunpack.c.l.b16 %v3225
        %v3337 = vunpack.c.l.b16 %v3226
        %v3338 = vunpack.c.l.b16 %v3227
        %v3339 = vunpack.c.l.b16 %v3228
        %v3340 = vunpack.c.l.b16 %v3229
        %v3341 = vunpack.c.l.b16 %v3230
        %v3342 = vunpack.c.l.b16 %v3231
        %v3343 = vpack.c.b16 %v3336, %v3335
        %v3344 = vpack.c.b16 %v3338, %v3337
        %v3345 = vpack.c.b16 %v3340, %v3339
        %v3346 = vpack.c.b16 %v3342, %v3341
        %v3352 = vsel %vm568, %v3222, 0
        %v3355 = vsel %vm568, %v3223, 0
        %3357 = vmatprep.subr.bf16.mxu0 0
        %3358 = vmatpush1.bf16.msra.mxu0 0
        %3359 = vmatprep.subr.bf16.mxu0 0
        %3360 = vmatpush1.bf16.msra.mxu0 0
        %3361 = vmatprep.subr.bf16.mxu0 0
        %3362 = vmatpush1.bf16.msra.mxu0 0
        %3363 = vmatprep.subr.bf16.mxu0 0
        %3364 = vmatpush1.bf16.msra.mxu0 0
        %3365 = vmatprep.subr.bf16.mxu0 0
        %3366 = vmatpush1.bf16.msra.mxu0 %v3346
        %3367 = vmatprep.subr.bf16.mxu0 0
        %3368 = vmatpush1.bf16.msra.mxu0 %v3345
        %3369 = vmatprep.subr.bf16.mxu0 0
        %3370 = vmatpush1.bf16.msra.mxu0 %v3344
        %3371 = vmatprep.subr.bf16.mxu0 0
        %3372 = vmatpush1.bf16.msra.mxu0 %v3343
        %3373 = vmatprep.subr.bf16.mxu0 0
        %3374 = vmatpush2.bf16.msra.mxu0 0
        %3375 = vmatprep.subr.bf16.mxu0 0
        %3376 = vmatpush2.bf16.msra.mxu0 0
        %3377 = vmatprep.subr.bf16.mxu0 0
        %3378 = vmatpush2.bf16.msra.mxu0 0
        %3379 = vmatprep.subr.bf16.mxu0 0
        %3380 = vmatpush2.bf16.msra.mxu0 0
        %3381 = vmatprep.subr.bf16.mxu0 0
        %3382 = vmatpush2.bf16.msra.mxu0 0
        %3383 = vmatprep.subr.bf16.mxu0 0
        %3384 = vmatpush2.bf16.msra.mxu0 0
        %3385 = vmatprep.subr.bf16.mxu0 0
        %3386 = vmatpush2.bf16.msra.mxu0 0
        %3387 = vmatprep.subr.bf16.mxu0 0
        %3388 = vmatpush2.bf16.msra.mxu0 0
        %3389 = vmatprep.mubr.bf16.mxu0 0
        %3390 = vmatmul.mubr.bf16.gmra.mxu0 %v3352
        %v3391 = vpop.f32.mrf.mxu0
        %v3392 = vadd.f32 %v3314, %v3391
        %v3393 = vpop.f32.mrf.mxu0
        %v3394 = vpop.f32.mrf.mxu0
        %v3395 = vadd.f32 %v3317, %v3394
        %v3396 = vpop.f32.mrf.mxu0
        %3397 = vmatprep.mubr.bf16.mxu0 0
        %3398 = vmatmul.mubr.bf16.gmra.mxu0 %v3355
        %v3399 = vpop.f32.mrf.mxu0
        %v3400 = vadd.f32 %v3322, %v3399
        %v3401 = vpop.f32.mrf.mxu0
        %v3402 = vpop.f32.mrf.mxu0
        %v3403 = vpop.f32.mrf.mxu0
        %3404 = vdwg.mxu0
        %s3405 = scalar_lea.vmem [#allocation3], 2
        %v3406 = vld [vmem:[%s3405] ss:$2 sm:$0xff]
        %s3407 = scalar_lea.vmem [#allocation3], 18
        %v3408 = vld [vmem:[%s3407] ss:$2 sm:$0xff]
        %s3409 = scalar_lea.vmem [#allocation3], 34
        %v3410 = vld [vmem:[%s3409] ss:$2 sm:$0x1]
        %v3411 = vpack.c.bf16 %v3408, %v3406
        %v3412 = vpack.c.bf16 %v3410, %v3410
        %s3413 = scalar_lea.vmem %s5, 64
        %v3414 = vld [vmem:[%s3413] sm:$0xf]
        %v3415 = vld [vmem:[%s3413 + $0x4] sm:$0xf]
        %v3416 = vld [vmem:[%s3413 + $0x8] sm:$0xf]
        %v3417 = vld [vmem:[%s3413 + $0xc] sm:$0xf]
        %v3418 = vld [vmem:[%s3413 + $0x10] sm:$0xf]
        %v3419 = vld [vmem:[%s3413 + $0x14] sm:$0xf]
        %v3420 = vld [vmem:[%s3413 + $0x18] sm:$0xf]
        %v3421 = vld [vmem:[%s3413 + $0x1c] sm:$0xf]
        %v3430 = vunpack.c.l.b16 %v3414
        %v3431 = vunpack.c.l.b16 %v3415
        %v3432 = vunpack.c.l.b16 %v3416
        %v3433 = vunpack.c.l.b16 %v3417
        %v3434 = vunpack.c.l.b16 %v3418
        %v3435 = vunpack.c.l.b16 %v3419
        %v3436 = vunpack.c.l.b16 %v3420
        %v3437 = vunpack.c.l.b16 %v3421
        %v3438 = vpack.c.b16 %v3431, %v3430
        %v3439 = vpack.c.b16 %v3433, %v3432
        %v3440 = vpack.c.b16 %v3435, %v3434
        %v3441 = vpack.c.b16 %v3437, %v3436
        %v3447 = vsel %vm568, %v3411, 0
        %v3450 = vsel %vm568, %v3412, 0
        %3452 = vmatprep.subr.bf16.mxu0 0
        %3453 = vmatpush1.bf16.msra.mxu0 0
        %3454 = vmatprep.subr.bf16.mxu0 0
        %3455 = vmatpush1.bf16.msra.mxu0 0
        %3456 = vmatprep.subr.bf16.mxu0 0
        %3457 = vmatpush1.bf16.msra.mxu0 0
        %3458 = vmatprep.subr.bf16.mxu0 0
        %3459 = vmatpush1.bf16.msra.mxu0 0
        %3460 = vmatprep.subr.bf16.mxu0 0
        %3461 = vmatpush1.bf16.msra.mxu0 %v3441
        %3462 = vmatprep.subr.bf16.mxu0 0
        %3463 = vmatpush1.bf16.msra.mxu0 %v3440
        %3464 = vmatprep.subr.bf16.mxu0 0
        %3465 = vmatpush1.bf16.msra.mxu0 %v3439
        %3466 = vmatprep.subr.bf16.mxu0 0
        %3467 = vmatpush1.bf16.msra.mxu0 %v3438
        %3468 = vmatprep.subr.bf16.mxu0 0
        %3469 = vmatpush2.bf16.msra.mxu0 0
        %3470 = vmatprep.subr.bf16.mxu0 0
        %3471 = vmatpush2.bf16.msra.mxu0 0
        %3472 = vmatprep.subr.bf16.mxu0 0
        %3473 = vmatpush2.bf16.msra.mxu0 0
        %3474 = vmatprep.subr.bf16.mxu0 0
        %3475 = vmatpush2.bf16.msra.mxu0 0
        %3476 = vmatprep.subr.bf16.mxu0 0
        %3477 = vmatpush2.bf16.msra.mxu0 0
        %3478 = vmatprep.subr.bf16.mxu0 0
        %3479 = vmatpush2.bf16.msra.mxu0 0
        %3480 = vmatprep.subr.bf16.mxu0 0
        %3481 = vmatpush2.bf16.msra.mxu0 0
        %3482 = vmatprep.subr.bf16.mxu0 0
        %3483 = vmatpush2.bf16.msra.mxu0 0
        %3484 = vmatprep.mubr.bf16.mxu0 0
        %3485 = vmatmul.mubr.bf16.gmra.mxu0 %v3447
        %v3486 = vpop.f32.mrf.mxu0
        %v3487 = vadd.f32 0.0, %v3486
        %v3488 = vpop.f32.mrf.mxu0
        %v3489 = vpop.f32.mrf.mxu0
        %v3490 = vadd.f32 0.0, %v3489
        %v3491 = vpop.f32.mrf.mxu0
        %3492 = vmatprep.mubr.bf16.mxu0 0
        %3493 = vmatmul.mubr.bf16.gmra.mxu0 %v3450
        %v3494 = vpop.f32.mrf.mxu0
        %v3495 = vadd.f32 0.0, %v3494
        %v3496 = vpop.f32.mrf.mxu0
        %v3497 = vpop.f32.mrf.mxu0
        %v3498 = vpop.f32.mrf.mxu0
        %3499 = vdwg.mxu0
        %v3500 = vadd.f32 %v3392, %v3487
        %v3501 = vadd.f32 %v3395, %v3490
        %v3502 = vadd.f32 %v3400, %v3495
        %s3503 = scalar_lea.vmem [#allocation3], 15
        %v3504 = vld [vmem:[%s3503] ss:$2 sm:$0xff]
        %s3505 = scalar_lea.vmem [#allocation3], 31
        %v3506 = vld [vmem:[%s3505] ss:$2 sm:$0xff]
        %s3507 = scalar_lea.vmem [#allocation3], 47
        %v3508 = vld [vmem:[%s3507] ss:$2 sm:$0x1]
        %v3509 = vpack.c.bf16 %v3506, %v3504
        %v3510 = vpack.c.bf16 %v3508, %v3508
        %s3511 = scalar_lea.vmem %s5, 96
        %v3512 = vld [vmem:[%s3511] sm:$0xf]
        %v3513 = vld [vmem:[%s3511 + $0x4] sm:$0xf]
        %v3514 = vld [vmem:[%s3511 + $0x8] sm:$0xf]
        %v3515 = vld [vmem:[%s3511 + $0xc] sm:$0xf]
        %v3516 = vld [vmem:[%s3511 + $0x10] sm:$0xf]
        %v3517 = vld [vmem:[%s3511 + $0x14] sm:$0xf]
        %v3518 = vld [vmem:[%s3511 + $0x18] sm:$0xf]
        %v3519 = vld [vmem:[%s3511 + $0x1c] sm:$0xf]
        %v3528 = vunpack.c.l.b16 %v3512
        %v3529 = vunpack.c.l.b16 %v3513
        %v3530 = vunpack.c.l.b16 %v3514
        %v3531 = vunpack.c.l.b16 %v3515
        %v3532 = vunpack.c.l.b16 %v3516
        %v3533 = vunpack.c.l.b16 %v3517
        %v3534 = vunpack.c.l.b16 %v3518
        %v3535 = vunpack.c.l.b16 %v3519
        %v3536 = vpack.c.b16 %v3529, %v3528
        %v3537 = vpack.c.b16 %v3531, %v3530
        %v3538 = vpack.c.b16 %v3533, %v3532
        %v3539 = vpack.c.b16 %v3535, %v3534
        %v3545 = vsel %vm568, %v3509, 0
        %v3548 = vsel %vm568, %v3510, 0
        %3550 = vmatprep.subr.bf16.mxu0 0
        %3551 = vmatpush1.bf16.msra.mxu0 0
        %3552 = vmatprep.subr.bf16.mxu0 0
        %3553 = vmatpush1.bf16.msra.mxu0 0
        %3554 = vmatprep.subr.bf16.mxu0 0
        %3555 = vmatpush1.bf16.msra.mxu0 0
        %3556 = vmatprep.subr.bf16.mxu0 0
        %3557 = vmatpush1.bf16.msra.mxu0 0
        %3558 = vmatprep.subr.bf16.mxu0 0
        %3559 = vmatpush1.bf16.msra.mxu0 %v3539
        %3560 = vmatprep.subr.bf16.mxu0 0
        %3561 = vmatpush1.bf16.msra.mxu0 %v3538
        %3562 = vmatprep.subr.bf16.mxu0 0
        %3563 = vmatpush1.bf16.msra.mxu0 %v3537
        %3564 = vmatprep.subr.bf16.mxu0 0
        %3565 = vmatpush1.bf16.msra.mxu0 %v3536
        %3566 = vmatprep.subr.bf16.mxu0 0
        %3567 = vmatpush2.bf16.msra.mxu0 0
        %3568 = vmatprep.subr.bf16.mxu0 0
        %3569 = vmatpush2.bf16.msra.mxu0 0
        %3570 = vmatprep.subr.bf16.mxu0 0
        %3571 = vmatpush2.bf16.msra.mxu0 0
        %3572 = vmatprep.subr.bf16.mxu0 0
        %3573 = vmatpush2.bf16.msra.mxu0 0
        %3574 = vmatprep.subr.bf16.mxu0 0
        %3575 = vmatpush2.bf16.msra.mxu0 0
        %3576 = vmatprep.subr.bf16.mxu0 0
        %3577 = vmatpush2.bf16.msra.mxu0 0
        %3578 = vmatprep.subr.bf16.mxu0 0
        %3579 = vmatpush2.bf16.msra.mxu0 0
        %3580 = vmatprep.subr.bf16.mxu0 0
        %3581 = vmatpush2.bf16.msra.mxu0 0
        %3582 = vmatprep.mubr.bf16.mxu0 0
        %3583 = vmatmul.mubr.bf16.gmra.mxu0 %v3545
        %v3584 = vpop.f32.mrf.mxu0
        %v3585 = vadd.f32 0.0, %v3584
        %v3586 = vpop.f32.mrf.mxu0
        %v3587 = vpop.f32.mrf.mxu0
        %v3588 = vadd.f32 0.0, %v3587
        %v3589 = vpop.f32.mrf.mxu0
        %3590 = vmatprep.mubr.bf16.mxu0 0
        %3591 = vmatmul.mubr.bf16.gmra.mxu0 %v3548
        %v3592 = vpop.f32.mrf.mxu0
        %v3593 = vadd.f32 0.0, %v3592
        %v3594 = vpop.f32.mrf.mxu0
        %v3595 = vpop.f32.mrf.mxu0
        %v3596 = vpop.f32.mrf.mxu0
        %3597 = vdwg.mxu0
        %v3598 = vadd.f32 %v3500, %v3585
        %v3599 = vadd.f32 %v3501, %v3588
        %v3600 = vadd.f32 %v3502, %v3593
        %v3601 = vld [vmem:[%s3218] ss:$2 sm:$0xff]
        %v3602 = vld [vmem:[%s3220] ss:$2 sm:$0xff]
        %s3603 = scalar_lea.vmem [#allocation3], 48
        %v3604 = vld [vmem:[%s3603] ss:$2 sm:$0x1]
        %v3605 = vpack.c.bf16 %v3602, %v3601
        %v3606 = vpack.c.bf16 %v3604, %v3604
        %s3607 = scalar_lea.vmem %s5, 128
        %v3608 = vld [vmem:[%s3607] sm:$0xf]
        %v3609 = vld [vmem:[%s3607 + $0x4] sm:$0xf]
        %v3610 = vld [vmem:[%s3607 + $0x8] sm:$0xf]
        %v3611 = vld [vmem:[%s3607 + $0xc] sm:$0xf]
        %v3612 = vld [vmem:[%s3607 + $0x10] sm:$0xf]
        %v3613 = vld [vmem:[%s3607 + $0x14] sm:$0xf]
        %v3614 = vld [vmem:[%s3607 + $0x18] sm:$0xf]
        %v3615 = vld [vmem:[%s3607 + $0x1c] sm:$0xf]
        %v3624 = vunpack.c.l.b16 %v3608
        %v3625 = vunpack.c.l.b16 %v3609
        %v3626 = vunpack.c.l.b16 %v3610
        %v3627 = vunpack.c.l.b16 %v3611
        %v3628 = vunpack.c.l.b16 %v3612
        %v3629 = vunpack.c.l.b16 %v3613
        %v3630 = vunpack.c.l.b16 %v3614
        %v3631 = vunpack.c.l.b16 %v3615
        %v3632 = vpack.c.b16 %v3625, %v3624
        %v3633 = vpack.c.b16 %v3627, %v3626
        %v3634 = vpack.c.b16 %v3629, %v3628
        %v3635 = vpack.c.b16 %v3631, %v3630
        %v3641 = vsel %vm568, %v3605, 0
        %v3644 = vsel %vm568, %v3606, 0
        %3646 = vmatprep.subr.bf16.mxu0 0
        %3647 = vmatpush1.bf16.msra.mxu0 0
        %3648 = vmatprep.subr.bf16.mxu0 0
        %3649 = vmatpush1.bf16.msra.mxu0 0
        %3650 = vmatprep.subr.bf16.mxu0 0
        %3651 = vmatpush1.bf16.msra.mxu0 0
        %3652 = vmatprep.subr.bf16.mxu0 0
        %3653 = vmatpush1.bf16.msra.mxu0 0
        %3654 = vmatprep.subr.bf16.mxu0 0
        %3655 = vmatpush1.bf16.msra.mxu0 %v3635
        %3656 = vmatprep.subr.bf16.mxu0 0
        %3657 = vmatpush1.bf16.msra.mxu0 %v3634
        %3658 = vmatprep.subr.bf16.mxu0 0
        %3659 = vmatpush1.bf16.msra.mxu0 %v3633
        %3660 = vmatprep.subr.bf16.mxu0 0
        %3661 = vmatpush1.bf16.msra.mxu0 %v3632
        %3662 = vmatprep.subr.bf16.mxu0 0
        %3663 = vmatpush2.bf16.msra.mxu0 0
        %3664 = vmatprep.subr.bf16.mxu0 0
        %3665 = vmatpush2.bf16.msra.mxu0 0
        %3666 = vmatprep.subr.bf16.mxu0 0
        %3667 = vmatpush2.bf16.msra.mxu0 0
        %3668 = vmatprep.subr.bf16.mxu0 0
        %3669 = vmatpush2.bf16.msra.mxu0 0
        %3670 = vmatprep.subr.bf16.mxu0 0
        %3671 = vmatpush2.bf16.msra.mxu0 0
        %3672 = vmatprep.subr.bf16.mxu0 0
        %3673 = vmatpush2.bf16.msra.mxu0 0
        %3674 = vmatprep.subr.bf16.mxu0 0
        %3675 = vmatpush2.bf16.msra.mxu0 0
        %3676 = vmatprep.subr.bf16.mxu0 0
        %3677 = vmatpush2.bf16.msra.mxu0 0
        %3678 = vmatprep.mubr.bf16.mxu0 0
        %3679 = vmatmul.mubr.bf16.gmra.mxu0 %v3641
        %v3680 = vpop.f32.mrf.mxu0
        %v3681 = vadd.f32 0.0, %v3680
        %v3682 = vpop.f32.mrf.mxu0
        %v3683 = vpop.f32.mrf.mxu0
        %v3684 = vadd.f32 0.0, %v3683
        %v3685 = vpop.f32.mrf.mxu0
        %3686 = vmatprep.mubr.bf16.mxu0 0
        %3687 = vmatmul.mubr.bf16.gmra.mxu0 %v3644
        %v3688 = vpop.f32.mrf.mxu0
        %v3689 = vadd.f32 0.0, %v3688
        %v3690 = vpop.f32.mrf.mxu0
        %v3691 = vpop.f32.mrf.mxu0
        %v3692 = vpop.f32.mrf.mxu0
        %3693 = vdwg.mxu0
        %v3694 = vadd.f32 %v3598, %v3681
        %v3695 = vadd.f32 %v3599, %v3684
        %v3696 = vadd.f32 %v3600, %v3689
        %v3697 = vld [vmem:[%s3234] ss:$2 sm:$0xff]
        %v3698 = vld [vmem:[%s3236] ss:$2 sm:$0xff]
        %s3699 = scalar_lea.vmem [#allocation3], 49
        %v3700 = vld [vmem:[%s3699] ss:$2 sm:$0x1]
        %v3701 = vpack.c.bf16 %v3698, %v3697
        %v3702 = vpack.c.bf16 %v3700, %v3700
        %s3703 = scalar_lea.vmem %s5, 160
        %v3704 = vld [vmem:[%s3703] sm:$0xf]
        %v3705 = vld [vmem:[%s3703 + $0x4] sm:$0xf]
        %v3706 = vld [vmem:[%s3703 + $0x8] sm:$0xf]
        %v3707 = vld [vmem:[%s3703 + $0xc] sm:$0xf]
        %v3708 = vld [vmem:[%s3703 + $0x10] sm:$0xf]
        %v3709 = vld [vmem:[%s3703 + $0x14] sm:$0xf]
        %v3710 = vld [vmem:[%s3703 + $0x18] sm:$0xf]
        %v3711 = vld [vmem:[%s3703 + $0x1c] sm:$0xf]
        %v3720 = vunpack.c.l.b16 %v3704
        %v3721 = vunpack.c.l.b16 %v3705
        %v3722 = vunpack.c.l.b16 %v3706
        %v3723 = vunpack.c.l.b16 %v3707
        %v3724 = vunpack.c.l.b16 %v3708
        %v3725 = vunpack.c.l.b16 %v3709
        %v3726 = vunpack.c.l.b16 %v3710
        %v3727 = vunpack.c.l.b16 %v3711
        %v3728 = vpack.c.b16 %v3721, %v3720
        %v3729 = vpack.c.b16 %v3723, %v3722
        %v3730 = vpack.c.b16 %v3725, %v3724
        %v3731 = vpack.c.b16 %v3727, %v3726
        %v3737 = vsel %vm568, %v3701, 0
        %v3740 = vsel %vm568, %v3702, 0
        %3742 = vmatprep.subr.bf16.mxu0 0
        %3743 = vmatpush1.bf16.msra.mxu0 0
        %3744 = vmatprep.subr.bf16.mxu0 0
        %3745 = vmatpush1.bf16.msra.mxu0 0
        %3746 = vmatprep.subr.bf16.mxu0 0
        %3747 = vmatpush1.bf16.msra.mxu0 0
        %3748 = vmatprep.subr.bf16.mxu0 0
        %3749 = vmatpush1.bf16.msra.mxu0 0
        %3750 = vmatprep.subr.bf16.mxu0 0
        %3751 = vmatpush1.bf16.msra.mxu0 %v3731
        %3752 = vmatprep.subr.bf16.mxu0 0
        %3753 = vmatpush1.bf16.msra.mxu0 %v3730
        %3754 = vmatprep.subr.bf16.mxu0 0
        %3755 = vmatpush1.bf16.msra.mxu0 %v3729
        %3756 = vmatprep.subr.bf16.mxu0 0
        %3757 = vmatpush1.bf16.msra.mxu0 %v3728
        %3758 = vmatprep.subr.bf16.mxu0 0
        %3759 = vmatpush2.bf16.msra.mxu0 0
        %3760 = vmatprep.subr.bf16.mxu0 0
        %3761 = vmatpush2.bf16.msra.mxu0 0
        %3762 = vmatprep.subr.bf16.mxu0 0
        %3763 = vmatpush2.bf16.msra.mxu0 0
        %3764 = vmatprep.subr.bf16.mxu0 0
        %3765 = vmatpush2.bf16.msra.mxu0 0
        %3766 = vmatprep.subr.bf16.mxu0 0
        %3767 = vmatpush2.bf16.msra.mxu0 0
        %3768 = vmatprep.subr.bf16.mxu0 0
        %3769 = vmatpush2.bf16.msra.mxu0 0
        %3770 = vmatprep.subr.bf16.mxu0 0
        %3771 = vmatpush2.bf16.msra.mxu0 0
        %3772 = vmatprep.subr.bf16.mxu0 0
        %3773 = vmatpush2.bf16.msra.mxu0 0
        %3774 = vmatprep.mubr.bf16.mxu0 0
        %3775 = vmatmul.mubr.bf16.gmra.mxu0 %v3737
        %v3776 = vpop.f32.mrf.mxu0
        %v3777 = vadd.f32 0.0, %v3776
        %v3778 = vpop.f32.mrf.mxu0
        %v3779 = vpop.f32.mrf.mxu0
        %v3780 = vadd.f32 0.0, %v3779
        %v3781 = vpop.f32.mrf.mxu0
        %3782 = vmatprep.mubr.bf16.mxu0 0
        %3783 = vmatmul.mubr.bf16.gmra.mxu0 %v3740
        %v3784 = vpop.f32.mrf.mxu0
        %v3785 = vadd.f32 0.0, %v3784
        %v3786 = vpop.f32.mrf.mxu0
        %v3787 = vpop.f32.mrf.mxu0
        %v3788 = vpop.f32.mrf.mxu0
        %3789 = vdwg.mxu0
        %v3790 = vadd.f32 %v3694, %v3777
        %v3791 = vadd.f32 %v3695, %v3780
        %v3792 = vadd.f32 %v3696, %v3785
        %s3793 = scalar_lea.vmem [#allocation3], 30
        %v3794 = vld [vmem:[%s3793] ss:$2 sm:$0xff]
        %s3795 = scalar_lea.vmem [#allocation3], 46
        %v3796 = vld [vmem:[%s3795] ss:$2 sm:$0xff]
        %s3797 = scalar_lea.vmem [#allocation3], 62
        %v3798 = vld [vmem:[%s3797] ss:$2 sm:$0x1]
        %v3799 = vpack.c.bf16 %v3796, %v3794
        %v3800 = vpack.c.bf16 %v3798, %v3798
        %s3801 = scalar_lea.vmem %s5, 192
        %v3802 = vld [vmem:[%s3801] sm:$0xf]
        %v3803 = vld [vmem:[%s3801 + $0x4] sm:$0xf]
        %v3804 = vld [vmem:[%s3801 + $0x8] sm:$0xf]
        %v3805 = vld [vmem:[%s3801 + $0xc] sm:$0xf]
        %v3806 = vld [vmem:[%s3801 + $0x10] sm:$0xf]
        %v3807 = vld [vmem:[%s3801 + $0x14] sm:$0xf]
        %v3808 = vld [vmem:[%s3801 + $0x18] sm:$0xf]
        %v3809 = vld [vmem:[%s3801 + $0x1c] sm:$0xf]
        %v3818 = vunpack.c.l.b16 %v3802
        %v3819 = vunpack.c.l.b16 %v3803
        %v3820 = vunpack.c.l.b16 %v3804
        %v3821 = vunpack.c.l.b16 %v3805
        %v3822 = vunpack.c.l.b16 %v3806
        %v3823 = vunpack.c.l.b16 %v3807
        %v3824 = vunpack.c.l.b16 %v3808
        %v3825 = vunpack.c.l.b16 %v3809
        %v3826 = vpack.c.b16 %v3819, %v3818
        %v3827 = vpack.c.b16 %v3821, %v3820
        %v3828 = vpack.c.b16 %v3823, %v3822
        %v3829 = vpack.c.b16 %v3825, %v3824
        %v3835 = vsel %vm568, %v3799, 0
        %v3838 = vsel %vm568, %v3800, 0
        %3840 = vmatprep.subr.bf16.mxu0 0
        %3841 = vmatpush1.bf16.msra.mxu0 0
        %3842 = vmatprep.subr.bf16.mxu0 0
        %3843 = vmatpush1.bf16.msra.mxu0 0
        %3844 = vmatprep.subr.bf16.mxu0 0
        %3845 = vmatpush1.bf16.msra.mxu0 0
        %3846 = vmatprep.subr.bf16.mxu0 0
        %3847 = vmatpush1.bf16.msra.mxu0 0
        %3848 = vmatprep.subr.bf16.mxu0 0
        %3849 = vmatpush1.bf16.msra.mxu0 %v3829
        %3850 = vmatprep.subr.bf16.mxu0 0
        %3851 = vmatpush1.bf16.msra.mxu0 %v3828
        %3852 = vmatprep.subr.bf16.mxu0 0
        %3853 = vmatpush1.bf16.msra.mxu0 %v3827
        %3854 = vmatprep.subr.bf16.mxu0 0
        %3855 = vmatpush1.bf16.msra.mxu0 %v3826
        %3856 = vmatprep.subr.bf16.mxu0 0
        %3857 = vmatpush2.bf16.msra.mxu0 0
        %3858 = vmatprep.subr.bf16.mxu0 0
        %3859 = vmatpush2.bf16.msra.mxu0 0
        %3860 = vmatprep.subr.bf16.mxu0 0
        %3861 = vmatpush2.bf16.msra.mxu0 0
        %3862 = vmatprep.subr.bf16.mxu0 0
        %3863 = vmatpush2.bf16.msra.mxu0 0
        %3864 = vmatprep.subr.bf16.mxu0 0
        %3865 = vmatpush2.bf16.msra.mxu0 0
        %3866 = vmatprep.subr.bf16.mxu0 0
        %3867 = vmatpush2.bf16.msra.mxu0 0
        %3868 = vmatprep.subr.bf16.mxu0 0
        %3869 = vmatpush2.bf16.msra.mxu0 0
        %3870 = vmatprep.subr.bf16.mxu0 0
        %3871 = vmatpush2.bf16.msra.mxu0 0
        %3872 = vmatprep.mubr.bf16.mxu0 0
        %3873 = vmatmul.mubr.bf16.gmra.mxu0 %v3835
        %v3874 = vpop.f32.mrf.mxu0
        %v3875 = vadd.f32 0.0, %v3874
        %v3876 = vpop.f32.mrf.mxu0
        %v3877 = vpop.f32.mrf.mxu0
        %v3878 = vadd.f32 0.0, %v3877
        %v3879 = vpop.f32.mrf.mxu0
        %3880 = vmatprep.mubr.bf16.mxu0 0
        %3881 = vmatmul.mubr.bf16.gmra.mxu0 %v3838
        %v3882 = vpop.f32.mrf.mxu0
        %v3883 = vadd.f32 0.0, %v3882
        %v3884 = vpop.f32.mrf.mxu0
        %v3885 = vpop.f32.mrf.mxu0
        %v3886 = vpop.f32.mrf.mxu0
        %3887 = vdwg.mxu0
        %v3888 = vadd.f32 %v3790, %v3875
        %v3889 = vadd.f32 %v3791, %v3878
        %v3890 = vadd.f32 %v3792, %v3883
        %v3891 = vld [vmem:[%s3505] ss:$2 sm:$0xff]
        %v3892 = vld [vmem:[%s3507] ss:$2 sm:$0xff]
        %s3893 = scalar_lea.vmem [#allocation3], 63
        %v3894 = vld [vmem:[%s3893] ss:$2 sm:$0x1]
        %v3895 = vpack.c.bf16 %v3892, %v3891
        %v3896 = vpack.c.bf16 %v3894, %v3894
        %s3897 = scalar_lea.vmem %s5, 224
        %v3898 = vld [vmem:[%s3897] sm:$0xf]
        %v3899 = vld [vmem:[%s3897 + $0x4] sm:$0xf]
        %v3900 = vld [vmem:[%s3897 + $0x8] sm:$0xf]
        %v3901 = vld [vmem:[%s3897 + $0xc] sm:$0xf]
        %v3902 = vld [vmem:[%s3897 + $0x10] sm:$0xf]
        %v3903 = vld [vmem:[%s3897 + $0x14] sm:$0xf]
        %v3904 = vld [vmem:[%s3897 + $0x18] sm:$0xf]
        %v3905 = vld [vmem:[%s3897 + $0x1c] sm:$0xf]
        %v3914 = vunpack.c.l.b16 %v3898
        %v3915 = vunpack.c.l.b16 %v3899
        %v3916 = vunpack.c.l.b16 %v3900
        %v3917 = vunpack.c.l.b16 %v3901
        %v3918 = vunpack.c.l.b16 %v3902
        %v3919 = vunpack.c.l.b16 %v3903
        %v3920 = vunpack.c.l.b16 %v3904
        %v3921 = vunpack.c.l.b16 %v3905
        %v3922 = vpack.c.b16 %v3915, %v3914
        %v3923 = vpack.c.b16 %v3917, %v3916
        %v3924 = vpack.c.b16 %v3919, %v3918
        %v3925 = vpack.c.b16 %v3921, %v3920
        %v3931 = vsel %vm568, %v3895, 0
        %v3934 = vsel %vm568, %v3896, 0
        %3936 = vmatprep.subr.bf16.mxu0 0
        %3937 = vmatpush1.bf16.msra.mxu0 0
        %3938 = vmatprep.subr.bf16.mxu0 0
        %3939 = vmatpush1.bf16.msra.mxu0 0
        %3940 = vmatprep.subr.bf16.mxu0 0
        %3941 = vmatpush1.bf16.msra.mxu0 0
        %3942 = vmatprep.subr.bf16.mxu0 0
        %3943 = vmatpush1.bf16.msra.mxu0 0
        %3944 = vmatprep.subr.bf16.mxu0 0
        %3945 = vmatpush1.bf16.msra.mxu0 %v3925
        %3946 = vmatprep.subr.bf16.mxu0 0
        %3947 = vmatpush1.bf16.msra.mxu0 %v3924
        %3948 = vmatprep.subr.bf16.mxu0 0
        %3949 = vmatpush1.bf16.msra.mxu0 %v3923
        %3950 = vmatprep.subr.bf16.mxu0 0
        %3951 = vmatpush1.bf16.msra.mxu0 %v3922
        %3952 = vmatprep.subr.bf16.mxu0 0
        %3953 = vmatpush2.bf16.msra.mxu0 0
        %3954 = vmatprep.subr.bf16.mxu0 0
        %3955 = vmatpush2.bf16.msra.mxu0 0
        %3956 = vmatprep.subr.bf16.mxu0 0
        %3957 = vmatpush2.bf16.msra.mxu0 0
        %3958 = vmatprep.subr.bf16.mxu0 0
        %3959 = vmatpush2.bf16.msra.mxu0 0
        %3960 = vmatprep.subr.bf16.mxu0 0
        %3961 = vmatpush2.bf16.msra.mxu0 0
        %3962 = vmatprep.subr.bf16.mxu0 0
        %3963 = vmatpush2.bf16.msra.mxu0 0
        %3964 = vmatprep.subr.bf16.mxu0 0
        %3965 = vmatpush2.bf16.msra.mxu0 0
        %3966 = vmatprep.subr.bf16.mxu0 0
        %3967 = vmatpush2.bf16.msra.mxu0 0
        %3968 = vmatprep.mubr.bf16.mxu0 0
        %3969 = vmatmul.mubr.bf16.gmra.mxu0 %v3931
        %v3970 = vpop.f32.mrf.mxu0
        %v3971 = vadd.f32 0.0, %v3970
        %v3972 = vpop.f32.mrf.mxu0
        %v3973 = vpop.f32.mrf.mxu0
        %v3974 = vadd.f32 0.0, %v3973
        %v3975 = vpop.f32.mrf.mxu0
        %3976 = vmatprep.mubr.bf16.mxu0 0
        %3977 = vmatmul.mubr.bf16.gmra.mxu0 %v3934
        %v3978 = vpop.f32.mrf.mxu0
        %v3979 = vadd.f32 0.0, %v3978
        %v3980 = vpop.f32.mrf.mxu0
        %v3981 = vpop.f32.mrf.mxu0
        %v3982 = vpop.f32.mrf.mxu0
        %3983 = vdwg.mxu0
        %v3984 = vadd.f32 %v3888, %v3971
        %v3985 = vadd.f32 %v3889, %v3974
        %v3986 = vadd.f32 %v3890, %v3979
        %v3987 = vld [vmem:[%s3220] ss:$2 sm:$0xff]
        %v3988 = vld [vmem:[%s3603] ss:$2 sm:$0xff]
        %s3989 = scalar_lea.vmem [#allocation3], 64
        %v3990 = vld [vmem:[%s3989] ss:$2 sm:$0x1]
        %v3991 = vpack.c.bf16 %v3988, %v3987
        %v3992 = vpack.c.bf16 %v3990, %v3990
        %s3993 = scalar_lea.vmem %s5, 256
        %v3994 = vld [vmem:[%s3993] sm:$0xf]
        %v3995 = vld [vmem:[%s3993 + $0x4] sm:$0xf]
        %v3996 = vld [vmem:[%s3993 + $0x8] sm:$0xf]
        %v3997 = vld [vmem:[%s3993 + $0xc] sm:$0xf]
        %v3998 = vld [vmem:[%s3993 + $0x10] sm:$0xf]
        %v3999 = vld [vmem:[%s3993 + $0x14] sm:$0xf]
        %v4000 = vld [vmem:[%s3993 + $0x18] sm:$0xf]
        %v4001 = vld [vmem:[%s3993 + $0x1c] sm:$0xf]
        %v4010 = vunpack.c.l.b16 %v3994
        %v4011 = vunpack.c.l.b16 %v3995
        %v4012 = vunpack.c.l.b16 %v3996
        %v4013 = vunpack.c.l.b16 %v3997
        %v4014 = vunpack.c.l.b16 %v3998
        %v4015 = vunpack.c.l.b16 %v3999
        %v4016 = vunpack.c.l.b16 %v4000
        %v4017 = vunpack.c.l.b16 %v4001
        %v4018 = vpack.c.b16 %v4011, %v4010
        %v4019 = vpack.c.b16 %v4013, %v4012
        %v4020 = vpack.c.b16 %v4015, %v4014
        %v4021 = vpack.c.b16 %v4017, %v4016
        %v4027 = vsel %vm568, %v3991, 0
        %v4030 = vsel %vm568, %v3992, 0
        %4032 = vmatprep.subr.bf16.mxu0 0
        %4033 = vmatpush1.bf16.msra.mxu0 0
        %4034 = vmatprep.subr.bf16.mxu0 0
        %4035 = vmatpush1.bf16.msra.mxu0 0
        %4036 = vmatprep.subr.bf16.mxu0 0
        %4037 = vmatpush1.bf16.msra.mxu0 0
        %4038 = vmatprep.subr.bf16.mxu0 0
        %4039 = vmatpush1.bf16.msra.mxu0 0
        %4040 = vmatprep.subr.bf16.mxu0 0
        %4041 = vmatpush1.bf16.msra.mxu0 %v4021
        %4042 = vmatprep.subr.bf16.mxu0 0
        %4043 = vmatpush1.bf16.msra.mxu0 %v4020
        %4044 = vmatprep.subr.bf16.mxu0 0
        %4045 = vmatpush1.bf16.msra.mxu0 %v4019
        %4046 = vmatprep.subr.bf16.mxu0 0
        %4047 = vmatpush1.bf16.msra.mxu0 %v4018
        %4048 = vmatprep.subr.bf16.mxu0 0
        %4049 = vmatpush2.bf16.msra.mxu0 0
        %4050 = vmatprep.subr.bf16.mxu0 0
        %4051 = vmatpush2.bf16.msra.mxu0 0
        %4052 = vmatprep.subr.bf16.mxu0 0
        %4053 = vmatpush2.bf16.msra.mxu0 0
        %4054 = vmatprep.subr.bf16.mxu0 0
        %4055 = vmatpush2.bf16.msra.mxu0 0
        %4056 = vmatprep.subr.bf16.mxu0 0
        %4057 = vmatpush2.bf16.msra.mxu0 0
        %4058 = vmatprep.subr.bf16.mxu0 0
        %4059 = vmatpush2.bf16.msra.mxu0 0
        %4060 = vmatprep.subr.bf16.mxu0 0
        %4061 = vmatpush2.bf16.msra.mxu0 0
        %4062 = vmatprep.subr.bf16.mxu0 0
        %4063 = vmatpush2.bf16.msra.mxu0 0
        %4064 = vmatprep.mubr.bf16.mxu0 0
        %4065 = vmatmul.mubr.bf16.gmra.mxu0 %v4027
        %v4066 = vpop.f32.mrf.mxu0
        %v4067 = vadd.f32 0.0, %v4066
        %v4068 = vpop.f32.mrf.mxu0
        %v4069 = vpop.f32.mrf.mxu0
        %v4070 = vadd.f32 0.0, %v4069
        %v4071 = vpop.f32.mrf.mxu0
        %4072 = vmatprep.mubr.bf16.mxu0 0
        %4073 = vmatmul.mubr.bf16.gmra.mxu0 %v4030
        %v4074 = vpop.f32.mrf.mxu0
        %v4075 = vadd.f32 0.0, %v4074
        %v4076 = vpop.f32.mrf.mxu0
        %v4077 = vpop.f32.mrf.mxu0
        %v4078 = vpop.f32.mrf.mxu0
        %4079 = vdwg.mxu0
        %v4080 = vadd.f32 %v3984, %v4067
        %v4081 = vadd.f32 %v3985, %v4070
        %v4082 = vadd.f32 %v3986, %v4075
        %4083 = vst.msk [vmem:[#allocation4] sm:$0xff] %vm568, %v4080
        %4084 = vst.msk [vmem:[#allocation4 + $0x8] sm:$0xff] %vm568, %v4081
        %4085 = vst.msk [vmem:[#allocation4 + $0x10] sm:$0x1] %vm3215, %v4082
        %v4086 = vld [vmem:[%s7] sm:$0x1]
        %v4087 = vld [vmem:[#allocation4] sm:$0x1]
        %v4088 = vpack.c.bf16 %v4087, %v4087
        %v4089 = vld [vmem:[%s6] sm:$0xf]
        %v4090 = vld [vmem:[%s6 + $0x4] sm:$0xf]
        %v4091 = vld [vmem:[%s6 + $0x8] sm:$0xf]
        %v4092 = vld [vmem:[%s6 + $0xc] sm:$0xf]
        %v4093 = vld [vmem:[%s6 + $0x10] sm:$0xf]
        %v4094 = vld [vmem:[%s6 + $0x14] sm:$0xf]
        %v4095 = vld [vmem:[%s6 + $0x18] sm:$0xf]
        %v4096 = vld [vmem:[%s6 + $0x1c] sm:$0xf]
        %v4105 = vunpack.c.l.b16 %v4089
        %v4106 = vunpack.c.l.b16 %v4090
        %v4107 = vunpack.c.l.b16 %v4091
        %v4108 = vunpack.c.l.b16 %v4092
        %v4109 = vunpack.c.l.b16 %v4093
        %v4110 = vunpack.c.l.b16 %v4094
        %v4111 = vunpack.c.l.b16 %v4095
        %v4112 = vunpack.c.l.b16 %v4096
        %v4113 = vpack.c.b16 %v4106, %v4105
        %v4114 = vpack.c.b16 %v4108, %v4107
        %v4115 = vpack.c.b16 %v4110, %v4109
        %v4116 = vpack.c.b16 %v4112, %v4111
        %v4122 = vsel %vm568, %v4088, 0
        %4124 = vmatprep.subr.bf16.mxu0 0
        %4125 = vmatpush1.bf16.msra.mxu0 0
        %4126 = vmatprep.subr.bf16.mxu0 0
        %4127 = vmatpush1.bf16.msra.mxu0 0
        %4128 = vmatprep.subr.bf16.mxu0 0
        %4129 = vmatpush1.bf16.msra.mxu0 0
        %4130 = vmatprep.subr.bf16.mxu0 0
        %4131 = vmatpush1.bf16.msra.mxu0 0
        %4132 = vmatprep.subr.bf16.mxu0 0
        %4133 = vmatpush1.bf16.msra.mxu0 %v4116
        %4134 = vmatprep.subr.bf16.mxu0 0
        %4135 = vmatpush1.bf16.msra.mxu0 %v4115
        %4136 = vmatprep.subr.bf16.mxu0 0
        %4137 = vmatpush1.bf16.msra.mxu0 %v4114
        %4138 = vmatprep.subr.bf16.mxu0 0
        %4139 = vmatpush1.bf16.msra.mxu0 %v4113
        %4140 = vmatprep.subr.bf16.mxu0 0
        %4141 = vmatpush2.bf16.msra.mxu0 0
        %4142 = vmatprep.subr.bf16.mxu0 0
        %4143 = vmatpush2.bf16.msra.mxu0 0
        %4144 = vmatprep.subr.bf16.mxu0 0
        %4145 = vmatpush2.bf16.msra.mxu0 0
        %4146 = vmatprep.subr.bf16.mxu0 0
        %4147 = vmatpush2.bf16.msra.mxu0 0
        %4148 = vmatprep.subr.bf16.mxu0 0
        %4149 = vmatpush2.bf16.msra.mxu0 0
        %4150 = vmatprep.subr.bf16.mxu0 0
        %4151 = vmatpush2.bf16.msra.mxu0 0
        %4152 = vmatprep.subr.bf16.mxu0 0
        %4153 = vmatpush2.bf16.msra.mxu0 0
        %4154 = vmatprep.subr.bf16.mxu0 0
        %4155 = vmatpush2.bf16.msra.mxu0 0
        %4156 = vmatprep.mubr.bf16.mxu0 0
        %4157 = vmatmul.mubr.bf16.gmra.mxu0 %v4122
        %v4158 = vpop.f32.mrf.mxu0
        %v4159 = vadd.f32 0.0, %v4158
        %v4160 = vpop.f32.mrf.mxu0
        %v4161 = vpop.f32.mrf.mxu0
        %v4162 = vpop.f32.mrf.mxu0
        %4163 = vdwg.mxu0
        %v4164 = vadd.f32 %v4086, %v4159
        %v4165 = vld [vmem:[#allocation4 + $0x1] sm:$0x1]
        %v4166 = vpack.c.bf16 %v4165, %v4165
        %s4167 = scalar_lea.vmem %s6, 32
        %v4168 = vld [vmem:[%s4167] sm:$0xf]
        %v4169 = vld [vmem:[%s4167 + $0x4] sm:$0xf]
        %v4170 = vld [vmem:[%s4167 + $0x8] sm:$0xf]
        %v4171 = vld [vmem:[%s4167 + $0xc] sm:$0xf]
        %v4172 = vld [vmem:[%s4167 + $0x10] sm:$0xf]
        %v4173 = vld [vmem:[%s4167 + $0x14] sm:$0xf]
        %v4174 = vld [vmem:[%s4167 + $0x18] sm:$0xf]
        %v4175 = vld [vmem:[%s4167 + $0x1c] sm:$0xf]
        %v4184 = vunpack.c.l.b16 %v4168
        %v4185 = vunpack.c.l.b16 %v4169
        %v4186 = vunpack.c.l.b16 %v4170
        %v4187 = vunpack.c.l.b16 %v4171
        %v4188 = vunpack.c.l.b16 %v4172
        %v4189 = vunpack.c.l.b16 %v4173
        %v4190 = vunpack.c.l.b16 %v4174
        %v4191 = vunpack.c.l.b16 %v4175
        %v4192 = vpack.c.b16 %v4185, %v4184
        %v4193 = vpack.c.b16 %v4187, %v4186
        %v4194 = vpack.c.b16 %v4189, %v4188
        %v4195 = vpack.c.b16 %v4191, %v4190
        %v4201 = vsel %vm568, %v4166, 0
        %4203 = vmatprep.subr.bf16.mxu0 0
        %4204 = vmatpush1.bf16.msra.mxu0 0
        %4205 = vmatprep.subr.bf16.mxu0 0
        %4206 = vmatpush1.bf16.msra.mxu0 0
        %4207 = vmatprep.subr.bf16.mxu0 0
        %4208 = vmatpush1.bf16.msra.mxu0 0
        %4209 = vmatprep.subr.bf16.mxu0 0
        %4210 = vmatpush1.bf16.msra.mxu0 0
        %4211 = vmatprep.subr.bf16.mxu0 0
        %4212 = vmatpush1.bf16.msra.mxu0 %v4195
        %4213 = vmatprep.subr.bf16.mxu0 0
        %4214 = vmatpush1.bf16.msra.mxu0 %v4194
        %4215 = vmatprep.subr.bf16.mxu0 0
        %4216 = vmatpush1.bf16.msra.mxu0 %v4193
        %4217 = vmatprep.subr.bf16.mxu0 0
        %4218 = vmatpush1.bf16.msra.mxu0 %v4192
        %4219 = vmatprep.subr.bf16.mxu0 0
        %4220 = vmatpush2.bf16.msra.mxu0 0
        %4221 = vmatprep.subr.bf16.mxu0 0
        %4222 = vmatpush2.bf16.msra.mxu0 0
        %4223 = vmatprep.subr.bf16.mxu0 0
        %4224 = vmatpush2.bf16.msra.mxu0 0
        %4225 = vmatprep.subr.bf16.mxu0 0
        %4226 = vmatpush2.bf16.msra.mxu0 0
        %4227 = vmatprep.subr.bf16.mxu0 0
        %4228 = vmatpush2.bf16.msra.mxu0 0
        %4229 = vmatprep.subr.bf16.mxu0 0
        %4230 = vmatpush2.bf16.msra.mxu0 0
        %4231 = vmatprep.subr.bf16.mxu0 0
        %4232 = vmatpush2.bf16.msra.mxu0 0
        %4233 = vmatprep.subr.bf16.mxu0 0
        %4234 = vmatpush2.bf16.msra.mxu0 0
        %4235 = vmatprep.mubr.bf16.mxu0 0
        %4236 = vmatmul.mubr.bf16.gmra.mxu0 %v4201
        %v4237 = vpop.f32.mrf.mxu0
        %v4238 = vadd.f32 0.0, %v4237
        %v4239 = vpop.f32.mrf.mxu0
        %v4240 = vpop.f32.mrf.mxu0
        %v4241 = vpop.f32.mrf.mxu0
        %4242 = vdwg.mxu0
        %v4243 = vadd.f32 %v4164, %v4238
        %v4244 = vld [vmem:[#allocation4 + $0xf] sm:$0x1]
        %v4245 = vpack.c.bf16 %v4244, %v4244
        %s4246 = scalar_lea.vmem %s6, 64
        %v4247 = vld [vmem:[%s4246] sm:$0xf]
        %v4248 = vld [vmem:[%s4246 + $0x4] sm:$0xf]
        %v4249 = vld [vmem:[%s4246 + $0x8] sm:$0xf]
        %v4250 = vld [vmem:[%s4246 + $0xc] sm:$0xf]
        %v4251 = vld [vmem:[%s4246 + $0x10] sm:$0xf]
        %v4252 = vld [vmem:[%s4246 + $0x14] sm:$0xf]
        %v4253 = vld [vmem:[%s4246 + $0x18] sm:$0xf]
        %v4254 = vld [vmem:[%s4246 + $0x1c] sm:$0xf]
        %v4263 = vunpack.c.l.b16 %v4247
        %v4264 = vunpack.c.l.b16 %v4248
        %v4265 = vunpack.c.l.b16 %v4249
        %v4266 = vunpack.c.l.b16 %v4250
        %v4267 = vunpack.c.l.b16 %v4251
        %v4268 = vunpack.c.l.b16 %v4252
        %v4269 = vunpack.c.l.b16 %v4253
        %v4270 = vunpack.c.l.b16 %v4254
        %v4271 = vpack.c.b16 %v4264, %v4263
        %v4272 = vpack.c.b16 %v4266, %v4265
        %v4273 = vpack.c.b16 %v4268, %v4267
        %v4274 = vpack.c.b16 %v4270, %v4269
        %v4280 = vsel %vm568, %v4245, 0
        %4282 = vmatprep.subr.bf16.mxu0 0
        %4283 = vmatpush1.bf16.msra.mxu0 0
        %4284 = vmatprep.subr.bf16.mxu0 0
        %4285 = vmatpush1.bf16.msra.mxu0 0
        %4286 = vmatprep.subr.bf16.mxu0 0
        %4287 = vmatpush1.bf16.msra.mxu0 0
        %4288 = vmatprep.subr.bf16.mxu0 0
        %4289 = vmatpush1.bf16.msra.mxu0 0
        %4290 = vmatprep.subr.bf16.mxu0 0
        %4291 = vmatpush1.bf16.msra.mxu0 %v4274
        %4292 = vmatprep.subr.bf16.mxu0 0
        %4293 = vmatpush1.bf16.msra.mxu0 %v4273
        %4294 = vmatprep.subr.bf16.mxu0 0
        %4295 = vmatpush1.bf16.msra.mxu0 %v4272
        %4296 = vmatprep.subr.bf16.mxu0 0
        %4297 = vmatpush1.bf16.msra.mxu0 %v4271
        %4298 = vmatprep.subr.bf16.mxu0 0
        %4299 = vmatpush2.bf16.msra.mxu0 0
        %4300 = vmatprep.subr.bf16.mxu0 0
        %4301 = vmatpush2.bf16.msra.mxu0 0
        %4302 = vmatprep.subr.bf16.mxu0 0
        %4303 = vmatpush2.bf16.msra.mxu0 0
        %4304 = vmatprep.subr.bf16.mxu0 0
        %4305 = vmatpush2.bf16.msra.mxu0 0
        %4306 = vmatprep.subr.bf16.mxu0 0
        %4307 = vmatpush2.bf16.msra.mxu0 0
        %4308 = vmatprep.subr.bf16.mxu0 0
        %4309 = vmatpush2.bf16.msra.mxu0 0
        %4310 = vmatprep.subr.bf16.mxu0 0
        %4311 = vmatpush2.bf16.msra.mxu0 0
        %4312 = vmatprep.subr.bf16.mxu0 0
        %4313 = vmatpush2.bf16.msra.mxu0 0
        %4314 = vmatprep.mubr.bf16.mxu0 0
        %4315 = vmatmul.mubr.bf16.gmra.mxu0 %v4280
        %v4316 = vpop.f32.mrf.mxu0
        %v4317 = vadd.f32 0.0, %v4316
        %v4318 = vpop.f32.mrf.mxu0
        %v4319 = vpop.f32.mrf.mxu0
        %v4320 = vpop.f32.mrf.mxu0
        %4321 = vdwg.mxu0
        %v4322 = vadd.f32 %v4243, %v4317
        %v4323 = vld [vmem:[#allocation4 + $0x10] sm:$0x1]
        %v4324 = vpack.c.bf16 %v4323, %v4323
        %s4325 = scalar_lea.vmem %s6, 96
        %v4326 = vld [vmem:[%s4325] sm:$0xf]
        %v4327 = vld [vmem:[%s4325 + $0x4] sm:$0xf]
        %v4328 = vld [vmem:[%s4325 + $0x8] sm:$0xf]
        %v4329 = vld [vmem:[%s4325 + $0xc] sm:$0xf]
        %v4330 = vld [vmem:[%s4325 + $0x10] sm:$0xf]
        %v4331 = vld [vmem:[%s4325 + $0x14] sm:$0xf]
        %v4332 = vld [vmem:[%s4325 + $0x18] sm:$0xf]
        %v4333 = vld [vmem:[%s4325 + $0x1c] sm:$0xf]
        %v4342 = vunpack.c.l.b16 %v4326
        %v4343 = vunpack.c.l.b16 %v4327
        %v4344 = vunpack.c.l.b16 %v4328
        %v4345 = vunpack.c.l.b16 %v4329
        %v4346 = vunpack.c.l.b16 %v4330
        %v4347 = vunpack.c.l.b16 %v4331
        %v4348 = vunpack.c.l.b16 %v4332
        %v4349 = vunpack.c.l.b16 %v4333
        %v4350 = vpack.c.b16 %v4343, %v4342
        %v4351 = vpack.c.b16 %v4345, %v4344
        %v4352 = vpack.c.b16 %v4347, %v4346
        %v4353 = vpack.c.b16 %v4349, %v4348
        %v4359 = vsel %vm568, %v4324, 0
        %4361 = vmatprep.subr.bf16.mxu0 0
        %4362 = vmatpush1.bf16.msra.mxu0 0
        %4363 = vmatprep.subr.bf16.mxu0 0
        %4364 = vmatpush1.bf16.msra.mxu0 0
        %4365 = vmatprep.subr.bf16.mxu0 0
        %4366 = vmatpush1.bf16.msra.mxu0 0
        %4367 = vmatprep.subr.bf16.mxu0 0
        %4368 = vmatpush1.bf16.msra.mxu0 0
        %4369 = vmatprep.subr.bf16.mxu0 0
        %4370 = vmatpush1.bf16.msra.mxu0 %v4353
        %4371 = vmatprep.subr.bf16.mxu0 0
        %4372 = vmatpush1.bf16.msra.mxu0 %v4352
        %4373 = vmatprep.subr.bf16.mxu0 0
        %4374 = vmatpush1.bf16.msra.mxu0 %v4351
        %4375 = vmatprep.subr.bf16.mxu0 0
        %4376 = vmatpush1.bf16.msra.mxu0 %v4350
        %4377 = vmatprep.subr.bf16.mxu0 0
        %4378 = vmatpush2.bf16.msra.mxu0 0
        %4379 = vmatprep.subr.bf16.mxu0 0
        %4380 = vmatpush2.bf16.msra.mxu0 0
        %4381 = vmatprep.subr.bf16.mxu0 0
        %4382 = vmatpush2.bf16.msra.mxu0 0
        %4383 = vmatprep.subr.bf16.mxu0 0
        %4384 = vmatpush2.bf16.msra.mxu0 0
        %4385 = vmatprep.subr.bf16.mxu0 0
        %4386 = vmatpush2.bf16.msra.mxu0 0
        %4387 = vmatprep.subr.bf16.mxu0 0
        %4388 = vmatpush2.bf16.msra.mxu0 0
        %4389 = vmatprep.subr.bf16.mxu0 0
        %4390 = vmatpush2.bf16.msra.mxu0 0
        %4391 = vmatprep.subr.bf16.mxu0 0
        %4392 = vmatpush2.bf16.msra.mxu0 0
        %4393 = vmatprep.mubr.bf16.mxu0 0
        %4394 = vmatmul.mubr.bf16.gmra.mxu0 %v4359
        %v4395 = vpop.f32.mrf.mxu0
        %v4396 = vadd.f32 0.0, %v4395
        %v4397 = vpop.f32.mrf.mxu0
        %v4398 = vpop.f32.mrf.mxu0
        %v4399 = vpop.f32.mrf.mxu0
        %4400 = vdwg.mxu0
        %v4401 = vadd.f32 %v4322, %v4396
        %v4402 = vmax.f32 %v4401, 0.0
        %4403 = vst.msk [vmem:[%s297] sm:$0x1] %vm824, %v4402
        %s4404 = sand.u32 %s203, 1
        %s4405 = scalar_lea.sflag [#allocation6], %s4404
        %s4406 = sand.u32 %s203, 1
        %s4407 = scalar_lea.vmem [#allocation5], %s4406
        // Predicated region
        $region53: #{forward.1} parent=51 // pred_check
          %p4408 = pneg %p213
        $region54: #{forward.1} parent=51 // pred_check_branch
          %4410 = sbr.rel (%p4408) target = $region56
        $region55: #{forward.1} parent=51 // pred_region
          %s4412 = ssub.s32 16, 16
          %4413 = vsyncadd %s4405, %s4412
          %s4414 = smul.addr %s22, 16
          %s4415 = scalar_lea.hbm %s8, %s4414
          %s4417 = sshll.u32 %s4407, 4
          %s4418 = int_to_ptr.vmem [resolvable:$true] %s4417
          %4420 = dma.vmem_to_hbm [thread:$0]  %s4418, 16, %s4415, %s4405
        $region56: #{forward.1} parent=51 // pred_fallthru
          _
      $region52: #{forward.1} parent=5 // pred_fallthru
        _
      %p4421 = scmp.le.s32.totalorder 2, %s17
      // Predicated region
      $region57: #{forward.1} parent=5 // pred_check
        %p4422 = pneg %p4421
      $region58: #{forward.1} parent=5 // pred_check_branch
        %4424 = sbr.rel (%p4422) target = $region60
      $region59: #{forward.1} parent=5 // pred_region
        %s4425 = ssub.s32 %s17, 2
        // Predicated region
        $region61: #{forward.1} parent=59 // pred_check
          %p4426 = pneg %p219
        $region62: #{forward.1} parent=59 // pred_check_branch
          %4428 = sbr.rel (%p4426) target = $region64
        $region63: #{forward.1} parent=59 // pred_region
          %s4429 = sand.u32 %s204, 1
          %s4430 = scalar_lea.sflag [#allocation6], %s4429
          %s4431 = sand.u32 %s204, 1
          %s4432 = scalar_lea.vmem [#allocation5], %s4431
          %4433 = dma.done %s4430, 16
        $region64: #{forward.1} parent=59 // pred_fallthru
          _
      $region60: #{forward.1} parent=5 // pred_fallthru
        _
    $region6: #{forward.1} parent=1 // loop_footer
      %s21 = sadd.s32 1, %s17
    $region7: #{forward.1} parent=1 // loop_footer_branch
      %16 = sbr.rel target = $region3
    $region8: #{forward.1} parent=1 // loop_exit
      _
    %4434 = vsyncpa [#allocation6], 1
    %s4435 = scalar_lea.sflag [#allocation6], 1
    %4436 = vsyncpa %s4435, 1

</llo_original>
